<compile_context>
chip_gen: v7x
topology: tpu7x:2x2x1
jax: 0.10.0
libtpu: 0.0.40
codegen_flags: <defaults>
</compile_context>

<pallas_src>
import jax
import jax.numpy as jnp
from jax.experimental import pallas as pl
from jax.experimental.pallas import tpu as pltpu

L_IN, L_HID, L_ATT = 1024, 512, 256   # size_dict['small']
N_CLASSES = 2
TOPK = 15                             # hard-coded k in CLAM_SB.forward
TILE_N = 128                          # patches per grid step


def _make_clam_kernel(n_patches: int, tile_n: int):
    """Kernel factory: n_patches is closed over for partial-tile masking."""

    def kernel(h_ref, w1_ref, b1_ref, wa_ref, ba_ref, wb_ref, bb_ref,
               wc_ref, bc_ref, wcls_ref, bcls_ref,
               a_raw_ref, m_ref, logits_ref,
               m_sc, l_sc, acc_sc):
        i = pl.program_id(0)

        @pl.when(i == 0)
        def _init():
            m_sc[...] = jnp.full_like(m_sc, -jnp.inf)
            l_sc[...] = jnp.zeros_like(l_sc)
            acc_sc[...] = jnp.zeros_like(acc_sc)

        # valid-row mask for the (possibly partial) last tile
        row = i * tile_n + jax.lax.broadcasted_iota(jnp.int32, (tile_n, 1), 0)
        valid = row < n_patches                                          # [tile, 1]

        # fc: Linear(1024, 512) + ReLU   (bf16 MXU, f32 accumulation)
        h1 = jnp.dot(h_ref[...], w1_ref[...],
                     preferred_element_type=jnp.float32) + b1_ref[...]
        h1 = jnp.maximum(h1, 0.0)
        h1 = jnp.where(valid, h1, 0.0)           # zero padded rows (kills NaNs)
        h1_bf = h1.astype(jnp.bfloat16)

        # Attn_Net_Gated
        a = jnp.tanh(jnp.dot(h1_bf, wa_ref[...],
                             preferred_element_type=jnp.float32) + ba_ref[...])
        b = jax.nn.sigmoid(jnp.dot(h1_bf, wb_ref[...],
                                   preferred_element_type=jnp.float32) + bb_ref[...])
        # width-1 attention head on the VPU/XLU (mul + lane reduce) instead of
        # a wasteful 1-column MXU matmul.
        s = jnp.sum((a * b) * wc_ref[...], axis=-1, keepdims=True) + bc_ref[...]
        s = jnp.where(valid, s, -jnp.inf)                                # [tile, 1]

        # raw attention scores for this tile (padded rows fall outside (N,1)
        # and are dropped by the partial-block writeback)
        a_raw_ref[...] = s

        # online softmax + attention-weighted sum over patches
        m_prev = m_sc[...]                                               # [1, 1]
        tile_max = jnp.max(s, axis=0, keepdims=True)                     # [1, 1]
        m_new = jnp.maximum(m_prev, tile_max)
        alpha = jnp.exp(m_prev - m_new)                                  # [1, 1]
        p = jnp.exp(s - m_new)                                           # [tile, 1]
        l_sc[...] = l_sc[...] * alpha + jnp.sum(p, axis=0, keepdims=True)
        acc_sc[...] = acc_sc[...] * alpha + jnp.sum(p * h1, axis=0, keepdims=True)
        m_sc[...] = m_new

        @pl.when(i == pl.num_programs(0) - 1)
        def _finalize():
            M = acc_sc[...] / l_sc[...]                                  # [1, 512]
            m_ref[...] = M
            logits_ref[...] = jnp.dot(M, wcls_ref[...],
                                      preferred_element_type=jnp.float32) + bcls_ref[...]

    return kernel


def clam_sb_forward(h, params, tile_n=TILE_N):
    """h: [N, 1024] float32.  Returns the same 7-tuple as CLAM_SB.forward
    (label=None, instance_eval=False, attention_only=False)."""
    N = h.shape[0]
    n_tiles = pl.cdiv(N, tile_n)

    # bf16 for everything feeding the big MXU matmuls; biases / small heads in f32.
    h_bf = h.astype(jnp.bfloat16)
    w1_bf = params["w1"].astype(jnp.bfloat16)
    wa_bf = params["wa"].astype(jnp.bfloat16)
    wb_bf = params["wb"].astype(jnp.bfloat16)
    wc_row = params["wc"].T                      # [1, 256] row form for the VPU head

    def _const(shape):
        nd = len(shape)
        return pl.BlockSpec(shape, lambda i, _nd=nd: (0,) * _nd)

    kernel = _make_clam_kernel(N, tile_n)

    flops = N * (2 * L_IN * L_HID + 4 * L_HID * L_ATT + 4 * L_ATT + 2 * L_HID) \
            + 2 * L_HID * N_CLASSES
    transcendentals = N * (2 * L_ATT + 1)
    bytes_accessed = (N * L_IN * 2 + N * 4                              # h stream + A_raw
                      + (L_IN * L_HID + 2 * L_HID * L_ATT) * 2         # bf16 weights
                      + (L_HID + 2 * L_ATT + L_ATT + 1 + N_CLASSES) * 4  # biases + wc
                      + L_HID * N_CLASSES * 4                          # wcls
                      + (L_HID + N_CLASSES) * 4)                       # M + logits

    a_raw_col, M, logits = pl.pallas_call(
        kernel,
        out_shape=(
            jax.ShapeDtypeStruct((N, 1), jnp.float32),          # A_raw (column form)
            jax.ShapeDtypeStruct((1, L_HID), jnp.float32),      # M
            jax.ShapeDtypeStruct((1, N_CLASSES), jnp.float32),  # logits
        ),
        grid=(n_tiles,),
        in_specs=[
            pl.BlockSpec((tile_n, L_IN), lambda i: (i, 0)),     # h: streamed per tile
            _const((L_IN, L_HID)),                              # w1 (VMEM-resident)
            _const((1, L_HID)),                                 # b1
            _const((L_HID, L_ATT)),                             # wa
            _const((1, L_ATT)),                                 # ba
            _const((L_HID, L_ATT)),                             # wb
            _const((1, L_ATT)),                                 # bb
            _const((1, L_ATT)),                                 # wc (row)
            _const((1, 1)),                                     # bc
            _const((L_HID, N_CLASSES)),                         # wcls
            _const((1, N_CLASSES)),                             # bcls
        ],
        out_specs=(
            pl.BlockSpec((tile_n, 1), lambda i: (i, 0)),        # A_raw per tile
            pl.BlockSpec((1, L_HID), lambda i: (0, 0)),         # M (resident, last write)
            pl.BlockSpec((1, N_CLASSES), lambda i: (0, 0)),     # logits
        ),
        scratch_shapes=[
            pltpu.VMEM((1, 1), jnp.float32),      # running max
            pltpu.VMEM((1, 1), jnp.float32),      # running sum-exp
            pltpu.VMEM((1, L_HID), jnp.float32),  # running weighted-h1 accumulator
        ],
        compiler_params=pltpu.CompilerParams(
            dimension_semantics=("arbitrary",),
            vmem_limit_bytes=64 * 1024 * 1024),
        cost_estimate=pl.CostEstimate(
            flops=flops, transcendentals=transcendentals,
            bytes_accessed=bytes_accessed),
    )(h_bf, w1_bf, params["b1"], wa_bf, params["ba"], wb_bf, params["bb"],
      wc_row, params["bc"], params["wcls"], params["bcls"])

    A_raw = a_raw_col.T                                   # [1, N]  (torch.transpose(A,1,0))

    Y_prob = jax.nn.softmax(logits, axis=1)               # [1, 2]
    Y_hat = jnp.argmax(logits, axis=1)[:, None]           # [1, 1]

    # top-15 patch indices: softmax is monotone -> top-k on raw scores is
    # identical to top-k on softmax(A).  Recompute h1 for only these 15 rows.
    _, topk_idx = jax.lax.top_k(a_raw_col[:, 0], TOPK)    # [15]
    h_top = h_bf[topk_idx]                                # [15, 1024] bf16
    h1_top = jnp.maximum(
        jnp.dot(h_top, w1_bf, preferred_element_type=jnp.float32) + params["b1"], 0.0)
    patch_feature_embeddings = h1_top[:, None, :]         # [15, 1, 512]
    slide_feature_embeddings = M                          # [1, 512]

    # TODO(synk): instance_eval / TripletCenterLoss branches only run when a
    # label is provided; the default forward (label=None) skips them.
    # TODO(synk): v7x dual-TensorCore split of the patch range (core_map) not
    # implemented; single sequential reduction grid is used on all generations.
    results_dict = {}

    return (logits, Y_prob, Y_hat, A_raw, results_dict,
            patch_feature_embeddings, slide_feature_embeddings)


def _reference_forward(h, p):
    """Pure-JAX reference with matching bf16 matmul inputs, for correctness."""
    bf, f32 = jnp.bfloat16, jnp.float32
    h1 = jnp.maximum(jnp.dot(h.astype(bf), p["w1"].astype(bf),
                             preferred_element_type=f32) + p["b1"], 0.0)
    a = jnp.tanh(jnp.dot(h1.astype(bf), p["wa"].astype(bf),
                         preferred_element_type=f32) + p["ba"])
    b = jax.nn.sigmoid(jnp.dot(h1.astype(bf), p["wb"].astype(bf),
                               preferred_element_type=f32) + p["bb"])
    A_raw = ((a * b) @ p["wc"] + p["bc"]).T               # [1, N]
    A = jax.nn.softmax(A_raw, axis=1)
    M = A @ h1
    logits = M @ p["wcls"] + p["bcls"]
    return logits, A_raw, M


if __name__ == "__main__":
    key = jax.random.PRNGKey(0)
    ks = jax.random.split(key, 12)
    N = 300  # small bag; exercises a partial last tile (300 = 2*128 + 44)

    h = jax.random.normal(ks[0], (N, L_IN), dtype=jnp.float32)

    def lin_w(k, fan_in, fan_out):
        return jax.random.normal(k, (fan_in, fan_out), dtype=jnp.float32) / jnp.sqrt(float(fan_in))

    def lin_b(k, fan_out):
        return 0.01 * jax.random.normal(k, (1, fan_out), dtype=jnp.float32)

    params = {
        "w1":   lin_w(ks[1], L_IN, L_HID),      "b1":   lin_b(ks[2], L_HID),
        "wa":   lin_w(ks[3], L_HID, L_ATT),     "ba":   lin_b(ks[4], L_ATT),
        "wb":   lin_w(ks[5], L_HID, L_ATT),     "bb":   lin_b(ks[6], L_ATT),
        "wc":   lin_w(ks[7], L_ATT, 1),         "bc":   lin_b(ks[8], 1),
        "wcls": lin_w(ks[9], L_HID, N_CLASSES), "bcls": lin_b(ks[10], N_CLASSES),
    }

    out = clam_sb_forward(h, params)
    out = jax.block_until_ready(out)
    logits, Y_prob, Y_hat, A_raw, results_dict, patch_emb, slide_emb = out

    # shape checks (match PyTorch semantics)
    assert logits.shape == (1, N_CLASSES)
    assert Y_prob.shape == (1, N_CLASSES)
    assert Y_hat.shape == (1, 1)
    assert A_raw.shape == (1, N)
    assert patch_emb.shape == (TOPK, 1, L_HID)
    assert slide_emb.shape == (1, L_HID)

    # numeric check against a pure-JAX reference (same bf16 matmul inputs)
    ref_logits, ref_A_raw, ref_M = _reference_forward(h, params)
    assert jnp.allclose(logits, ref_logits, atol=2e-3, rtol=2e-3)
    assert jnp.allclose(A_raw, ref_A_raw, atol=2e-3, rtol=2e-3)
    assert jnp.allclose(slide_emb, ref_M, atol=2e-3, rtol=2e-3)

    print("KERNEL_OK")
</pallas_src>

<mosaic_0001>
module attributes {stable_mosaic.version = 11 : i64} {
  func.func @kernel(%arg0: i32, %arg1: memref<128x1024xbf16, #tpu.memory_space<vmem>>, %arg2: memref<1024x512xbf16, #tpu.memory_space<vmem>>, %arg3: memref<1x512xf32, #tpu.memory_space<vmem>>, %arg4: memref<512x256xbf16, #tpu.memory_space<vmem>>, %arg5: memref<1x256xf32, #tpu.memory_space<vmem>>, %arg6: memref<512x256xbf16, #tpu.memory_space<vmem>>, %arg7: memref<1x256xf32, #tpu.memory_space<vmem>>, %arg8: memref<1x256xf32, #tpu.memory_space<vmem>>, %arg9: memref<1x1xf32, #tpu.memory_space<vmem>>, %arg10: memref<512x2xf32, #tpu.memory_space<vmem>>, %arg11: memref<1x2xf32, #tpu.memory_space<vmem>>, %arg12: memref<128x1xf32, #tpu.memory_space<vmem>>, %arg13: memref<1x512xf32, #tpu.memory_space<vmem>>, %arg14: memref<1x2xf32, #tpu.memory_space<vmem>>, %arg15: memref<1x1xf32, #tpu.memory_space<vmem>>, %arg16: memref<1x1xf32, #tpu.memory_space<vmem>>, %arg17: memref<1x512xf32, #tpu.memory_space<vmem>>) attributes {dimension_semantics = [#tpu.dimension_semantics<arbitrary>], iteration_bounds = array<i64: 3>, scalar_prefetch = 0 : i64, scratch_operands = 3 : i64, tpu.core_type = #tpu.core_type<tc>, window_params = [{transform_indices = @transform_0, window_bounds = array<i64: 128, 1024>}, {pipeline_mode = #tpu.pipeline_mode<synchronous>, transform_indices = @transform_1, window_bounds = array<i64: 1024, 512>}, {pipeline_mode = #tpu.pipeline_mode<synchronous>, transform_indices = @transform_2, window_bounds = array<i64: 1, 512>}, {pipeline_mode = #tpu.pipeline_mode<synchronous>, transform_indices = @transform_3, window_bounds = array<i64: 512, 256>}, {pipeline_mode = #tpu.pipeline_mode<synchronous>, transform_indices = @transform_4, window_bounds = array<i64: 1, 256>}, {pipeline_mode = #tpu.pipeline_mode<synchronous>, transform_indices = @transform_5, window_bounds = array<i64: 512, 256>}, {pipeline_mode = #tpu.pipeline_mode<synchronous>, transform_indices = @transform_6, window_bounds = array<i64: 1, 256>}, {pipeline_mode = #tpu.pipeline_mode<synchronous>, transform_indices = @transform_7, window_bounds = array<i64: 1, 256>}, {pipeline_mode = #tpu.pipeline_mode<synchronous>, transform_indices = @transform_8, window_bounds = array<i64: 1, 1>}, {pipeline_mode = #tpu.pipeline_mode<synchronous>, transform_indices = @transform_9, window_bounds = array<i64: 512, 2>}, {pipeline_mode = #tpu.pipeline_mode<synchronous>, transform_indices = @transform_10, window_bounds = array<i64: 1, 2>}, {transform_indices = @transform_11, window_bounds = array<i64: 128, 1>}, {pipeline_mode = #tpu.pipeline_mode<synchronous>, transform_indices = @transform_12, window_bounds = array<i64: 1, 512>}, {pipeline_mode = #tpu.pipeline_mode<synchronous>, transform_indices = @transform_13, window_bounds = array<i64: 1, 2>}]} {
    %c0_i32 = arith.constant 0 : i32
    %0 = arith.cmpi eq, %arg0, %c0_i32 : i32
    %1 = arith.extui %0 : i1 to i32
    %c0_i32_0 = arith.constant 0 : i32
    %2 = arith.cmpi ne, %1, %c0_i32_0 : i32
    scf.if %2 {
      %cst_43 = arith.constant 0xFF800000 : f32
      %78 = vector.broadcast %cst_43 : f32 to vector<1x1xf32>
      %c0_44 = arith.constant 0 : index
      %c0_45 = arith.constant 0 : index
      %79 = vector.load %arg15[%c0_44, %c0_45] : memref<1x1xf32, #tpu.memory_space<vmem>>, vector<1x1xf32>
      tpu.vector_store %arg15[%c0_44, %c0_45], %78 {strides = array<i32>} : memref<1x1xf32, #tpu.memory_space<vmem>>, vector<1x1xf32>,
      %cst_46 = arith.constant 0.000000e+00 : f32
      %80 = vector.broadcast %cst_46 : f32 to vector<1x1xf32>
      %c0_47 = arith.constant 0 : index
      %c0_48 = arith.constant 0 : index
      %81 = vector.load %arg16[%c0_47, %c0_48] : memref<1x1xf32, #tpu.memory_space<vmem>>, vector<1x1xf32>
      tpu.vector_store %arg16[%c0_47, %c0_48], %80 {strides = array<i32>} : memref<1x1xf32, #tpu.memory_space<vmem>>, vector<1x1xf32>,
      %cst_49 = arith.constant 0.000000e+00 : f32
      %82 = vector.broadcast %cst_49 : f32 to vector<1x512xf32>
      %c0_50 = arith.constant 0 : index
      %c0_51 = arith.constant 0 : index
      %83 = vector.load %arg17[%c0_50, %c0_51] : memref<1x512xf32, #tpu.memory_space<vmem>>, vector<1x512xf32>
      tpu.vector_store %arg17[%c0_50, %c0_51], %82 {strides = array<i32>} : memref<1x512xf32, #tpu.memory_space<vmem>>, vector<1x512xf32>,
    } else {
    }
    %c128_i32 = arith.constant 128 : i32
    %3 = arith.muli %arg0, %c128_i32 : i32
    %4 = tpu.iota {dimensions = array<i32: 0>} : vector<128x1xi32>
    %5 = vector.broadcast %3 : i32 to vector<128x1xi32>
    %6 = arith.addi %5, %4 : vector<128x1xi32>
    %c300_i32 = arith.constant 300 : i32
    %7 = vector.broadcast %c300_i32 : i32 to vector<128x1xi32>
    %8 = arith.cmpi slt, %6, %7 : vector<128x1xi32>
    %c0 = arith.constant 0 : index
    %c0_1 = arith.constant 0 : index
    %9 = vector.load %arg1[%c0, %c0_1] : memref<128x1024xbf16, #tpu.memory_space<vmem>>, vector<128x1024xbf16>
    %c0_2 = arith.constant 0 : index
    %c0_3 = arith.constant 0 : index
    %10 = vector.load %arg2[%c0_2, %c0_3] : memref<1024x512xbf16, #tpu.memory_space<vmem>>, vector<1024x512xbf16>
    %cst = arith.constant dense<0.000000e+00> : vector<128x512xf32>
    %11 = tpu.matmul %9, %10, %cst {dimension_numbers = #tpu.dot_dimension_numbers<[1], [0], [0], [1], [0, 0, 1, 1], [], []>} : vector<128x1024xbf16>, vector<1024x512xbf16>, vector<128x512xf32> -> vector<128x512xf32>
    %c0_4 = arith.constant 0 : index
    %c0_5 = arith.constant 0 : index
    %12 = vector.load %arg3[%c0_4, %c0_5] : memref<1x512xf32, #tpu.memory_space<vmem>>, vector<1x512xf32>
    %13 = vector.broadcast %12 : vector<1x512xf32> to vector<128x512xf32>
    %14 = arith.addf %11, %13 : vector<128x512xf32>
    %cst_6 = arith.constant 0.000000e+00 : f32
    %15 = vector.broadcast %cst_6 : f32 to vector<128x512xf32>
    %16 = arith.maximumf %14, %15 : vector<128x512xf32>
    %cst_7 = arith.constant 0.000000e+00 : f32
    %17 = vector.shape_cast %8 : vector<128x1xi1> to vector<128x1xi1>
    %18 = vector.broadcast %17 : vector<128x1xi1> to vector<128x512xi1>
    %19 = vector.broadcast %cst_7 : f32 to vector<128x512xf32>
    %20 = arith.select %18, %16, %19 : vector<128x512xi1>, vector<128x512xf32>
    %21 = arith.truncf %20 : vector<128x512xf32> to vector<128x512xbf16>
    %c0_8 = arith.constant 0 : index
    %c0_9 = arith.constant 0 : index
    %22 = vector.load %arg4[%c0_8, %c0_9] : memref<512x256xbf16, #tpu.memory_space<vmem>>, vector<512x256xbf16>
    %cst_10 = arith.constant dense<0.000000e+00> : vector<128x256xf32>
    %23 = tpu.matmul %21, %22, %cst_10 {dimension_numbers = #tpu.dot_dimension_numbers<[1], [0], [0], [1], [0, 0, 1, 1], [], []>} : vector<128x512xbf16>, vector<512x256xbf16>, vector<128x256xf32> -> vector<128x256xf32>
    %c0_11 = arith.constant 0 : index
    %c0_12 = arith.constant 0 : index
    %24 = vector.load %arg5[%c0_11, %c0_12] : memref<1x256xf32, #tpu.memory_space<vmem>>, vector<1x256xf32>
    %25 = vector.broadcast %24 : vector<1x256xf32> to vector<128x256xf32>
    %26 = arith.addf %23, %25 : vector<128x256xf32>
    %27 = math.tanh %26 : vector<128x256xf32>
    %c0_13 = arith.constant 0 : index
    %c0_14 = arith.constant 0 : index
    %28 = vector.load %arg6[%c0_13, %c0_14] : memref<512x256xbf16, #tpu.memory_space<vmem>>, vector<512x256xbf16>
    %cst_15 = arith.constant dense<0.000000e+00> : vector<128x256xf32>
    %29 = tpu.matmul %21, %28, %cst_15 {dimension_numbers = #tpu.dot_dimension_numbers<[1], [0], [0], [1], [0, 0, 1, 1], [], []>} : vector<128x512xbf16>, vector<512x256xbf16>, vector<128x256xf32> -> vector<128x256xf32>
    %c0_16 = arith.constant 0 : index
    %c0_17 = arith.constant 0 : index
    %30 = vector.load %arg7[%c0_16, %c0_17] : memref<1x256xf32, #tpu.memory_space<vmem>>, vector<1x256xf32>
    %31 = vector.broadcast %30 : vector<1x256xf32> to vector<128x256xf32>
    %32 = arith.addf %29, %31 : vector<128x256xf32>
    %33 = arith.negf %32 : vector<128x256xf32>
    %34 = math.exp %33 : vector<128x256xf32>
    %cst_18 = arith.constant 1.000000e+00 : f32
    %35 = vector.broadcast %cst_18 : f32 to vector<128x256xf32>
    %36 = arith.addf %35, %34 : vector<128x256xf32>
    %37 = arith.divf %35, %36 : vector<128x256xf32>
    %38 = arith.mulf %27, %37 : vector<128x256xf32>
    %c0_19 = arith.constant 0 : index
    %c0_20 = arith.constant 0 : index
    %39 = vector.load %arg8[%c0_19, %c0_20] : memref<1x256xf32, #tpu.memory_space<vmem>>, vector<1x256xf32>
    %40 = vector.broadcast %39 : vector<1x256xf32> to vector<128x256xf32>
    %41 = arith.mulf %38, %40 : vector<128x256xf32>
    %cst_21 = arith.constant dense<0.000000e+00> : vector<128xf32>
    %42 = vector.multi_reduction <add>, %41, %cst_21 [1] : vector<128x256xf32> to vector<128xf32>
    %43 = vector.shape_cast %42 : vector<128xf32> to vector<128x1xf32>
    %c0_22 = arith.constant 0 : index
    %c0_23 = arith.constant 0 : index
    %44 = vector.load %arg9[%c0_22, %c0_23] : memref<1x1xf32, #tpu.memory_space<vmem>>, vector<1x1xf32>
    %45 = vector.broadcast %44 : vector<1x1xf32> to vector<128x1xf32>
    %46 = arith.addf %43, %45 : vector<128x1xf32>
    %cst_24 = arith.constant 0xFF800000 : f32
    %47 = vector.broadcast %cst_24 : f32 to vector<128x1xf32>
    %48 = arith.select %8, %46, %47 : vector<128x1xi1>, vector<128x1xf32>
    %c0_25 = arith.constant 0 : index
    %c0_26 = arith.constant 0 : index
    %49 = vector.load %arg12[%c0_25, %c0_26] : memref<128x1xf32, #tpu.memory_space<vmem>>, vector<128x1xf32>
    tpu.vector_store %arg12[%c0_25, %c0_26], %48 {strides = array<i32>} : memref<128x1xf32, #tpu.memory_space<vmem>>, vector<128x1xf32>,
    %c0_27 = arith.constant 0 : index
    %c0_28 = arith.constant 0 : index
    %50 = vector.load %arg15[%c0_27, %c0_28] : memref<1x1xf32, #tpu.memory_space<vmem>>, vector<1x1xf32>
    %cst_29 = arith.constant dense<0xFF800000> : vector<1xf32>
    %51 = vector.multi_reduction <maximumf>, %48, %cst_29 [0] : vector<128x1xf32> to vector<1xf32>
    %52 = vector.shape_cast %51 : vector<1xf32> to vector<1x1xf32>
    %53 = arith.maximumf %50, %52 : vector<1x1xf32>
    %54 = arith.subf %50, %53 : vector<1x1xf32>
    %55 = math.exp %54 : vector<1x1xf32>
    %56 = vector.broadcast %53 : vector<1x1xf32> to vector<128x1xf32>
    %57 = arith.subf %48, %56 : vector<128x1xf32>
    %58 = math.exp %57 : vector<128x1xf32>
    %c0_30 = arith.constant 0 : index
    %c0_31 = arith.constant 0 : index
    %59 = vector.load %arg16[%c0_30, %c0_31] : memref<1x1xf32, #tpu.memory_space<vmem>>, vector<1x1xf32>
    %60 = arith.mulf %59, %55 : vector<1x1xf32>
    %cst_32 = arith.constant dense<0.000000e+00> : vector<1xf32>
    %61 = vector.multi_reduction <add>, %58, %cst_32 [0] : vector<128x1xf32> to vector<1xf32>
    %62 = vector.shape_cast %61 : vector<1xf32> to vector<1x1xf32>
    %63 = arith.addf %60, %62 : vector<1x1xf32>
    %c0_33 = arith.constant 0 : index
    %c0_34 = arith.constant 0 : index
    %64 = vector.load %arg16[%c0_33, %c0_34] : memref<1x1xf32, #tpu.memory_space<vmem>>, vector<1x1xf32>
    tpu.vector_store %arg16[%c0_33, %c0_34], %63 {strides = array<i32>} : memref<1x1xf32, #tpu.memory_space<vmem>>, vector<1x1xf32>,
    %c0_35 = arith.constant 0 : index
    %c0_36 = arith.constant 0 : index
    %65 = vector.load %arg17[%c0_35, %c0_36] : memref<1x512xf32, #tpu.memory_space<vmem>>, vector<1x512xf32>
    %66 = vector.broadcast %55 : vector<1x1xf32> to vector<1x512xf32>
    %67 = arith.mulf %65, %66 : vector<1x512xf32>
    %68 = vector.broadcast %58 : vector<128x1xf32> to vector<128x512xf32>
    %69 = arith.mulf %68, %20 : vector<128x512xf32>
    %cst_37 = arith.constant dense<0.000000e+00> : vector<512xf32>
    %70 = vector.multi_reduction <add>, %69, %cst_37 [0] : vector<128x512xf32> to vector<512xf32>
    %71 = vector.shape_cast %70 : vector<512xf32> to vector<1x512xf32>
    %72 = arith.addf %67, %71 : vector<1x512xf32>
    %c0_38 = arith.constant 0 : index
    %c0_39 = arith.constant 0 : index
    %73 = vector.load %arg17[%c0_38, %c0_39] : memref<1x512xf32, #tpu.memory_space<vmem>>, vector<1x512xf32>
    tpu.vector_store %arg17[%c0_38, %c0_39], %72 {strides = array<i32>} : memref<1x512xf32, #tpu.memory_space<vmem>>, vector<1x512xf32>,
    %c0_40 = arith.constant 0 : index
    %c0_41 = arith.constant 0 : index
    %74 = vector.load %arg15[%c0_40, %c0_41] : memref<1x1xf32, #tpu.memory_space<vmem>>, vector<1x1xf32>
    tpu.vector_store %arg15[%c0_40, %c0_41], %53 {strides = array<i32>} : memref<1x1xf32, #tpu.memory_space<vmem>>, vector<1x1xf32>,
    %c2_i32 = arith.constant 2 : i32
    %75 = arith.cmpi eq, %arg0, %c2_i32 : i32
    %76 = arith.extui %75 : i1 to i32
    %c0_i32_42 = arith.constant 0 : i32
    %77 = arith.cmpi ne, %76, %c0_i32_42 : i32
    scf.if %77 {
      %c0_43 = arith.constant 0 : index
      %c0_44 = arith.constant 0 : index
      %78 = vector.load %arg17[%c0_43, %c0_44] : memref<1x512xf32, #tpu.memory_space<vmem>>, vector<1x512xf32>
      %c0_45 = arith.constant 0 : index
      %c0_46 = arith.constant 0 : index
      %79 = vector.load %arg16[%c0_45, %c0_46] : memref<1x1xf32, #tpu.memory_space<vmem>>, vector<1x1xf32>
      %80 = vector.broadcast %79 : vector<1x1xf32> to vector<1x512xf32>
      %81 = arith.divf %78, %80 : vector<1x512xf32>
      %c0_47 = arith.constant 0 : index
      %c0_48 = arith.constant 0 : index
      %82 = vector.load %arg13[%c0_47, %c0_48] : memref<1x512xf32, #tpu.memory_space<vmem>>, vector<1x512xf32>
      tpu.vector_store %arg13[%c0_47, %c0_48], %81 {strides = array<i32>} : memref<1x512xf32, #tpu.memory_space<vmem>>, vector<1x512xf32>,
      %c0_49 = arith.constant 0 : index
      %c0_50 = arith.constant 0 : index
      %83 = vector.load %arg10[%c0_49, %c0_50] : memref<512x2xf32, #tpu.memory_space<vmem>>, vector<512x2xf32>
      %cst_51 = arith.constant dense<0.000000e+00> : vector<1x2xf32>
      %84 = tpu.matmul %81, %83, %cst_51 {dimension_numbers = #tpu.dot_dimension_numbers<[1], [0], [0], [1], [0, 0, 1, 1], [], []>} : vector<1x512xf32>, vector<512x2xf32>, vector<1x2xf32> -> vector<1x2xf32>
      %c0_52 = arith.constant 0 : index
      %c0_53 = arith.constant 0 : index
      %85 = vector.load %arg11[%c0_52, %c0_53] : memref<1x2xf32, #tpu.memory_space<vmem>>, vector<1x2xf32>
      %86 = arith.addf %84, %85 : vector<1x2xf32>
      %c0_54 = arith.constant 0 : index
      %c0_55 = arith.constant 0 : index
      %87 = vector.load %arg14[%c0_54, %c0_55] : memref<1x2xf32, #tpu.memory_space<vmem>>, vector<1x2xf32>
      tpu.vector_store %arg14[%c0_54, %c0_55], %86 {strides = array<i32>} : memref<1x2xf32, #tpu.memory_space<vmem>>, vector<1x2xf32>,
    } else {
    }
    return
  }
  func.func @transform_0(%arg0: i32) -> (i32, i32) {
    %c0_i32 = arith.constant 0 : i32
    %c0_i32_0 = arith.constant 0 : i32
    return %arg0, %c0_i32 : i32, i32
  }
  func.func @transform_1(%arg0: i32) -> (i32, i32) {
    %c0_i32 = arith.constant 0 : i32
    %c0_i32_0 = arith.constant 0 : i32
    %c0_i32_1 = arith.constant 0 : i32
    return %c0_i32, %c0_i32_0 : i32, i32
  }
  func.func @transform_2(%arg0: i32) -> (i32, i32) {
    %c0_i32 = arith.constant 0 : i32
    %c0_i32_0 = arith.constant 0 : i32
    %c0_i32_1 = arith.constant 0 : i32
    return %c0_i32, %c0_i32_0 : i32, i32
  }
  func.func @transform_3(%arg0: i32) -> (i32, i32) {
    %c0_i32 = arith.constant 0 : i32
    %c0_i32_0 = arith.constant 0 : i32
    %c0_i32_1 = arith.constant 0 : i32
    return %c0_i32, %c0_i32_0 : i32, i32
  }
  func.func @transform_4(%arg0: i32) -> (i32, i32) {
    %c0_i32 = arith.constant 0 : i32
    %c0_i32_0 = arith.constant 0 : i32
    %c0_i32_1 = arith.constant 0 : i32
    return %c0_i32, %c0_i32_0 : i32, i32
  }
  func.func @transform_5(%arg0: i32) -> (i32, i32) {
    %c0_i32 = arith.constant 0 : i32
    %c0_i32_0 = arith.constant 0 : i32
    %c0_i32_1 = arith.constant 0 : i32
    return %c0_i32, %c0_i32_0 : i32, i32
  }
  func.func @transform_6(%arg0: i32) -> (i32, i32) {
    %c0_i32 = arith.constant 0 : i32
    %c0_i32_0 = arith.constant 0 : i32
    %c0_i32_1 = arith.constant 0 : i32
    return %c0_i32, %c0_i32_0 : i32, i32
  }
  func.func @transform_7(%arg0: i32) -> (i32, i32) {
    %c0_i32 = arith.constant 0 : i32
    %c0_i32_0 = arith.constant 0 : i32
    %c0_i32_1 = arith.constant 0 : i32
    return %c0_i32, %c0_i32_0 : i32, i32
  }
  func.func @transform_8(%arg0: i32) -> (i32, i32) {
    %c0_i32 = arith.constant 0 : i32
    %c0_i32_0 = arith.constant 0 : i32
    %c0_i32_1 = arith.constant 0 : i32
    return %c0_i32, %c0_i32_0 : i32, i32
  }
  func.func @transform_9(%arg0: i32) -> (i32, i32) {
    %c0_i32 = arith.constant 0 : i32
    %c0_i32_0 = arith.constant 0 : i32
    %c0_i32_1 = arith.constant 0 : i32
    return %c0_i32, %c0_i32_0 : i32, i32
  }
  func.func @transform_10(%arg0: i32) -> (i32, i32) {
    %c0_i32 = arith.constant 0 : i32
    %c0_i32_0 = arith.constant 0 : i32
    %c0_i32_1 = arith.constant 0 : i32
    return %c0_i32, %c0_i32_0 : i32, i32
  }
  func.func @transform_11(%arg0: i32) -> (i32, i32) {
    %c0_i32 = arith.constant 0 : i32
    %c0_i32_0 = arith.constant 0 : i32
    return %arg0, %c0_i32 : i32, i32
  }
  func.func @transform_12(%arg0: i32) -> (i32, i32) {
    %c0_i32 = arith.constant 0 : i32
    %c0_i32_0 = arith.constant 0 : i32
    %c0_i32_1 = arith.constant 0 : i32
    return %c0_i32, %c0_i32_0 : i32, i32
  }
  func.func @transform_13(%arg0: i32) -> (i32, i32) {
    %c0_i32 = arith.constant 0 : i32
    %c0_i32_0 = arith.constant 0 : i32
    %c0_i32_1 = arith.constant 0 : i32
    return %c0_i32, %c0_i32_0 : i32, i32
  }
}

</mosaic_0001>

<llo_original>
// kernel: tpu_custom_call.1
$region0: #{tpu_custom_call.1}
  #allocation0 [shape = 'u32[]', space=smem, size = 0x4, offset = 0x4, fixed_abs, tag = 'smem constant byte address 0x4 - core index']
  #allocation1 [shape = 'u32[144,128]{1,0:T(1,128)}', space=vmem, size = 0x12000, scoped, tag = 'internal scratch']
  #allocation2 [shape = 'f32[1,1]{1,0:T(1,128)}', space=vmem, size = 0x200, scoped, tag = 'scratch operand']
  #allocation3 [shape = 'f32[1,1]{1,0:T(1,128)}', space=vmem, size = 0x200, scoped, tag = 'scratch operand']
  #allocation4 [shape = 'f32[1,512]{1,0:T(1,128)}', space=vmem, size = 0x800, scoped, tag = 'scratch operand']
  #allocation5 [shape = 'f32[1,1]{1,0:T(1,128)S(1)}', space=vmem, size = 0x200, scoped, tag = 'scoped memory for tpu_custom_call.1']
  %s0 = inlined_call_operand.hbm [shape: bf16[300,1024], index: 0, kind: input, shape index: {}]
  %s1 = inlined_call_operand.hbm [shape: bf16[1024,512], index: 1, kind: input, shape index: {}]
  %s2 = inlined_call_operand.hbm [shape: f32[1,512], index: 2, kind: input, shape index: {}]
  %s3 = inlined_call_operand.hbm [shape: bf16[512,256], index: 3, kind: input, shape index: {}]
  %s4 = inlined_call_operand.hbm [shape: f32[1,256], index: 4, kind: input, shape index: {}]
  %s5 = inlined_call_operand.hbm [shape: bf16[512,256], index: 5, kind: input, shape index: {}]
  %s6 = inlined_call_operand.hbm [shape: f32[1,256], index: 6, kind: input, shape index: {}]
  %s7 = inlined_call_operand.hbm [shape: f32[1,256], index: 7, kind: input, shape index: {}]
  %s8 = inlined_call_operand.<no memory space> [shape: f32[1,1], index: 8, kind: input, shape index: {}]
  %s9 = inlined_call_operand.hbm [shape: f32[512,2], index: 9, kind: input, shape index: {}]
  %s10 = inlined_call_operand.hbm [shape: f32[1,2], index: 10, kind: input, shape index: {}]
  %s11 = inlined_call_operand.hbm [shape: f32[300,1], index: 11, kind: output, shape index: {0}]
  %s12 = inlined_call_operand.hbm [shape: f32[1,512], index: 12, kind: output, shape index: {1}]
  %s13 = inlined_call_operand.hbm [shape: f32[1,2], index: 13, kind: output, shape index: {2}]
  %14 = xla_tuple %s11, %s12, %s13
  %s15 = sld [smem:[#allocation0]]
  $region141: #{tpu_custom_call.1} parent=0
    _
  %s17 = ssub.s32 1, %s15
  %s18 = scalar_select 0, %s17, %s15
  %v19 = vstv %s8
  %20 = vst [vmem:[#allocation5] sm:$0x1] %v19
  $region1: #{tpu_custom_call.1} parent=0
    #allocation6 [shape = 'u8[524288]{0}', space=vmem, size = 0x80000, scoped, tag = 'input window, operand 0']
    #allocation7 [shape = 's32[2]{0}', space=sflag, size = 0x8, scoped, tag = 'scoped memory for tpu_custom_call.1']
    #allocation8 [shape = 's32[2]{0}', space=sflag, size = 0x8, scoped, tag = 'scoped memory for tpu_custom_call.1']
    #allocation9 [shape = 'u8[1048576]{0}', space=vmem, size = 0x100000, scoped, tag = 'input window, operand 1, single buffered']
    #allocation10 [shape = 's32[1]{0}', space=sflag, size = 0x4, scoped, tag = 'scoped memory for tpu_custom_call.1']
    #allocation11 [shape = 'u8[2048]{0}', space=vmem, size = 0x800, scoped, tag = 'input window, operand 2, single buffered']
    #allocation12 [shape = 'u8[262144]{0}', space=vmem, size = 0x40000, scoped, tag = 'input window, operand 3, single buffered']
    #allocation13 [shape = 's32[1]{0}', space=sflag, size = 0x4, scoped, tag = 'scoped memory for tpu_custom_call.1']
    #allocation14 [shape = 'u8[1024]{0}', space=vmem, size = 0x400, scoped, tag = 'input window, operand 4, single buffered']
    #allocation15 [shape = 'u8[262144]{0}', space=vmem, size = 0x40000, scoped, tag = 'input window, operand 5, single buffered']
    #allocation16 [shape = 's32[1]{0}', space=sflag, size = 0x4, scoped, tag = 'scoped memory for tpu_custom_call.1']
    #allocation17 [shape = 'u8[1024]{0}', space=vmem, size = 0x400, scoped, tag = 'input window, operand 6, single buffered']
    #allocation18 [shape = 'u8[1024]{0}', space=vmem, size = 0x400, scoped, tag = 'input window, operand 7, single buffered']
    #allocation19 [shape = 's32[1]{0}', space=sflag, size = 0x4, scoped, tag = 'scoped memory for tpu_custom_call.1']
    #allocation20 [shape = 'u8[262144]{0}', space=vmem, size = 0x40000, scoped, tag = 'input window, operand 9, single buffered']
    #allocation21 [shape = 'u8[512]{0}', space=vmem, size = 0x400, scoped, tag = 'input window, operand 10, single buffered']
    #allocation22 [shape = 's32[1]{0}', space=sflag, size = 0x4, scoped, tag = 'scoped memory for tpu_custom_call.1']
    #allocation23 [shape = 'u8[131072]{0}', space=vmem, size = 0x20000, scoped, tag = 'output window, operand 0']
    #allocation24 [shape = 'u8[2048]{0}', space=vmem, size = 0x800, scoped, tag = 'output window, operand 1, single buffered']
    #allocation25 [shape = 's32[1]{0}', space=sflag, size = 0x4, scoped, tag = 'scoped memory for tpu_custom_call.1']
    #allocation26 [shape = 'u8[512]{0}', space=vmem, size = 0x400, scoped, tag = 'output window, operand 2, single buffered']
    %21 = vsyncpa [#allocation7], 0
    %s22 = scalar_lea.sflag [#allocation7], 1
    %23 = vsyncpa %s22, 0
    %24 = vsyncpa [#allocation10], 0
    %25 = vsyncpa [#allocation13], 0
    %26 = vsyncpa [#allocation16], 0
    %27 = vsyncpa [#allocation19], 0
    %28 = vsyncpa [#allocation22], 0
    %29 = vsyncpa [#allocation8], 0
    %s30 = scalar_lea.sflag [#allocation8], 1
    %31 = vsyncpa %s30, 0
    %32 = vsyncpa [#allocation25], 0
    loop: start=0, step=1, limit=5
    $region2: #{tpu_custom_call.1} parent=1 // loop_pre_header
      _
    $region3: #{tpu_custom_call.1} parent=1 // loop_header
      %s34 = sphi 0, %s38
      %p35 = scmp.ge.s32.totalorder %s34, 5
      %s44 = sphi 0, %s46
      %s47 = sphi 0, %s44
      %s48 = sphi 0, %s47
      %s64 = sphi 0, %s48
      %s68 = sphi 0, %s68
      %s70 = sphi 0, %s68
      %s71 = sphi 0, %s70
      %s85 = sphi 0, %s71
      %s89 = sphi 0, %s89
      %s91 = sphi 0, %s89
      %s92 = sphi 0, %s91
      %s106 = sphi 0, %s92
      %s110 = sphi 0, %s110
      %s112 = sphi 0, %s110
      %s113 = sphi 0, %s112
      %s127 = sphi 0, %s113
      %s131 = sphi 0, %s131
      %s133 = sphi 0, %s131
      %s134 = sphi 0, %s133
      %s148 = sphi 0, %s134
      %s152 = sphi 0, %s152
      %s154 = sphi 0, %s152
      %s155 = sphi 0, %s154
      %s169 = sphi 0, %s155
      %s173 = sphi 0, %s173
      %s175 = sphi 0, %s173
      %s176 = sphi 0, %s175
      %s190 = sphi 0, %s176
      %s194 = sphi 0, %s194
      %s196 = sphi 0, %s194
      %s197 = sphi 0, %s196
      %s211 = sphi 0, %s197
      %s215 = sphi 0, %s215
      %s217 = sphi 0, %s215
      %s218 = sphi 0, %s217
      %s232 = sphi 0, %s218
      %s236 = sphi 0, %s236
      %s238 = sphi 0, %s236
      %s239 = sphi 0, %s238
      %s253 = sphi 0, %s239
      %s257 = sphi 0, %s257
      %s259 = sphi 0, %s257
      %s260 = sphi 0, %s259
      %s274 = sphi 0, %s260
      %s280 = sphi 0, %s282
      %s283 = sphi 0, %s280
      %s284 = sphi 0, %s283
      %s300 = sphi 0, %s284
      %s304 = sphi 0, %s304
      %s306 = sphi 0, %s304
      %s307 = sphi 0, %s306
      %s321 = sphi 0, %s307
      %s325 = sphi 0, %s325
      %s327 = sphi 0, %s325
      %s328 = sphi 0, %s327
      %s342 = sphi 0, %s328
    $region4: #{tpu_custom_call.1} parent=1 // loop_header_branch
      %37 = sbr.rel (%p35) target = $region8
    $region5: #{tpu_custom_call.1} parent=1 // loop_body
      %s39 = ssub.s32 %s34, 1
      %s40 = ssub.s32 %s34, 2
      %s41 = sadd.s32 %s34, 1
      %s42 = ssub.s32 %s34, %s41
      %p43 = scmp.eq.s32.totalorder %s42, 0
      %s45 = sadd.s32 %s44, 1
      %s46 = scalar_select %p43, %s44, %s45
      %p49 = pneg %p43
      %p50 = scmp.eq.s32.totalorder %s34, 2
      %p51 = por %p49, %p50
      %p52 = scmp.ne.s32.totalorder %s44, %s47
      %p53 = scmp.eq.s32.totalorder %s34, 0
      %p54 = por %p52, %p53
      %p55 = scmp.ne.s32.totalorder %s44, %s47
      %p56 = scmp.eq.s32.totalorder %s39, 2
      %p57 = por %p55, %p56
      %p58 = scmp.ne.s32.totalorder %s47, %s48
      %p59 = scmp.eq.s32.totalorder %s39, 0
      %p60 = por %p58, %p59
      %p61 = scmp.ne.s32.totalorder %s47, %s48
      %p62 = scmp.eq.s32.totalorder %s40, 2
      %p63 = por %p61, %p62
      %p65 = scmp.ne.s32.totalorder %s48, %s64
      %p66 = scmp.eq.s32.totalorder %s40, 0
      %p67 = por %p65, %p66
      %s69 = sadd.s32 %s68, 1
      %p72 = scmp.eq.s32.totalorder %s34, 2
      %p73 = scmp.ne.s32.totalorder %s68, %s70
      %p74 = scmp.eq.s32.totalorder %s34, 0
      %p75 = por %p73, %p74
      %p76 = scmp.ne.s32.totalorder %s68, %s70
      %p77 = scmp.eq.s32.totalorder %s39, 2
      %p78 = por %p76, %p77
      %p79 = scmp.ne.s32.totalorder %s70, %s71
      %p80 = scmp.eq.s32.totalorder %s39, 0
      %p81 = por %p79, %p80
      %p82 = scmp.ne.s32.totalorder %s70, %s71
      %p83 = scmp.eq.s32.totalorder %s40, 2
      %p84 = por %p82, %p83
      %p86 = scmp.ne.s32.totalorder %s71, %s85
      %p87 = scmp.eq.s32.totalorder %s40, 0
      %p88 = por %p86, %p87
      %s90 = sadd.s32 %s89, 1
      %p93 = scmp.eq.s32.totalorder %s34, 2
      %p94 = scmp.ne.s32.totalorder %s89, %s91
      %p95 = scmp.eq.s32.totalorder %s34, 0
      %p96 = por %p94, %p95
      %p97 = scmp.ne.s32.totalorder %s89, %s91
      %p98 = scmp.eq.s32.totalorder %s39, 2
      %p99 = por %p97, %p98
      %p100 = scmp.ne.s32.totalorder %s91, %s92
      %p101 = scmp.eq.s32.totalorder %s39, 0
      %p102 = por %p100, %p101
      %p103 = scmp.ne.s32.totalorder %s91, %s92
      %p104 = scmp.eq.s32.totalorder %s40, 2
      %p105 = por %p103, %p104
      %p107 = scmp.ne.s32.totalorder %s92, %s106
      %p108 = scmp.eq.s32.totalorder %s40, 0
      %p109 = por %p107, %p108
      %s111 = sadd.s32 %s110, 1
      %p114 = scmp.eq.s32.totalorder %s34, 2
      %p115 = scmp.ne.s32.totalorder %s110, %s112
      %p116 = scmp.eq.s32.totalorder %s34, 0
      %p117 = por %p115, %p116
      %p118 = scmp.ne.s32.totalorder %s110, %s112
      %p119 = scmp.eq.s32.totalorder %s39, 2
      %p120 = por %p118, %p119
      %p121 = scmp.ne.s32.totalorder %s112, %s113
      %p122 = scmp.eq.s32.totalorder %s39, 0
      %p123 = por %p121, %p122
      %p124 = scmp.ne.s32.totalorder %s112, %s113
      %p125 = scmp.eq.s32.totalorder %s40, 2
      %p126 = por %p124, %p125
      %p128 = scmp.ne.s32.totalorder %s113, %s127
      %p129 = scmp.eq.s32.totalorder %s40, 0
      %p130 = por %p128, %p129
      %s132 = sadd.s32 %s131, 1
      %p135 = scmp.eq.s32.totalorder %s34, 2
      %p136 = scmp.ne.s32.totalorder %s131, %s133
      %p137 = scmp.eq.s32.totalorder %s34, 0
      %p138 = por %p136, %p137
      %p139 = scmp.ne.s32.totalorder %s131, %s133
      %p140 = scmp.eq.s32.totalorder %s39, 2
      %p141 = por %p139, %p140
      %p142 = scmp.ne.s32.totalorder %s133, %s134
      %p143 = scmp.eq.s32.totalorder %s39, 0
      %p144 = por %p142, %p143
      %p145 = scmp.ne.s32.totalorder %s133, %s134
      %p146 = scmp.eq.s32.totalorder %s40, 2
      %p147 = por %p145, %p146
      %p149 = scmp.ne.s32.totalorder %s134, %s148
      %p150 = scmp.eq.s32.totalorder %s40, 0
      %p151 = por %p149, %p150
      %s153 = sadd.s32 %s152, 1
      %p156 = scmp.eq.s32.totalorder %s34, 2
      %p157 = scmp.ne.s32.totalorder %s152, %s154
      %p158 = scmp.eq.s32.totalorder %s34, 0
      %p159 = por %p157, %p158
      %p160 = scmp.ne.s32.totalorder %s152, %s154
      %p161 = scmp.eq.s32.totalorder %s39, 2
      %p162 = por %p160, %p161
      %p163 = scmp.ne.s32.totalorder %s154, %s155
      %p164 = scmp.eq.s32.totalorder %s39, 0
      %p165 = por %p163, %p164
      %p166 = scmp.ne.s32.totalorder %s154, %s155
      %p167 = scmp.eq.s32.totalorder %s40, 2
      %p168 = por %p166, %p167
      %p170 = scmp.ne.s32.totalorder %s155, %s169
      %p171 = scmp.eq.s32.totalorder %s40, 0
      %p172 = por %p170, %p171
      %s174 = sadd.s32 %s173, 1
      %p177 = scmp.eq.s32.totalorder %s34, 2
      %p178 = scmp.ne.s32.totalorder %s173, %s175
      %p179 = scmp.eq.s32.totalorder %s34, 0
      %p180 = por %p178, %p179
      %p181 = scmp.ne.s32.totalorder %s173, %s175
      %p182 = scmp.eq.s32.totalorder %s39, 2
      %p183 = por %p181, %p182
      %p184 = scmp.ne.s32.totalorder %s175, %s176
      %p185 = scmp.eq.s32.totalorder %s39, 0
      %p186 = por %p184, %p185
      %p187 = scmp.ne.s32.totalorder %s175, %s176
      %p188 = scmp.eq.s32.totalorder %s40, 2
      %p189 = por %p187, %p188
      %p191 = scmp.ne.s32.totalorder %s176, %s190
      %p192 = scmp.eq.s32.totalorder %s40, 0
      %p193 = por %p191, %p192
      %s195 = sadd.s32 %s194, 1
      %p198 = scmp.eq.s32.totalorder %s34, 2
      %p199 = scmp.ne.s32.totalorder %s194, %s196
      %p200 = scmp.eq.s32.totalorder %s34, 0
      %p201 = por %p199, %p200
      %p202 = scmp.ne.s32.totalorder %s194, %s196
      %p203 = scmp.eq.s32.totalorder %s39, 2
      %p204 = por %p202, %p203
      %p205 = scmp.ne.s32.totalorder %s196, %s197
      %p206 = scmp.eq.s32.totalorder %s39, 0
      %p207 = por %p205, %p206
      %p208 = scmp.ne.s32.totalorder %s196, %s197
      %p209 = scmp.eq.s32.totalorder %s40, 2
      %p210 = por %p208, %p209
      %p212 = scmp.ne.s32.totalorder %s197, %s211
      %p213 = scmp.eq.s32.totalorder %s40, 0
      %p214 = por %p212, %p213
      %s216 = sadd.s32 %s215, 1
      %p219 = scmp.eq.s32.totalorder %s34, 2
      %p220 = scmp.ne.s32.totalorder %s215, %s217
      %p221 = scmp.eq.s32.totalorder %s34, 0
      %p222 = por %p220, %p221
      %p223 = scmp.ne.s32.totalorder %s215, %s217
      %p224 = scmp.eq.s32.totalorder %s39, 2
      %p225 = por %p223, %p224
      %p226 = scmp.ne.s32.totalorder %s217, %s218
      %p227 = scmp.eq.s32.totalorder %s39, 0
      %p228 = por %p226, %p227
      %p229 = scmp.ne.s32.totalorder %s217, %s218
      %p230 = scmp.eq.s32.totalorder %s40, 2
      %p231 = por %p229, %p230
      %p233 = scmp.ne.s32.totalorder %s218, %s232
      %p234 = scmp.eq.s32.totalorder %s40, 0
      %p235 = por %p233, %p234
      %s237 = sadd.s32 %s236, 1
      %p240 = scmp.eq.s32.totalorder %s34, 2
      %p241 = scmp.ne.s32.totalorder %s236, %s238
      %p242 = scmp.eq.s32.totalorder %s34, 0
      %p243 = por %p241, %p242
      %p244 = scmp.ne.s32.totalorder %s236, %s238
      %p245 = scmp.eq.s32.totalorder %s39, 2
      %p246 = por %p244, %p245
      %p247 = scmp.ne.s32.totalorder %s238, %s239
      %p248 = scmp.eq.s32.totalorder %s39, 0
      %p249 = por %p247, %p248
      %p250 = scmp.ne.s32.totalorder %s238, %s239
      %p251 = scmp.eq.s32.totalorder %s40, 2
      %p252 = por %p250, %p251
      %p254 = scmp.ne.s32.totalorder %s239, %s253
      %p255 = scmp.eq.s32.totalorder %s40, 0
      %p256 = por %p254, %p255
      %s258 = sadd.s32 %s257, 1
      %p261 = scmp.eq.s32.totalorder %s34, 2
      %p262 = scmp.ne.s32.totalorder %s257, %s259
      %p263 = scmp.eq.s32.totalorder %s34, 0
      %p264 = por %p262, %p263
      %p265 = scmp.ne.s32.totalorder %s257, %s259
      %p266 = scmp.eq.s32.totalorder %s39, 2
      %p267 = por %p265, %p266
      %p268 = scmp.ne.s32.totalorder %s259, %s260
      %p269 = scmp.eq.s32.totalorder %s39, 0
      %p270 = por %p268, %p269
      %p271 = scmp.ne.s32.totalorder %s259, %s260
      %p272 = scmp.eq.s32.totalorder %s40, 2
      %p273 = por %p271, %p272
      %p275 = scmp.ne.s32.totalorder %s260, %s274
      %p276 = scmp.eq.s32.totalorder %s40, 0
      %p277 = por %p275, %p276
      %s278 = ssub.s32 %s34, %s41
      %p279 = scmp.eq.s32.totalorder %s278, 0
      %s281 = sadd.s32 %s280, 1
      %s282 = scalar_select %p279, %s280, %s281
      %p285 = pneg %p279
      %p286 = scmp.eq.s32.totalorder %s34, 2
      %p287 = por %p285, %p286
      %p288 = scmp.ne.s32.totalorder %s280, %s283
      %p289 = scmp.eq.s32.totalorder %s34, 0
      %p290 = por %p288, %p289
      %p291 = scmp.ne.s32.totalorder %s280, %s283
      %p292 = scmp.eq.s32.totalorder %s39, 2
      %p293 = por %p291, %p292
      %p294 = scmp.ne.s32.totalorder %s283, %s284
      %p295 = scmp.eq.s32.totalorder %s39, 0
      %p296 = por %p294, %p295
      %p297 = scmp.ne.s32.totalorder %s283, %s284
      %p298 = scmp.eq.s32.totalorder %s40, 2
      %p299 = por %p297, %p298
      %p301 = scmp.ne.s32.totalorder %s284, %s300
      %p302 = scmp.eq.s32.totalorder %s40, 0
      %p303 = por %p301, %p302
      %s305 = sadd.s32 %s304, 1
      %p308 = scmp.eq.s32.totalorder %s34, 2
      %p309 = scmp.ne.s32.totalorder %s304, %s306
      %p310 = scmp.eq.s32.totalorder %s34, 0
      %p311 = por %p309, %p310
      %p312 = scmp.ne.s32.totalorder %s304, %s306
      %p313 = scmp.eq.s32.totalorder %s39, 2
      %p314 = por %p312, %p313
      %p315 = scmp.ne.s32.totalorder %s306, %s307
      %p316 = scmp.eq.s32.totalorder %s39, 0
      %p317 = por %p315, %p316
      %p318 = scmp.ne.s32.totalorder %s306, %s307
      %p319 = scmp.eq.s32.totalorder %s40, 2
      %p320 = por %p318, %p319
      %p322 = scmp.ne.s32.totalorder %s307, %s321
      %p323 = scmp.eq.s32.totalorder %s40, 0
      %p324 = por %p322, %p323
      %s326 = sadd.s32 %s325, 1
      %p329 = scmp.eq.s32.totalorder %s34, 2
      %p330 = scmp.ne.s32.totalorder %s325, %s327
      %p331 = scmp.eq.s32.totalorder %s34, 0
      %p332 = por %p330, %p331
      %p333 = scmp.ne.s32.totalorder %s325, %s327
      %p334 = scmp.eq.s32.totalorder %s39, 2
      %p335 = por %p333, %p334
      %p336 = scmp.ne.s32.totalorder %s327, %s328
      %p337 = scmp.eq.s32.totalorder %s39, 0
      %p338 = por %p336, %p337
      %p339 = scmp.ne.s32.totalorder %s327, %s328
      %p340 = scmp.eq.s32.totalorder %s40, 2
      %p341 = por %p339, %p340
      %p343 = scmp.ne.s32.totalorder %s328, %s342
      %p344 = scmp.eq.s32.totalorder %s40, 0
      %p345 = por %p343, %p344
      %p346 = scmp.le.s32.totalorder 1, %s34
      %p347 = scmp.lt.s32.totalorder %s34, 4
      %p348 = pnand %p346, %p347
      %p349 = pneg %p348
      // Predicated region
      $region9: #{tpu_custom_call.1} parent=5 // pred_check
        _
      $region10: #{tpu_custom_call.1} parent=5 // pred_check_branch
        %351 = sbr.rel (%p348) target = $region12
      $region11: #{tpu_custom_call.1} parent=5 // pred_region
        %s352 = ssub.s32 %s34, 1
        // Predicated region
        $region13: #{tpu_custom_call.1} parent=11 // pred_check
          %p353 = pneg %p81
        $region14: #{tpu_custom_call.1} parent=11 // pred_check_branch
          %355 = sbr.rel (%p353) target = $region16
        $region15: #{tpu_custom_call.1} parent=11 // pred_region
          %s357 = ssub.s32 32768, 32768
          %358 = vsyncadd [#allocation10], %s357
          %s359 = sshll.u32 [#allocation9], 4
          %s360 = int_to_ptr.vmem [resolvable:$true] %s359
          %365 = dma.hbm_to_vmem [thread:$0]  %s1, 32768, %s360, [#allocation10], 256, 256, 16
        $region16: #{tpu_custom_call.1} parent=11 // pred_fallthru
          _
        // Predicated region
        $region17: #{tpu_custom_call.1} parent=11 // pred_check
          %p366 = pneg %p102
        $region18: #{tpu_custom_call.1} parent=11 // pred_check_branch
          %368 = sbr.rel (%p366) target = $region20
        $region19: #{tpu_custom_call.1} parent=11 // pred_region
          %s370 = ssub.s32 64, 64
          %371 = vsyncadd [#allocation10], %s370
          %s373 = sshll.u32 [#allocation11], 4
          %s374 = int_to_ptr.vmem [resolvable:$true] %s373
          %376 = dma.hbm_to_vmem [thread:$0]  %s2, 64, %s374, [#allocation10]
        $region20: #{tpu_custom_call.1} parent=11 // pred_fallthru
          _
        // Predicated region
        $region21: #{tpu_custom_call.1} parent=11 // pred_check
          %p377 = pneg %p123
        $region22: #{tpu_custom_call.1} parent=11 // pred_check_branch
          %379 = sbr.rel (%p377) target = $region24
        $region23: #{tpu_custom_call.1} parent=11 // pred_region
          %s381 = ssub.s32 8192, 8192
          %382 = vsyncadd [#allocation13], %s381
          %s383 = sshll.u32 [#allocation12], 4
          %s384 = int_to_ptr.vmem [resolvable:$true] %s383
          %389 = dma.hbm_to_vmem [thread:$0]  %s3, 8192, %s384, [#allocation13], 128, 128, 8
        $region24: #{tpu_custom_call.1} parent=11 // pred_fallthru
          _
        // Predicated region
        $region25: #{tpu_custom_call.1} parent=11 // pred_check
          %p390 = pneg %p144
        $region26: #{tpu_custom_call.1} parent=11 // pred_check_branch
          %392 = sbr.rel (%p390) target = $region28
        $region27: #{tpu_custom_call.1} parent=11 // pred_region
          %s394 = ssub.s32 32, 32
          %395 = vsyncadd [#allocation13], %s394
          %s397 = sshll.u32 [#allocation14], 4
          %s398 = int_to_ptr.vmem [resolvable:$true] %s397
          %400 = dma.hbm_to_vmem [thread:$0]  %s4, 32, %s398, [#allocation13]
        $region28: #{tpu_custom_call.1} parent=11 // pred_fallthru
          _
        // Predicated region
        $region29: #{tpu_custom_call.1} parent=11 // pred_check
          %p401 = pneg %p165
        $region30: #{tpu_custom_call.1} parent=11 // pred_check_branch
          %403 = sbr.rel (%p401) target = $region32
        $region31: #{tpu_custom_call.1} parent=11 // pred_region
          %s405 = ssub.s32 8192, 8192
          %406 = vsyncadd [#allocation16], %s405
          %s407 = sshll.u32 [#allocation15], 4
          %s408 = int_to_ptr.vmem [resolvable:$true] %s407
          %413 = dma.hbm_to_vmem [thread:$0]  %s5, 8192, %s408, [#allocation16], 128, 128, 8
        $region32: #{tpu_custom_call.1} parent=11 // pred_fallthru
          _
        // Predicated region
        $region33: #{tpu_custom_call.1} parent=11 // pred_check
          %p414 = pneg %p186
        $region34: #{tpu_custom_call.1} parent=11 // pred_check_branch
          %416 = sbr.rel (%p414) target = $region36
        $region35: #{tpu_custom_call.1} parent=11 // pred_region
          %s418 = ssub.s32 32, 32
          %419 = vsyncadd [#allocation16], %s418
          %s421 = sshll.u32 [#allocation17], 4
          %s422 = int_to_ptr.vmem [resolvable:$true] %s421
          %424 = dma.hbm_to_vmem [thread:$0]  %s6, 32, %s422, [#allocation16]
        $region36: #{tpu_custom_call.1} parent=11 // pred_fallthru
          _
        // Predicated region
        $region37: #{tpu_custom_call.1} parent=11 // pred_check
          %p425 = pneg %p207
        $region38: #{tpu_custom_call.1} parent=11 // pred_check_branch
          %427 = sbr.rel (%p425) target = $region40
        $region39: #{tpu_custom_call.1} parent=11 // pred_region
          %s429 = ssub.s32 32, 32
          %430 = vsyncadd [#allocation19], %s429
          %s432 = sshll.u32 [#allocation18], 4
          %s433 = int_to_ptr.vmem [resolvable:$true] %s432
          %435 = dma.hbm_to_vmem [thread:$0]  %s7, 32, %s433, [#allocation19]
        $region40: #{tpu_custom_call.1} parent=11 // pred_fallthru
          _
        // Predicated region
        $region41: #{tpu_custom_call.1} parent=11 // pred_check
          %p436 = pneg %p228
        $region42: #{tpu_custom_call.1} parent=11 // pred_check_branch
          %438 = sbr.rel (%p436) target = $region44
        $region43: #{tpu_custom_call.1} parent=11 // pred_region
          _
        $region44: #{tpu_custom_call.1} parent=11 // pred_fallthru
          _
        // Predicated region
        $region45: #{tpu_custom_call.1} parent=11 // pred_check
          %p439 = pneg %p249
        $region46: #{tpu_custom_call.1} parent=11 // pred_check_branch
          %441 = sbr.rel (%p439) target = $region48
        $region47: #{tpu_custom_call.1} parent=11 // pred_region
          %s443 = ssub.s32 8192, 8192
          %444 = vsyncadd [#allocation19], %s443
          %s445 = sshll.u32 [#allocation20], 4
          %s446 = int_to_ptr.vmem [resolvable:$true] %s445
          %451 = dma.hbm_to_vmem [thread:$0]  %s9, 8192, %s446, [#allocation19], 128, 128, 8
        $region48: #{tpu_custom_call.1} parent=11 // pred_fallthru
          _
        // Predicated region
        $region49: #{tpu_custom_call.1} parent=11 // pred_check
          %p452 = pneg %p270
        $region50: #{tpu_custom_call.1} parent=11 // pred_check_branch
          %454 = sbr.rel (%p452) target = $region52
        $region51: #{tpu_custom_call.1} parent=11 // pred_region
          %s456 = ssub.s32 16, 16
          %457 = vsyncadd [#allocation22], %s456
          %s459 = sshll.u32 [#allocation21], 4
          %s460 = int_to_ptr.vmem [resolvable:$true] %s459
          %462 = dma.hbm_to_vmem [thread:$0]  %s10, 16, %s460, [#allocation22]
        $region52: #{tpu_custom_call.1} parent=11 // pred_fallthru
          _
      $region12: #{tpu_custom_call.1} parent=5 // pred_fallthru
        _
      %p463 = scmp.lt.s32.totalorder %s34, 3
      // Predicated region
      $region53: #{tpu_custom_call.1} parent=5 // pred_check
        %p464 = pneg %p463
      $region54: #{tpu_custom_call.1} parent=5 // pred_check_branch
        %466 = sbr.rel (%p464) target = $region56
      $region55: #{tpu_custom_call.1} parent=5 // pred_region
        // Predicated region
        $region57: #{tpu_custom_call.1} parent=55 // pred_check
          %p467 = pneg %p54
        $region58: #{tpu_custom_call.1} parent=55 // pred_check_branch
          %469 = sbr.rel (%p467) target = $region60
        $region59: #{tpu_custom_call.1} parent=55 // pred_region
          %s470 = sand.u32 %s44, 1
          %s471 = scalar_lea.sflag [#allocation7], %s470
          %s472 = sand.u32 %s44, 1
          %s473 = smul.addr %s472, 512
          %s474 = scalar_lea.vmem [#allocation6], %s473
          %s475 = smul.u32 16, %s34
          %s476 = ssub.s32 38, %s475
          %p477 = scmp.lt.s32.totalorder %s476, 16
          %s478 = scalar_select %p477, %s476, 16
          %s479 = smul.u32 64, %s478
          %s480 = smul.u32 %s479, 8
          %s482 = ssub.s32 8192, %s480
          %483 = vsyncadd %s471, %s482
          %p484 = scmp.ne.s32.totalorder 0, %s480
          %s485 = smul.addr %s475, 8
          %s486 = smul.addr %s485, 64
          %s487 = scalar_lea.hbm %s0, %s486
          %s488 = smul.u32 32, %s478
          %s489 = sshll.u32 %s474, 4
          %s490 = int_to_ptr.vmem [resolvable:$true] %s489
          %s491 = sshll.u32 %s488, 4
          %495 = dma.hbm_to_vmem [thread:$0]  (%p484), %s487, %s491, %s490, %s471, 512, 512, 32
        $region60: #{tpu_custom_call.1} parent=55 // pred_fallthru
          _
      $region56: #{tpu_custom_call.1} parent=5 // pred_fallthru
        _
      %p496 = scmp.le.s32.totalorder 1, %s34
      %p497 = scmp.lt.s32.totalorder %s34, 4
      %p498 = pnand %p496, %p497
      %p499 = pneg %p498
      // Predicated region
      $region61: #{tpu_custom_call.1} parent=5 // pred_check
        _
      $region62: #{tpu_custom_call.1} parent=5 // pred_check_branch
        %501 = sbr.rel (%p498) target = $region64
      $region63: #{tpu_custom_call.1} parent=5 // pred_region
        %s502 = ssub.s32 %s34, 1
        %s503 = sand.u32 %s47, 1
        %s504 = scalar_lea.sflag [#allocation7], %s503
        %s505 = sand.u32 %s47, 1
        %s506 = smul.addr %s505, 512
        %s507 = scalar_lea.vmem [#allocation6], %s506
        // Predicated region
        $region65: #{tpu_custom_call.1} parent=63 // pred_check
          %p508 = pneg %p60
        $region66: #{tpu_custom_call.1} parent=63 // pred_check_branch
          %510 = sbr.rel (%p508) target = $region68
        $region67: #{tpu_custom_call.1} parent=63 // pred_region
          %511 = dma.done %s504, 8192
        $region68: #{tpu_custom_call.1} parent=63 // pred_fallthru
          _
        // Predicated region
        $region69: #{tpu_custom_call.1} parent=63 // pred_check
          %p512 = pneg %p81
        $region70: #{tpu_custom_call.1} parent=63 // pred_check_branch
          %514 = sbr.rel (%p512) target = $region72
        $region71: #{tpu_custom_call.1} parent=63 // pred_region
          %515 = dma.done [#allocation10], 32768
        $region72: #{tpu_custom_call.1} parent=63 // pred_fallthru
          _
        // Predicated region
        $region73: #{tpu_custom_call.1} parent=63 // pred_check
          %p516 = pneg %p102
        $region74: #{tpu_custom_call.1} parent=63 // pred_check_branch
          %518 = sbr.rel (%p516) target = $region76
        $region75: #{tpu_custom_call.1} parent=63 // pred_region
          %519 = dma.done [#allocation10], 64
        $region76: #{tpu_custom_call.1} parent=63 // pred_fallthru
          _
        // Predicated region
        $region77: #{tpu_custom_call.1} parent=63 // pred_check
          %p520 = pneg %p123
        $region78: #{tpu_custom_call.1} parent=63 // pred_check_branch
          %522 = sbr.rel (%p520) target = $region80
        $region79: #{tpu_custom_call.1} parent=63 // pred_region
          %523 = dma.done [#allocation13], 8192
        $region80: #{tpu_custom_call.1} parent=63 // pred_fallthru
          _
        // Predicated region
        $region81: #{tpu_custom_call.1} parent=63 // pred_check
          %p524 = pneg %p144
        $region82: #{tpu_custom_call.1} parent=63 // pred_check_branch
          %526 = sbr.rel (%p524) target = $region84
        $region83: #{tpu_custom_call.1} parent=63 // pred_region
          %527 = dma.done [#allocation13], 32
        $region84: #{tpu_custom_call.1} parent=63 // pred_fallthru
          _
        // Predicated region
        $region85: #{tpu_custom_call.1} parent=63 // pred_check
          %p528 = pneg %p165
        $region86: #{tpu_custom_call.1} parent=63 // pred_check_branch
          %530 = sbr.rel (%p528) target = $region88
        $region87: #{tpu_custom_call.1} parent=63 // pred_region
          %531 = dma.done [#allocation16], 8192
        $region88: #{tpu_custom_call.1} parent=63 // pred_fallthru
          _
        // Predicated region
        $region89: #{tpu_custom_call.1} parent=63 // pred_check
          %p532 = pneg %p186
        $region90: #{tpu_custom_call.1} parent=63 // pred_check_branch
          %534 = sbr.rel (%p532) target = $region92
        $region91: #{tpu_custom_call.1} parent=63 // pred_region
          %535 = dma.done [#allocation16], 32
        $region92: #{tpu_custom_call.1} parent=63 // pred_fallthru
          _
        // Predicated region
        $region93: #{tpu_custom_call.1} parent=63 // pred_check
          %p536 = pneg %p207
        $region94: #{tpu_custom_call.1} parent=63 // pred_check_branch
          %538 = sbr.rel (%p536) target = $region96
        $region95: #{tpu_custom_call.1} parent=63 // pred_region
          %539 = dma.done [#allocation19], 32
        $region96: #{tpu_custom_call.1} parent=63 // pred_fallthru
          _
        // Predicated region
        $region97: #{tpu_custom_call.1} parent=63 // pred_check
          %p540 = pneg %p249
        $region98: #{tpu_custom_call.1} parent=63 // pred_check_branch
          %542 = sbr.rel (%p540) target = $region100
        $region99: #{tpu_custom_call.1} parent=63 // pred_region
          %543 = dma.done [#allocation19], 8192
        $region100: #{tpu_custom_call.1} parent=63 // pred_fallthru
          _
        // Predicated region
        $region101: #{tpu_custom_call.1} parent=63 // pred_check
          %p544 = pneg %p270
        $region102: #{tpu_custom_call.1} parent=63 // pred_check_branch
          %546 = sbr.rel (%p544) target = $region104
        $region103: #{tpu_custom_call.1} parent=63 // pred_region
          %547 = dma.done [#allocation22], 16
        $region104: #{tpu_custom_call.1} parent=63 // pred_fallthru
          _
        %s548 = sand.u32 %s47, 1
        %s549 = scalar_lea.sflag [#allocation7], %s548
        %s550 = sand.u32 %s47, 1
        %s551 = smul.addr %s550, 512
        %s552 = scalar_lea.vmem [#allocation6], %s551
        %p553 = pneg %p60
        %p554 = pneg %p57
        %p555 = pneg %p81
        %p556 = pneg %p78
        %p557 = pneg %p102
        %p558 = pneg %p99
        %p559 = pneg %p123
        %p560 = pneg %p120
        %p561 = pneg %p144
        %p562 = pneg %p141
        %p563 = pneg %p165
        %p564 = pneg %p162
        %p565 = pneg %p186
        %p566 = pneg %p183
        %p567 = pneg %p207
        %p568 = pneg %p204
        %p569 = pneg %p228
        %p570 = pneg %p225
        %p571 = pneg %p249
        %p572 = pneg %p246
        %p573 = pneg %p270
        %p574 = pneg %p267
        %p575 = pneg %p296
        %p576 = pneg %p293
        %s577 = sand.u32 %s283, 1
        %s578 = scalar_lea.sflag [#allocation8], %s577
        %s579 = sand.u32 %s283, 1
        %s580 = smul.addr %s579, 128
        %s581 = scalar_lea.vmem [#allocation23], %s580
        %p582 = pneg %p317
        %p583 = pneg %p314
        %p584 = pneg %p338
        %p585 = pneg %p335
        %s586 = smul.u32 16, %s39
        %s587 = ssub.s32 38, %s586
        %p588 = scmp.lt.s32.totalorder %s587, 16
        %s589 = scalar_select %p588, %s587, 16
        %s590 = smul.u32 64, %s589
        %s591 = smul.u32 %s590, 8
        %s592 = smul.u32 16, %s39
        %s593 = ssub.s32 38, %s592
        %p594 = scmp.lt.s32.totalorder %s593, 16
        %s595 = scalar_select %p594, %s593, 16
        %s596 = smul.u32 128, %s595
        %p597 = scmp.eq.s32.totalorder %s39, 0
        // Predicated region
        $region105: #{tpu_custom_call.1} parent=63 // pred_check
          %p598 = pneg %p597
        $region106: #{tpu_custom_call.1} parent=63 // pred_check_branch
          %600 = sbr.rel (%p598) target = $region108
        $region107: #{tpu_custom_call.1} parent=63 // pred_region
          %vm601 = vcmask 0
          %602 = vst.msk [vmem:[#allocation2] sm:$0x1] %vm601, -inf
          %603 = vst.msk [vmem:[#allocation3] sm:$0x1] %vm601, 0.0
          %v604 = vlaneseq
          %vm605 = vcmp.ge.s32.totalorder %v604, 0
          %vm606 = vcmp.lt.s32.totalorder %v604, 512
          %vm607 = vmand %vm605, %vm606
          %608 = vst.msk [vmem:[#allocation4] sm:$0xf] %vm607, 0.0
        $region108: #{tpu_custom_call.1} parent=63 // pred_fallthru
          _
        %s609 = smul.u32 %s39, 128
        %v610 = vlaneseq
        %v611 = vshrl.u32 %v610, 7
        %v612 = vadd.s32 %v611, 8
        %v613 = vadd.s32 %v611, 16
        %v614 = vadd.s32 %v611, 24
        %v615 = vadd.s32 %v611, 32
        %v616 = vadd.s32 %v611, 40
        %v617 = vadd.s32 %v611, 48
        %v618 = vadd.s32 %v611, 56
        %v619 = vadd.s32 %v611, 64
        %v620 = vadd.s32 %v611, 72
        %v621 = vadd.s32 %v611, 80
        %v622 = vadd.s32 %v611, 88
        %v623 = vadd.s32 %v611, 96
        %v624 = vadd.s32 %v611, 104
        %v625 = vadd.s32 %v611, 112
        %v626 = vadd.s32 %v611, 120
        %v627 = vstv %s609
        %v628 = vadd.s32 %v627, %v611
        %v629 = vadd.s32 %v627, %v612
        %v630 = vadd.s32 %v627, %v613
        %v631 = vadd.s32 %v627, %v614
        %v632 = vadd.s32 %v627, %v615
        %v633 = vadd.s32 %v627, %v616
        %v634 = vadd.s32 %v627, %v617
        %v635 = vadd.s32 %v627, %v618
        %v636 = vadd.s32 %v627, %v619
        %v637 = vadd.s32 %v627, %v620
        %v638 = vadd.s32 %v627, %v621
        %v639 = vadd.s32 %v627, %v622
        %v640 = vadd.s32 %v627, %v623
        %v641 = vadd.s32 %v627, %v624
        %v642 = vadd.s32 %v627, %v625
        %v643 = vadd.s32 %v627, %v626
        %vm644 = vcmp.lt.s32.totalorder %v628, 300
        %vm645 = vcmp.lt.s32.totalorder %v629, 300
        %vm646 = vcmp.lt.s32.totalorder %v630, 300
        %vm647 = vcmp.lt.s32.totalorder %v631, 300
        %vm648 = vcmp.lt.s32.totalorder %v632, 300
        %vm649 = vcmp.lt.s32.totalorder %v633, 300
        %vm650 = vcmp.lt.s32.totalorder %v634, 300
        %vm651 = vcmp.lt.s32.totalorder %v635, 300
        %vm652 = vcmp.lt.s32.totalorder %v636, 300
        %vm653 = vcmp.lt.s32.totalorder %v637, 300
        %vm654 = vcmp.lt.s32.totalorder %v638, 300
        %vm655 = vcmp.lt.s32.totalorder %v639, 300
        %vm656 = vcmp.lt.s32.totalorder %v640, 300
        %vm657 = vcmp.lt.s32.totalorder %v641, 300
        %vm658 = vcmp.lt.s32.totalorder %v642, 300
        %vm659 = vcmp.lt.s32.totalorder %v643, 300
        %v660 = vld [vmem:[%s507] sm:$0xff]
        %v661 = vld [vmem:[%s507 + $0x8] sm:$0xff]
        %v662 = vld [vmem:[%s507 + $0x10] sm:$0xff]
        %v663 = vld [vmem:[%s507 + $0x18] sm:$0xff]
        %v664 = vld [vmem:[%s507 + $0x20] sm:$0xff]
        %v665 = vld [vmem:[%s507 + $0x28] sm:$0xff]
        %v666 = vld [vmem:[%s507 + $0x30] sm:$0xff]
        %v667 = vld [vmem:[%s507 + $0x38] sm:$0xff]
        %v668 = vld [vmem:[%s507 + $0x40] sm:$0xff]
        %v669 = vld [vmem:[%s507 + $0x48] sm:$0xff]
        %v670 = vld [vmem:[%s507 + $0x50] sm:$0xff]
        %v671 = vld [vmem:[%s507 + $0x58] sm:$0xff]
        %v672 = vld [vmem:[%s507 + $0x60] sm:$0xff]
        %v673 = vld [vmem:[%s507 + $0x68] sm:$0xff]
        %v674 = vld [vmem:[%s507 + $0x70] sm:$0xff]
        %v675 = vld [vmem:[%s507 + $0x78] sm:$0xff]
        %v676 = vld [vmem:[%s507 + $0x80] sm:$0xff]
        %v677 = vld [vmem:[%s507 + $0x88] sm:$0xff]
        %v678 = vld [vmem:[%s507 + $0x90] sm:$0xff]
        %v679 = vld [vmem:[%s507 + $0x98] sm:$0xff]
        %v680 = vld [vmem:[%s507 + $0xa0] sm:$0xff]
        %v681 = vld [vmem:[%s507 + $0xa8] sm:$0xff]
        %v682 = vld [vmem:[%s507 + $0xb0] sm:$0xff]
        %v683 = vld [vmem:[%s507 + $0xb8] sm:$0xff]
        %v684 = vld [vmem:[%s507 + $0xc0] sm:$0xff]
        %v685 = vld [vmem:[%s507 + $0xc8] sm:$0xff]
        %v686 = vld [vmem:[%s507 + $0xd0] sm:$0xff]
        %v687 = vld [vmem:[%s507 + $0xd8] sm:$0xff]
        %v688 = vld [vmem:[%s507 + $0xe0] sm:$0xff]
        %v689 = vld [vmem:[%s507 + $0xe8] sm:$0xff]
        %v690 = vld [vmem:[%s507 + $0xf0] sm:$0xff]
        %v691 = vld [vmem:[%s507 + $0xf8] sm:$0xff]
        %v692 = vld [vmem:[%s507 + $0x100] sm:$0xff]
        %v693 = vld [vmem:[%s507 + $0x108] sm:$0xff]
        %v694 = vld [vmem:[%s507 + $0x110] sm:$0xff]
        %v695 = vld [vmem:[%s507 + $0x118] sm:$0xff]
        %v696 = vld [vmem:[%s507 + $0x120] sm:$0xff]
        %v697 = vld [vmem:[%s507 + $0x128] sm:$0xff]
        %v698 = vld [vmem:[%s507 + $0x130] sm:$0xff]
        %v699 = vld [vmem:[%s507 + $0x138] sm:$0xff]
        %v700 = vld [vmem:[%s507 + $0x140] sm:$0xff]
        %v701 = vld [vmem:[%s507 + $0x148] sm:$0xff]
        %v702 = vld [vmem:[%s507 + $0x150] sm:$0xff]
        %v703 = vld [vmem:[%s507 + $0x158] sm:$0xff]
        %v704 = vld [vmem:[%s507 + $0x160] sm:$0xff]
        %v705 = vld [vmem:[%s507 + $0x168] sm:$0xff]
        %v706 = vld [vmem:[%s507 + $0x170] sm:$0xff]
        %v707 = vld [vmem:[%s507 + $0x178] sm:$0xff]
        %v708 = vld [vmem:[%s507 + $0x180] sm:$0xff]
        %v709 = vld [vmem:[%s507 + $0x188] sm:$0xff]
        %v710 = vld [vmem:[%s507 + $0x190] sm:$0xff]
        %v711 = vld [vmem:[%s507 + $0x198] sm:$0xff]
        %v712 = vld [vmem:[%s507 + $0x1a0] sm:$0xff]
        %v713 = vld [vmem:[%s507 + $0x1a8] sm:$0xff]
        %v714 = vld [vmem:[%s507 + $0x1b0] sm:$0xff]
        %v715 = vld [vmem:[%s507 + $0x1b8] sm:$0xff]
        %v716 = vld [vmem:[%s507 + $0x1c0] sm:$0xff]
        %v717 = vld [vmem:[%s507 + $0x1c8] sm:$0xff]
        %v718 = vld [vmem:[%s507 + $0x1d0] sm:$0xff]
        %v719 = vld [vmem:[%s507 + $0x1d8] sm:$0xff]
        %v720 = vld [vmem:[%s507 + $0x1e0] sm:$0xff]
        %v721 = vld [vmem:[%s507 + $0x1e8] sm:$0xff]
        %v722 = vld [vmem:[%s507 + $0x1f0] sm:$0xff]
        %v723 = vld [vmem:[%s507 + $0x1f8] sm:$0xff]
        %v724 = vld [vmem:[#allocation9] sm:$0xff]
        %v725 = vld [vmem:[#allocation9 + $0x8] sm:$0xff]
        %v726 = vld [vmem:[#allocation9 + $0x10] sm:$0xff]
        %v727 = vld [vmem:[#allocation9 + $0x18] sm:$0xff]
        %v728 = vld [vmem:[#allocation9 + $0x20] sm:$0xff]
        %v729 = vld [vmem:[#allocation9 + $0x28] sm:$0xff]
        %v730 = vld [vmem:[#allocation9 + $0x30] sm:$0xff]
        %v731 = vld [vmem:[#allocation9 + $0x38] sm:$0xff]
        %v732 = vld [vmem:[#allocation9 + $0x40] sm:$0xff]
        %v733 = vld [vmem:[#allocation9 + $0x48] sm:$0xff]
        %v734 = vld [vmem:[#allocation9 + $0x50] sm:$0xff]
        %v735 = vld [vmem:[#allocation9 + $0x58] sm:$0xff]
        %v736 = vld [vmem:[#allocation9 + $0x60] sm:$0xff]
        %v737 = vld [vmem:[#allocation9 + $0x68] sm:$0xff]
        %v738 = vld [vmem:[#allocation9 + $0x70] sm:$0xff]
        %v739 = vld [vmem:[#allocation9 + $0x78] sm:$0xff]
        %v740 = vld [vmem:[#allocation9 + $0x80] sm:$0xff]
        %v741 = vld [vmem:[#allocation9 + $0x88] sm:$0xff]
        %v742 = vld [vmem:[#allocation9 + $0x90] sm:$0xff]
        %v743 = vld [vmem:[#allocation9 + $0x98] sm:$0xff]
        %v744 = vld [vmem:[#allocation9 + $0xa0] sm:$0xff]
        %v745 = vld [vmem:[#allocation9 + $0xa8] sm:$0xff]
        %v746 = vld [vmem:[#allocation9 + $0xb0] sm:$0xff]
        %v747 = vld [vmem:[#allocation9 + $0xb8] sm:$0xff]
        %v748 = vld [vmem:[#allocation9 + $0xc0] sm:$0xff]
        %v749 = vld [vmem:[#allocation9 + $0xc8] sm:$0xff]
        %v750 = vld [vmem:[#allocation9 + $0xd0] sm:$0xff]
        %v751 = vld [vmem:[#allocation9 + $0xd8] sm:$0xff]
        %v752 = vld [vmem:[#allocation9 + $0xe0] sm:$0xff]
        %v753 = vld [vmem:[#allocation9 + $0xe8] sm:$0xff]
        %v754 = vld [vmem:[#allocation9 + $0xf0] sm:$0xff]
        %v755 = vld [vmem:[#allocation9 + $0xf8] sm:$0xff]
        %v756 = vld [vmem:[#allocation9 + $0x100] sm:$0xff]
        %v757 = vld [vmem:[#allocation9 + $0x108] sm:$0xff]
        %v758 = vld [vmem:[#allocation9 + $0x110] sm:$0xff]
        %v759 = vld [vmem:[#allocation9 + $0x118] sm:$0xff]
        %v760 = vld [vmem:[#allocation9 + $0x120] sm:$0xff]
        %v761 = vld [vmem:[#allocation9 + $0x128] sm:$0xff]
        %v762 = vld [vmem:[#allocation9 + $0x130] sm:$0xff]
        %v763 = vld [vmem:[#allocation9 + $0x138] sm:$0xff]
        %v764 = vld [vmem:[#allocation9 + $0x140] sm:$0xff]
        %v765 = vld [vmem:[#allocation9 + $0x148] sm:$0xff]
        %v766 = vld [vmem:[#allocation9 + $0x150] sm:$0xff]
        %v767 = vld [vmem:[#allocation9 + $0x158] sm:$0xff]
        %v768 = vld [vmem:[#allocation9 + $0x160] sm:$0xff]
        %v769 = vld [vmem:[#allocation9 + $0x168] sm:$0xff]
        %v770 = vld [vmem:[#allocation9 + $0x170] sm:$0xff]
        %v771 = vld [vmem:[#allocation9 + $0x178] sm:$0xff]
        %v772 = vld [vmem:[#allocation9 + $0x180] sm:$0xff]
        %v773 = vld [vmem:[#allocation9 + $0x188] sm:$0xff]
        %v774 = vld [vmem:[#allocation9 + $0x190] sm:$0xff]
        %v775 = vld [vmem:[#allocation9 + $0x198] sm:$0xff]
        %v776 = vld [vmem:[#allocation9 + $0x1a0] sm:$0xff]
        %v777 = vld [vmem:[#allocation9 + $0x1a8] sm:$0xff]
        %v778 = vld [vmem:[#allocation9 + $0x1b0] sm:$0xff]
        %v779 = vld [vmem:[#allocation9 + $0x1b8] sm:$0xff]
        %v780 = vld [vmem:[#allocation9 + $0x1c0] sm:$0xff]
        %v781 = vld [vmem:[#allocation9 + $0x1c8] sm:$0xff]
        %v782 = vld [vmem:[#allocation9 + $0x1d0] sm:$0xff]
        %v783 = vld [vmem:[#allocation9 + $0x1d8] sm:$0xff]
        %v784 = vld [vmem:[#allocation9 + $0x1e0] sm:$0xff]
        %v785 = vld [vmem:[#allocation9 + $0x1e8] sm:$0xff]
        %v786 = vld [vmem:[#allocation9 + $0x1f0] sm:$0xff]
        %v787 = vld [vmem:[#allocation9 + $0x1f8] sm:$0xff]
        %v788 = vld [vmem:[#allocation9 + $0x200] sm:$0xff]
        %v789 = vld [vmem:[#allocation9 + $0x208] sm:$0xff]
        %v790 = vld [vmem:[#allocation9 + $0x210] sm:$0xff]
        %v791 = vld [vmem:[#allocation9 + $0x218] sm:$0xff]
        %v792 = vld [vmem:[#allocation9 + $0x220] sm:$0xff]
        %v793 = vld [vmem:[#allocation9 + $0x228] sm:$0xff]
        %v794 = vld [vmem:[#allocation9 + $0x230] sm:$0xff]
        %v795 = vld [vmem:[#allocation9 + $0x238] sm:$0xff]
        %v796 = vld [vmem:[#allocation9 + $0x240] sm:$0xff]
        %v797 = vld [vmem:[#allocation9 + $0x248] sm:$0xff]
        %v798 = vld [vmem:[#allocation9 + $0x250] sm:$0xff]
        %v799 = vld [vmem:[#allocation9 + $0x258] sm:$0xff]
        %v800 = vld [vmem:[#allocation9 + $0x260] sm:$0xff]
        %v801 = vld [vmem:[#allocation9 + $0x268] sm:$0xff]
        %v802 = vld [vmem:[#allocation9 + $0x270] sm:$0xff]
        %v803 = vld [vmem:[#allocation9 + $0x278] sm:$0xff]
        %v804 = vld [vmem:[#allocation9 + $0x280] sm:$0xff]
        %v805 = vld [vmem:[#allocation9 + $0x288] sm:$0xff]
        %v806 = vld [vmem:[#allocation9 + $0x290] sm:$0xff]
        %v807 = vld [vmem:[#allocation9 + $0x298] sm:$0xff]
        %v808 = vld [vmem:[#allocation9 + $0x2a0] sm:$0xff]
        %v809 = vld [vmem:[#allocation9 + $0x2a8] sm:$0xff]
        %v810 = vld [vmem:[#allocation9 + $0x2b0] sm:$0xff]
        %v811 = vld [vmem:[#allocation9 + $0x2b8] sm:$0xff]
        %v812 = vld [vmem:[#allocation9 + $0x2c0] sm:$0xff]
        %v813 = vld [vmem:[#allocation9 + $0x2c8] sm:$0xff]
        %v814 = vld [vmem:[#allocation9 + $0x2d0] sm:$0xff]
        %v815 = vld [vmem:[#allocation9 + $0x2d8] sm:$0xff]
        %v816 = vld [vmem:[#allocation9 + $0x2e0] sm:$0xff]
        %v817 = vld [vmem:[#allocation9 + $0x2e8] sm:$0xff]
        %v818 = vld [vmem:[#allocation9 + $0x2f0] sm:$0xff]
        %v819 = vld [vmem:[#allocation9 + $0x2f8] sm:$0xff]
        %v820 = vld [vmem:[#allocation9 + $0x300] sm:$0xff]
        %v821 = vld [vmem:[#allocation9 + $0x308] sm:$0xff]
        %v822 = vld [vmem:[#allocation9 + $0x310] sm:$0xff]
        %v823 = vld [vmem:[#allocation9 + $0x318] sm:$0xff]
        %v824 = vld [vmem:[#allocation9 + $0x320] sm:$0xff]
        %v825 = vld [vmem:[#allocation9 + $0x328] sm:$0xff]
        %v826 = vld [vmem:[#allocation9 + $0x330] sm:$0xff]
        %v827 = vld [vmem:[#allocation9 + $0x338] sm:$0xff]
        %v828 = vld [vmem:[#allocation9 + $0x340] sm:$0xff]
        %v829 = vld [vmem:[#allocation9 + $0x348] sm:$0xff]
        %v830 = vld [vmem:[#allocation9 + $0x350] sm:$0xff]
        %v831 = vld [vmem:[#allocation9 + $0x358] sm:$0xff]
        %v832 = vld [vmem:[#allocation9 + $0x360] sm:$0xff]
        %v833 = vld [vmem:[#allocation9 + $0x368] sm:$0xff]
        %v834 = vld [vmem:[#allocation9 + $0x370] sm:$0xff]
        %v835 = vld [vmem:[#allocation9 + $0x378] sm:$0xff]
        %v836 = vld [vmem:[#allocation9 + $0x380] sm:$0xff]
        %v837 = vld [vmem:[#allocation9 + $0x388] sm:$0xff]
        %v838 = vld [vmem:[#allocation9 + $0x390] sm:$0xff]
        %v839 = vld [vmem:[#allocation9 + $0x398] sm:$0xff]
        %v840 = vld [vmem:[#allocation9 + $0x3a0] sm:$0xff]
        %v841 = vld [vmem:[#allocation9 + $0x3a8] sm:$0xff]
        %v842 = vld [vmem:[#allocation9 + $0x3b0] sm:$0xff]
        %v843 = vld [vmem:[#allocation9 + $0x3b8] sm:$0xff]
        %v844 = vld [vmem:[#allocation9 + $0x3c0] sm:$0xff]
        %v845 = vld [vmem:[#allocation9 + $0x3c8] sm:$0xff]
        %v846 = vld [vmem:[#allocation9 + $0x3d0] sm:$0xff]
        %v847 = vld [vmem:[#allocation9 + $0x3d8] sm:$0xff]
        %v848 = vld [vmem:[#allocation9 + $0x3e0] sm:$0xff]
        %v849 = vld [vmem:[#allocation9 + $0x3e8] sm:$0xff]
        %v850 = vld [vmem:[#allocation9 + $0x3f0] sm:$0xff]
        %v851 = vld [vmem:[#allocation9 + $0x3f8] sm:$0xff]
        %v852 = vld [vmem:[#allocation9 + $0x400] sm:$0xff]
        %v853 = vld [vmem:[#allocation9 + $0x408] sm:$0xff]
        %v854 = vld [vmem:[#allocation9 + $0x410] sm:$0xff]
        %v855 = vld [vmem:[#allocation9 + $0x418] sm:$0xff]
        %v856 = vld [vmem:[#allocation9 + $0x420] sm:$0xff]
        %v857 = vld [vmem:[#allocation9 + $0x428] sm:$0xff]
        %v858 = vld [vmem:[#allocation9 + $0x430] sm:$0xff]
        %v859 = vld [vmem:[#allocation9 + $0x438] sm:$0xff]
        %v860 = vld [vmem:[#allocation9 + $0x440] sm:$0xff]
        %v861 = vld [vmem:[#allocation9 + $0x448] sm:$0xff]
        %v862 = vld [vmem:[#allocation9 + $0x450] sm:$0xff]
        %v863 = vld [vmem:[#allocation9 + $0x458] sm:$0xff]
        %v864 = vld [vmem:[#allocation9 + $0x460] sm:$0xff]
        %v865 = vld [vmem:[#allocation9 + $0x468] sm:$0xff]
        %v866 = vld [vmem:[#allocation9 + $0x470] sm:$0xff]
        %v867 = vld [vmem:[#allocation9 + $0x478] sm:$0xff]
        %v868 = vld [vmem:[#allocation9 + $0x480] sm:$0xff]
        %v869 = vld [vmem:[#allocation9 + $0x488] sm:$0xff]
        %v870 = vld [vmem:[#allocation9 + $0x490] sm:$0xff]
        %v871 = vld [vmem:[#allocation9 + $0x498] sm:$0xff]
        %v872 = vld [vmem:[#allocation9 + $0x4a0] sm:$0xff]
        %v873 = vld [vmem:[#allocation9 + $0x4a8] sm:$0xff]
        %v874 = vld [vmem:[#allocation9 + $0x4b0] sm:$0xff]
        %v875 = vld [vmem:[#allocation9 + $0x4b8] sm:$0xff]
        %v876 = vld [vmem:[#allocation9 + $0x4c0] sm:$0xff]
        %v877 = vld [vmem:[#allocation9 + $0x4c8] sm:$0xff]
        %v878 = vld [vmem:[#allocation9 + $0x4d0] sm:$0xff]
        %v879 = vld [vmem:[#allocation9 + $0x4d8] sm:$0xff]
        %v880 = vld [vmem:[#allocation9 + $0x4e0] sm:$0xff]
        %v881 = vld [vmem:[#allocation9 + $0x4e8] sm:$0xff]
        %v882 = vld [vmem:[#allocation9 + $0x4f0] sm:$0xff]
        %v883 = vld [vmem:[#allocation9 + $0x4f8] sm:$0xff]
        %v884 = vld [vmem:[#allocation9 + $0x500] sm:$0xff]
        %v885 = vld [vmem:[#allocation9 + $0x508] sm:$0xff]
        %v886 = vld [vmem:[#allocation9 + $0x510] sm:$0xff]
        %v887 = vld [vmem:[#allocation9 + $0x518] sm:$0xff]
        %v888 = vld [vmem:[#allocation9 + $0x520] sm:$0xff]
        %v889 = vld [vmem:[#allocation9 + $0x528] sm:$0xff]
        %v890 = vld [vmem:[#allocation9 + $0x530] sm:$0xff]
        %v891 = vld [vmem:[#allocation9 + $0x538] sm:$0xff]
        %v892 = vld [vmem:[#allocation9 + $0x540] sm:$0xff]
        %v893 = vld [vmem:[#allocation9 + $0x548] sm:$0xff]
        %v894 = vld [vmem:[#allocation9 + $0x550] sm:$0xff]
        %v895 = vld [vmem:[#allocation9 + $0x558] sm:$0xff]
        %v896 = vld [vmem:[#allocation9 + $0x560] sm:$0xff]
        %v897 = vld [vmem:[#allocation9 + $0x568] sm:$0xff]
        %v898 = vld [vmem:[#allocation9 + $0x570] sm:$0xff]
        %v899 = vld [vmem:[#allocation9 + $0x578] sm:$0xff]
        %v900 = vld [vmem:[#allocation9 + $0x580] sm:$0xff]
        %v901 = vld [vmem:[#allocation9 + $0x588] sm:$0xff]
        %v902 = vld [vmem:[#allocation9 + $0x590] sm:$0xff]
        %v903 = vld [vmem:[#allocation9 + $0x598] sm:$0xff]
        %v904 = vld [vmem:[#allocation9 + $0x5a0] sm:$0xff]
        %v905 = vld [vmem:[#allocation9 + $0x5a8] sm:$0xff]
        %v906 = vld [vmem:[#allocation9 + $0x5b0] sm:$0xff]
        %v907 = vld [vmem:[#allocation9 + $0x5b8] sm:$0xff]
        %v908 = vld [vmem:[#allocation9 + $0x5c0] sm:$0xff]
        %v909 = vld [vmem:[#allocation9 + $0x5c8] sm:$0xff]
        %v910 = vld [vmem:[#allocation9 + $0x5d0] sm:$0xff]
        %v911 = vld [vmem:[#allocation9 + $0x5d8] sm:$0xff]
        %v912 = vld [vmem:[#allocation9 + $0x5e0] sm:$0xff]
        %v913 = vld [vmem:[#allocation9 + $0x5e8] sm:$0xff]
        %v914 = vld [vmem:[#allocation9 + $0x5f0] sm:$0xff]
        %v915 = vld [vmem:[#allocation9 + $0x5f8] sm:$0xff]
        %v916 = vld [vmem:[#allocation9 + $0x600] sm:$0xff]
        %v917 = vld [vmem:[#allocation9 + $0x608] sm:$0xff]
        %v918 = vld [vmem:[#allocation9 + $0x610] sm:$0xff]
        %v919 = vld [vmem:[#allocation9 + $0x618] sm:$0xff]
        %v920 = vld [vmem:[#allocation9 + $0x620] sm:$0xff]
        %v921 = vld [vmem:[#allocation9 + $0x628] sm:$0xff]
        %v922 = vld [vmem:[#allocation9 + $0x630] sm:$0xff]
        %v923 = vld [vmem:[#allocation9 + $0x638] sm:$0xff]
        %v924 = vld [vmem:[#allocation9 + $0x640] sm:$0xff]
        %v925 = vld [vmem:[#allocation9 + $0x648] sm:$0xff]
        %v926 = vld [vmem:[#allocation9 + $0x650] sm:$0xff]
        %v927 = vld [vmem:[#allocation9 + $0x658] sm:$0xff]
        %v928 = vld [vmem:[#allocation9 + $0x660] sm:$0xff]
        %v929 = vld [vmem:[#allocation9 + $0x668] sm:$0xff]
        %v930 = vld [vmem:[#allocation9 + $0x670] sm:$0xff]
        %v931 = vld [vmem:[#allocation9 + $0x678] sm:$0xff]
        %v932 = vld [vmem:[#allocation9 + $0x680] sm:$0xff]
        %v933 = vld [vmem:[#allocation9 + $0x688] sm:$0xff]
        %v934 = vld [vmem:[#allocation9 + $0x690] sm:$0xff]
        %v935 = vld [vmem:[#allocation9 + $0x698] sm:$0xff]
        %v936 = vld [vmem:[#allocation9 + $0x6a0] sm:$0xff]
        %v937 = vld [vmem:[#allocation9 + $0x6a8] sm:$0xff]
        %v938 = vld [vmem:[#allocation9 + $0x6b0] sm:$0xff]
        %v939 = vld [vmem:[#allocation9 + $0x6b8] sm:$0xff]
        %v940 = vld [vmem:[#allocation9 + $0x6c0] sm:$0xff]
        %v941 = vld [vmem:[#allocation9 + $0x6c8] sm:$0xff]
        %v942 = vld [vmem:[#allocation9 + $0x6d0] sm:$0xff]
        %v943 = vld [vmem:[#allocation9 + $0x6d8] sm:$0xff]
        %v944 = vld [vmem:[#allocation9 + $0x6e0] sm:$0xff]
        %v945 = vld [vmem:[#allocation9 + $0x6e8] sm:$0xff]
        %v946 = vld [vmem:[#allocation9 + $0x6f0] sm:$0xff]
        %v947 = vld [vmem:[#allocation9 + $0x6f8] sm:$0xff]
        %v948 = vld [vmem:[#allocation9 + $0x700] sm:$0xff]
        %v949 = vld [vmem:[#allocation9 + $0x708] sm:$0xff]
        %v950 = vld [vmem:[#allocation9 + $0x710] sm:$0xff]
        %v951 = vld [vmem:[#allocation9 + $0x718] sm:$0xff]
        %v952 = vld [vmem:[#allocation9 + $0x720] sm:$0xff]
        %v953 = vld [vmem:[#allocation9 + $0x728] sm:$0xff]
        %v954 = vld [vmem:[#allocation9 + $0x730] sm:$0xff]
        %v955 = vld [vmem:[#allocation9 + $0x738] sm:$0xff]
        %v956 = vld [vmem:[#allocation9 + $0x740] sm:$0xff]
        %v957 = vld [vmem:[#allocation9 + $0x748] sm:$0xff]
        %v958 = vld [vmem:[#allocation9 + $0x750] sm:$0xff]
        %v959 = vld [vmem:[#allocation9 + $0x758] sm:$0xff]
        %v960 = vld [vmem:[#allocation9 + $0x760] sm:$0xff]
        %v961 = vld [vmem:[#allocation9 + $0x768] sm:$0xff]
        %v962 = vld [vmem:[#allocation9 + $0x770] sm:$0xff]
        %v963 = vld [vmem:[#allocation9 + $0x778] sm:$0xff]
        %v964 = vld [vmem:[#allocation9 + $0x780] sm:$0xff]
        %v965 = vld [vmem:[#allocation9 + $0x788] sm:$0xff]
        %v966 = vld [vmem:[#allocation9 + $0x790] sm:$0xff]
        %v967 = vld [vmem:[#allocation9 + $0x798] sm:$0xff]
        %v968 = vld [vmem:[#allocation9 + $0x7a0] sm:$0xff]
        %v969 = vld [vmem:[#allocation9 + $0x7a8] sm:$0xff]
        %v970 = vld [vmem:[#allocation9 + $0x7b0] sm:$0xff]
        %v971 = vld [vmem:[#allocation9 + $0x7b8] sm:$0xff]
        %v972 = vld [vmem:[#allocation9 + $0x7c0] sm:$0xff]
        %v973 = vld [vmem:[#allocation9 + $0x7c8] sm:$0xff]
        %v974 = vld [vmem:[#allocation9 + $0x7d0] sm:$0xff]
        %v975 = vld [vmem:[#allocation9 + $0x7d8] sm:$0xff]
        %v976 = vld [vmem:[#allocation9 + $0x7e0] sm:$0xff]
        %v977 = vld [vmem:[#allocation9 + $0x7e8] sm:$0xff]
        %v978 = vld [vmem:[#allocation9 + $0x7f0] sm:$0xff]
        %v979 = vld [vmem:[#allocation9 + $0x7f8] sm:$0xff]
        %v980 = vld [vmem:[#allocation11] sm:$0xf]
        %v982 = vlaneseq
        %v983 = vshrl.u32 %v982, 7
        %v984 = vsub.s32 0, %v983
        %v985 = vrot.slane %v980, %v984
        %v986 = vlaneseq
        %v987 = vshrl.u32 %v986, 7
        %v988 = vsub.s32 1, %v987
        %v989 = vrot.slane %v980, %v988
        %v990 = vlaneseq
        %v991 = vshrl.u32 %v990, 7
        %v992 = vsub.s32 2, %v991
        %v993 = vrot.slane %v980, %v992
        %v994 = vlaneseq
        %v995 = vshrl.u32 %v994, 7
        %v996 = vsub.s32 3, %v995
        %v997 = vrot.slane %v980, %v996
        %v1066 = vunpack.c.l.b16 %v660
        %v1067 = vunpack.c.h.b16 %v660
        %v1068 = vunpack.c.l.b16 %v661
        %v1069 = vunpack.c.h.b16 %v661
        %v1070 = vunpack.c.l.b16 %v662
        %v1071 = vunpack.c.h.b16 %v662
        %v1072 = vunpack.c.l.b16 %v663
        %v1073 = vunpack.c.h.b16 %v663
        %v1074 = vunpack.c.l.b16 %v664
        %v1075 = vunpack.c.h.b16 %v664
        %v1076 = vunpack.c.l.b16 %v665
        %v1077 = vunpack.c.h.b16 %v665
        %v1078 = vunpack.c.l.b16 %v666
        %v1079 = vunpack.c.h.b16 %v666
        %v1080 = vunpack.c.l.b16 %v667
        %v1081 = vunpack.c.h.b16 %v667
        %v1082 = vunpack.c.l.b16 %v668
        %v1083 = vunpack.c.h.b16 %v668
        %v1084 = vunpack.c.l.b16 %v669
        %v1085 = vunpack.c.h.b16 %v669
        %v1086 = vunpack.c.l.b16 %v670
        %v1087 = vunpack.c.h.b16 %v670
        %v1088 = vunpack.c.l.b16 %v671
        %v1089 = vunpack.c.h.b16 %v671
        %v1090 = vunpack.c.l.b16 %v672
        %v1091 = vunpack.c.h.b16 %v672
        %v1092 = vunpack.c.l.b16 %v673
        %v1093 = vunpack.c.h.b16 %v673
        %v1094 = vunpack.c.l.b16 %v674
        %v1095 = vunpack.c.h.b16 %v674
        %v1096 = vunpack.c.l.b16 %v675
        %v1097 = vunpack.c.h.b16 %v675
        %v1098 = vunpack.c.l.b16 %v676
        %v1099 = vunpack.c.h.b16 %v676
        %v1100 = vunpack.c.l.b16 %v677
        %v1101 = vunpack.c.h.b16 %v677
        %v1102 = vunpack.c.l.b16 %v678
        %v1103 = vunpack.c.h.b16 %v678
        %v1104 = vunpack.c.l.b16 %v679
        %v1105 = vunpack.c.h.b16 %v679
        %v1106 = vunpack.c.l.b16 %v680
        %v1107 = vunpack.c.h.b16 %v680
        %v1108 = vunpack.c.l.b16 %v681
        %v1109 = vunpack.c.h.b16 %v681
        %v1110 = vunpack.c.l.b16 %v682
        %v1111 = vunpack.c.h.b16 %v682
        %v1112 = vunpack.c.l.b16 %v683
        %v1113 = vunpack.c.h.b16 %v683
        %v1114 = vunpack.c.l.b16 %v684
        %v1115 = vunpack.c.h.b16 %v684
        %v1116 = vunpack.c.l.b16 %v685
        %v1117 = vunpack.c.h.b16 %v685
        %v1118 = vunpack.c.l.b16 %v686
        %v1119 = vunpack.c.h.b16 %v686
        %v1120 = vunpack.c.l.b16 %v687
        %v1121 = vunpack.c.h.b16 %v687
        %v1122 = vunpack.c.l.b16 %v688
        %v1123 = vunpack.c.h.b16 %v688
        %v1124 = vunpack.c.l.b16 %v689
        %v1125 = vunpack.c.h.b16 %v689
        %v1126 = vunpack.c.l.b16 %v690
        %v1127 = vunpack.c.h.b16 %v690
        %v1128 = vunpack.c.l.b16 %v691
        %v1129 = vunpack.c.h.b16 %v691
        %v1130 = vunpack.c.l.b16 %v692
        %v1131 = vunpack.c.h.b16 %v692
        %v1132 = vunpack.c.l.b16 %v693
        %v1133 = vunpack.c.h.b16 %v693
        %v1134 = vunpack.c.l.b16 %v694
        %v1135 = vunpack.c.h.b16 %v694
        %v1136 = vunpack.c.l.b16 %v695
        %v1137 = vunpack.c.h.b16 %v695
        %v1138 = vunpack.c.l.b16 %v696
        %v1139 = vunpack.c.h.b16 %v696
        %v1140 = vunpack.c.l.b16 %v697
        %v1141 = vunpack.c.h.b16 %v697
        %v1142 = vunpack.c.l.b16 %v698
        %v1143 = vunpack.c.h.b16 %v698
        %v1144 = vunpack.c.l.b16 %v699
        %v1145 = vunpack.c.h.b16 %v699
        %v1146 = vunpack.c.l.b16 %v700
        %v1147 = vunpack.c.h.b16 %v700
        %v1148 = vunpack.c.l.b16 %v701
        %v1149 = vunpack.c.h.b16 %v701
        %v1150 = vunpack.c.l.b16 %v702
        %v1151 = vunpack.c.h.b16 %v702
        %v1152 = vunpack.c.l.b16 %v703
        %v1153 = vunpack.c.h.b16 %v703
        %v1154 = vunpack.c.l.b16 %v704
        %v1155 = vunpack.c.h.b16 %v704
        %v1156 = vunpack.c.l.b16 %v705
        %v1157 = vunpack.c.h.b16 %v705
        %v1158 = vunpack.c.l.b16 %v706
        %v1159 = vunpack.c.h.b16 %v706
        %v1160 = vunpack.c.l.b16 %v707
        %v1161 = vunpack.c.h.b16 %v707
        %v1162 = vunpack.c.l.b16 %v708
        %v1163 = vunpack.c.h.b16 %v708
        %v1164 = vunpack.c.l.b16 %v709
        %v1165 = vunpack.c.h.b16 %v709
        %v1166 = vunpack.c.l.b16 %v710
        %v1167 = vunpack.c.h.b16 %v710
        %v1168 = vunpack.c.l.b16 %v711
        %v1169 = vunpack.c.h.b16 %v711
        %v1170 = vunpack.c.l.b16 %v712
        %v1171 = vunpack.c.h.b16 %v712
        %v1172 = vunpack.c.l.b16 %v713
        %v1173 = vunpack.c.h.b16 %v713
        %v1174 = vunpack.c.l.b16 %v714
        %v1175 = vunpack.c.h.b16 %v714
        %v1176 = vunpack.c.l.b16 %v715
        %v1177 = vunpack.c.h.b16 %v715
        %v1178 = vunpack.c.l.b16 %v716
        %v1179 = vunpack.c.h.b16 %v716
        %v1180 = vunpack.c.l.b16 %v717
        %v1181 = vunpack.c.h.b16 %v717
        %v1182 = vunpack.c.l.b16 %v718
        %v1183 = vunpack.c.h.b16 %v718
        %v1184 = vunpack.c.l.b16 %v719
        %v1185 = vunpack.c.h.b16 %v719
        %v1186 = vunpack.c.l.b16 %v720
        %v1187 = vunpack.c.h.b16 %v720
        %v1188 = vunpack.c.l.b16 %v721
        %v1189 = vunpack.c.h.b16 %v721
        %v1190 = vunpack.c.l.b16 %v722
        %v1191 = vunpack.c.h.b16 %v722
        %v1192 = vunpack.c.l.b16 %v723
        %v1193 = vunpack.c.h.b16 %v723
        %v1194 = vpack.c.b16 %v1074, %v1066
        %v1195 = vpack.c.b16 %v1075, %v1067
        %v1196 = vpack.c.b16 %v1076, %v1068
        %v1197 = vpack.c.b16 %v1077, %v1069
        %v1198 = vpack.c.b16 %v1078, %v1070
        %v1199 = vpack.c.b16 %v1079, %v1071
        %v1200 = vpack.c.b16 %v1080, %v1072
        %v1201 = vpack.c.b16 %v1081, %v1073
        %v1202 = vpack.c.b16 %v1090, %v1082
        %v1203 = vpack.c.b16 %v1091, %v1083
        %v1204 = vpack.c.b16 %v1092, %v1084
        %v1205 = vpack.c.b16 %v1093, %v1085
        %v1206 = vpack.c.b16 %v1094, %v1086
        %v1207 = vpack.c.b16 %v1095, %v1087
        %v1208 = vpack.c.b16 %v1096, %v1088
        %v1209 = vpack.c.b16 %v1097, %v1089
        %v1210 = vpack.c.b16 %v1106, %v1098
        %v1211 = vpack.c.b16 %v1107, %v1099
        %v1212 = vpack.c.b16 %v1108, %v1100
        %v1213 = vpack.c.b16 %v1109, %v1101
        %v1214 = vpack.c.b16 %v1110, %v1102
        %v1215 = vpack.c.b16 %v1111, %v1103
        %v1216 = vpack.c.b16 %v1112, %v1104
        %v1217 = vpack.c.b16 %v1113, %v1105
        %v1218 = vpack.c.b16 %v1122, %v1114
        %v1219 = vpack.c.b16 %v1123, %v1115
        %v1220 = vpack.c.b16 %v1124, %v1116
        %v1221 = vpack.c.b16 %v1125, %v1117
        %v1222 = vpack.c.b16 %v1126, %v1118
        %v1223 = vpack.c.b16 %v1127, %v1119
        %v1224 = vpack.c.b16 %v1128, %v1120
        %v1225 = vpack.c.b16 %v1129, %v1121
        %v1226 = vpack.c.b16 %v1138, %v1130
        %v1227 = vpack.c.b16 %v1139, %v1131
        %v1228 = vpack.c.b16 %v1140, %v1132
        %v1229 = vpack.c.b16 %v1141, %v1133
        %v1230 = vpack.c.b16 %v1142, %v1134
        %v1231 = vpack.c.b16 %v1143, %v1135
        %v1232 = vpack.c.b16 %v1144, %v1136
        %v1233 = vpack.c.b16 %v1145, %v1137
        %v1234 = vpack.c.b16 %v1154, %v1146
        %v1235 = vpack.c.b16 %v1155, %v1147
        %v1236 = vpack.c.b16 %v1156, %v1148
        %v1237 = vpack.c.b16 %v1157, %v1149
        %v1238 = vpack.c.b16 %v1158, %v1150
        %v1239 = vpack.c.b16 %v1159, %v1151
        %v1240 = vpack.c.b16 %v1160, %v1152
        %v1241 = vpack.c.b16 %v1161, %v1153
        %v1242 = vpack.c.b16 %v1170, %v1162
        %v1243 = vpack.c.b16 %v1171, %v1163
        %v1244 = vpack.c.b16 %v1172, %v1164
        %v1245 = vpack.c.b16 %v1173, %v1165
        %v1246 = vpack.c.b16 %v1174, %v1166
        %v1247 = vpack.c.b16 %v1175, %v1167
        %v1248 = vpack.c.b16 %v1176, %v1168
        %v1249 = vpack.c.b16 %v1177, %v1169
        %v1250 = vpack.c.b16 %v1186, %v1178
        %v1251 = vpack.c.b16 %v1187, %v1179
        %v1252 = vpack.c.b16 %v1188, %v1180
        %v1253 = vpack.c.b16 %v1189, %v1181
        %v1254 = vpack.c.b16 %v1190, %v1182
        %v1255 = vpack.c.b16 %v1191, %v1183
        %v1256 = vpack.c.b16 %v1192, %v1184
        %v1257 = vpack.c.b16 %v1193, %v1185
        %v1578 = vunpack.c.l.b16 %v724
        %v1579 = vunpack.c.h.b16 %v724
        %v1580 = vunpack.c.l.b16 %v725
        %v1581 = vunpack.c.h.b16 %v725
        %v1582 = vunpack.c.l.b16 %v726
        %v1583 = vunpack.c.h.b16 %v726
        %v1584 = vunpack.c.l.b16 %v727
        %v1585 = vunpack.c.h.b16 %v727
        %v1586 = vunpack.c.l.b16 %v728
        %v1587 = vunpack.c.h.b16 %v728
        %v1588 = vunpack.c.l.b16 %v729
        %v1589 = vunpack.c.h.b16 %v729
        %v1590 = vunpack.c.l.b16 %v730
        %v1591 = vunpack.c.h.b16 %v730
        %v1592 = vunpack.c.l.b16 %v731
        %v1593 = vunpack.c.h.b16 %v731
        %v1594 = vunpack.c.l.b16 %v732
        %v1595 = vunpack.c.h.b16 %v732
        %v1596 = vunpack.c.l.b16 %v733
        %v1597 = vunpack.c.h.b16 %v733
        %v1598 = vunpack.c.l.b16 %v734
        %v1599 = vunpack.c.h.b16 %v734
        %v1600 = vunpack.c.l.b16 %v735
        %v1601 = vunpack.c.h.b16 %v735
        %v1602 = vunpack.c.l.b16 %v736
        %v1603 = vunpack.c.h.b16 %v736
        %v1604 = vunpack.c.l.b16 %v737
        %v1605 = vunpack.c.h.b16 %v737
        %v1606 = vunpack.c.l.b16 %v738
        %v1607 = vunpack.c.h.b16 %v738
        %v1608 = vunpack.c.l.b16 %v739
        %v1609 = vunpack.c.h.b16 %v739
        %v1610 = vunpack.c.l.b16 %v740
        %v1611 = vunpack.c.h.b16 %v740
        %v1612 = vunpack.c.l.b16 %v741
        %v1613 = vunpack.c.h.b16 %v741
        %v1614 = vunpack.c.l.b16 %v742
        %v1615 = vunpack.c.h.b16 %v742
        %v1616 = vunpack.c.l.b16 %v743
        %v1617 = vunpack.c.h.b16 %v743
        %v1618 = vunpack.c.l.b16 %v744
        %v1619 = vunpack.c.h.b16 %v744
        %v1620 = vunpack.c.l.b16 %v745
        %v1621 = vunpack.c.h.b16 %v745
        %v1622 = vunpack.c.l.b16 %v746
        %v1623 = vunpack.c.h.b16 %v746
        %v1624 = vunpack.c.l.b16 %v747
        %v1625 = vunpack.c.h.b16 %v747
        %v1626 = vunpack.c.l.b16 %v748
        %v1627 = vunpack.c.h.b16 %v748
        %v1628 = vunpack.c.l.b16 %v749
        %v1629 = vunpack.c.h.b16 %v749
        %v1630 = vunpack.c.l.b16 %v750
        %v1631 = vunpack.c.h.b16 %v750
        %v1632 = vunpack.c.l.b16 %v751
        %v1633 = vunpack.c.h.b16 %v751
        %v1634 = vunpack.c.l.b16 %v752
        %v1635 = vunpack.c.h.b16 %v752
        %v1636 = vunpack.c.l.b16 %v753
        %v1637 = vunpack.c.h.b16 %v753
        %v1638 = vunpack.c.l.b16 %v754
        %v1639 = vunpack.c.h.b16 %v754
        %v1640 = vunpack.c.l.b16 %v755
        %v1641 = vunpack.c.h.b16 %v755
        %v1642 = vunpack.c.l.b16 %v756
        %v1643 = vunpack.c.h.b16 %v756
        %v1644 = vunpack.c.l.b16 %v757
        %v1645 = vunpack.c.h.b16 %v757
        %v1646 = vunpack.c.l.b16 %v758
        %v1647 = vunpack.c.h.b16 %v758
        %v1648 = vunpack.c.l.b16 %v759
        %v1649 = vunpack.c.h.b16 %v759
        %v1650 = vunpack.c.l.b16 %v760
        %v1651 = vunpack.c.h.b16 %v760
        %v1652 = vunpack.c.l.b16 %v761
        %v1653 = vunpack.c.h.b16 %v761
        %v1654 = vunpack.c.l.b16 %v762
        %v1655 = vunpack.c.h.b16 %v762
        %v1656 = vunpack.c.l.b16 %v763
        %v1657 = vunpack.c.h.b16 %v763
        %v1658 = vunpack.c.l.b16 %v764
        %v1659 = vunpack.c.h.b16 %v764
        %v1660 = vunpack.c.l.b16 %v765
        %v1661 = vunpack.c.h.b16 %v765
        %v1662 = vunpack.c.l.b16 %v766
        %v1663 = vunpack.c.h.b16 %v766
        %v1664 = vunpack.c.l.b16 %v767
        %v1665 = vunpack.c.h.b16 %v767
        %v1666 = vunpack.c.l.b16 %v768
        %v1667 = vunpack.c.h.b16 %v768
        %v1668 = vunpack.c.l.b16 %v769
        %v1669 = vunpack.c.h.b16 %v769
        %v1670 = vunpack.c.l.b16 %v770
        %v1671 = vunpack.c.h.b16 %v770
        %v1672 = vunpack.c.l.b16 %v771
        %v1673 = vunpack.c.h.b16 %v771
        %v1674 = vunpack.c.l.b16 %v772
        %v1675 = vunpack.c.h.b16 %v772
        %v1676 = vunpack.c.l.b16 %v773
        %v1677 = vunpack.c.h.b16 %v773
        %v1678 = vunpack.c.l.b16 %v774
        %v1679 = vunpack.c.h.b16 %v774
        %v1680 = vunpack.c.l.b16 %v775
        %v1681 = vunpack.c.h.b16 %v775
        %v1682 = vunpack.c.l.b16 %v776
        %v1683 = vunpack.c.h.b16 %v776
        %v1684 = vunpack.c.l.b16 %v777
        %v1685 = vunpack.c.h.b16 %v777
        %v1686 = vunpack.c.l.b16 %v778
        %v1687 = vunpack.c.h.b16 %v778
        %v1688 = vunpack.c.l.b16 %v779
        %v1689 = vunpack.c.h.b16 %v779
        %v1690 = vunpack.c.l.b16 %v780
        %v1691 = vunpack.c.h.b16 %v780
        %v1692 = vunpack.c.l.b16 %v781
        %v1693 = vunpack.c.h.b16 %v781
        %v1694 = vunpack.c.l.b16 %v782
        %v1695 = vunpack.c.h.b16 %v782
        %v1696 = vunpack.c.l.b16 %v783
        %v1697 = vunpack.c.h.b16 %v783
        %v1698 = vunpack.c.l.b16 %v784
        %v1699 = vunpack.c.h.b16 %v784
        %v1700 = vunpack.c.l.b16 %v785
        %v1701 = vunpack.c.h.b16 %v785
        %v1702 = vunpack.c.l.b16 %v786
        %v1703 = vunpack.c.h.b16 %v786
        %v1704 = vunpack.c.l.b16 %v787
        %v1705 = vunpack.c.h.b16 %v787
        %v1706 = vunpack.c.l.b16 %v788
        %v1707 = vunpack.c.h.b16 %v788
        %v1708 = vunpack.c.l.b16 %v789
        %v1709 = vunpack.c.h.b16 %v789
        %v1710 = vunpack.c.l.b16 %v790
        %v1711 = vunpack.c.h.b16 %v790
        %v1712 = vunpack.c.l.b16 %v791
        %v1713 = vunpack.c.h.b16 %v791
        %v1714 = vunpack.c.l.b16 %v792
        %v1715 = vunpack.c.h.b16 %v792
        %v1716 = vunpack.c.l.b16 %v793
        %v1717 = vunpack.c.h.b16 %v793
        %v1718 = vunpack.c.l.b16 %v794
        %v1719 = vunpack.c.h.b16 %v794
        %v1720 = vunpack.c.l.b16 %v795
        %v1721 = vunpack.c.h.b16 %v795
        %v1722 = vunpack.c.l.b16 %v796
        %v1723 = vunpack.c.h.b16 %v796
        %v1724 = vunpack.c.l.b16 %v797
        %v1725 = vunpack.c.h.b16 %v797
        %v1726 = vunpack.c.l.b16 %v798
        %v1727 = vunpack.c.h.b16 %v798
        %v1728 = vunpack.c.l.b16 %v799
        %v1729 = vunpack.c.h.b16 %v799
        %v1730 = vunpack.c.l.b16 %v800
        %v1731 = vunpack.c.h.b16 %v800
        %v1732 = vunpack.c.l.b16 %v801
        %v1733 = vunpack.c.h.b16 %v801
        %v1734 = vunpack.c.l.b16 %v802
        %v1735 = vunpack.c.h.b16 %v802
        %v1736 = vunpack.c.l.b16 %v803
        %v1737 = vunpack.c.h.b16 %v803
        %v1738 = vunpack.c.l.b16 %v804
        %v1739 = vunpack.c.h.b16 %v804
        %v1740 = vunpack.c.l.b16 %v805
        %v1741 = vunpack.c.h.b16 %v805
        %v1742 = vunpack.c.l.b16 %v806
        %v1743 = vunpack.c.h.b16 %v806
        %v1744 = vunpack.c.l.b16 %v807
        %v1745 = vunpack.c.h.b16 %v807
        %v1746 = vunpack.c.l.b16 %v808
        %v1747 = vunpack.c.h.b16 %v808
        %v1748 = vunpack.c.l.b16 %v809
        %v1749 = vunpack.c.h.b16 %v809
        %v1750 = vunpack.c.l.b16 %v810
        %v1751 = vunpack.c.h.b16 %v810
        %v1752 = vunpack.c.l.b16 %v811
        %v1753 = vunpack.c.h.b16 %v811
        %v1754 = vunpack.c.l.b16 %v812
        %v1755 = vunpack.c.h.b16 %v812
        %v1756 = vunpack.c.l.b16 %v813
        %v1757 = vunpack.c.h.b16 %v813
        %v1758 = vunpack.c.l.b16 %v814
        %v1759 = vunpack.c.h.b16 %v814
        %v1760 = vunpack.c.l.b16 %v815
        %v1761 = vunpack.c.h.b16 %v815
        %v1762 = vunpack.c.l.b16 %v816
        %v1763 = vunpack.c.h.b16 %v816
        %v1764 = vunpack.c.l.b16 %v817
        %v1765 = vunpack.c.h.b16 %v817
        %v1766 = vunpack.c.l.b16 %v818
        %v1767 = vunpack.c.h.b16 %v818
        %v1768 = vunpack.c.l.b16 %v819
        %v1769 = vunpack.c.h.b16 %v819
        %v1770 = vunpack.c.l.b16 %v820
        %v1771 = vunpack.c.h.b16 %v820
        %v1772 = vunpack.c.l.b16 %v821
        %v1773 = vunpack.c.h.b16 %v821
        %v1774 = vunpack.c.l.b16 %v822
        %v1775 = vunpack.c.h.b16 %v822
        %v1776 = vunpack.c.l.b16 %v823
        %v1777 = vunpack.c.h.b16 %v823
        %v1778 = vunpack.c.l.b16 %v824
        %v1779 = vunpack.c.h.b16 %v824
        %v1780 = vunpack.c.l.b16 %v825
        %v1781 = vunpack.c.h.b16 %v825
        %v1782 = vunpack.c.l.b16 %v826
        %v1783 = vunpack.c.h.b16 %v826
        %v1784 = vunpack.c.l.b16 %v827
        %v1785 = vunpack.c.h.b16 %v827
        %v1786 = vunpack.c.l.b16 %v828
        %v1787 = vunpack.c.h.b16 %v828
        %v1788 = vunpack.c.l.b16 %v829
        %v1789 = vunpack.c.h.b16 %v829
        %v1790 = vunpack.c.l.b16 %v830
        %v1791 = vunpack.c.h.b16 %v830
        %v1792 = vunpack.c.l.b16 %v831
        %v1793 = vunpack.c.h.b16 %v831
        %v1794 = vunpack.c.l.b16 %v832
        %v1795 = vunpack.c.h.b16 %v832
        %v1796 = vunpack.c.l.b16 %v833
        %v1797 = vunpack.c.h.b16 %v833
        %v1798 = vunpack.c.l.b16 %v834
        %v1799 = vunpack.c.h.b16 %v834
        %v1800 = vunpack.c.l.b16 %v835
        %v1801 = vunpack.c.h.b16 %v835
        %v1802 = vunpack.c.l.b16 %v836
        %v1803 = vunpack.c.h.b16 %v836
        %v1804 = vunpack.c.l.b16 %v837
        %v1805 = vunpack.c.h.b16 %v837
        %v1806 = vunpack.c.l.b16 %v838
        %v1807 = vunpack.c.h.b16 %v838
        %v1808 = vunpack.c.l.b16 %v839
        %v1809 = vunpack.c.h.b16 %v839
        %v1810 = vunpack.c.l.b16 %v840
        %v1811 = vunpack.c.h.b16 %v840
        %v1812 = vunpack.c.l.b16 %v841
        %v1813 = vunpack.c.h.b16 %v841
        %v1814 = vunpack.c.l.b16 %v842
        %v1815 = vunpack.c.h.b16 %v842
        %v1816 = vunpack.c.l.b16 %v843
        %v1817 = vunpack.c.h.b16 %v843
        %v1818 = vunpack.c.l.b16 %v844
        %v1819 = vunpack.c.h.b16 %v844
        %v1820 = vunpack.c.l.b16 %v845
        %v1821 = vunpack.c.h.b16 %v845
        %v1822 = vunpack.c.l.b16 %v846
        %v1823 = vunpack.c.h.b16 %v846
        %v1824 = vunpack.c.l.b16 %v847
        %v1825 = vunpack.c.h.b16 %v847
        %v1826 = vunpack.c.l.b16 %v848
        %v1827 = vunpack.c.h.b16 %v848
        %v1828 = vunpack.c.l.b16 %v849
        %v1829 = vunpack.c.h.b16 %v849
        %v1830 = vunpack.c.l.b16 %v850
        %v1831 = vunpack.c.h.b16 %v850
        %v1832 = vunpack.c.l.b16 %v851
        %v1833 = vunpack.c.h.b16 %v851
        %v1834 = vunpack.c.l.b16 %v852
        %v1835 = vunpack.c.h.b16 %v852
        %v1836 = vunpack.c.l.b16 %v853
        %v1837 = vunpack.c.h.b16 %v853
        %v1838 = vunpack.c.l.b16 %v854
        %v1839 = vunpack.c.h.b16 %v854
        %v1840 = vunpack.c.l.b16 %v855
        %v1841 = vunpack.c.h.b16 %v855
        %v1842 = vunpack.c.l.b16 %v856
        %v1843 = vunpack.c.h.b16 %v856
        %v1844 = vunpack.c.l.b16 %v857
        %v1845 = vunpack.c.h.b16 %v857
        %v1846 = vunpack.c.l.b16 %v858
        %v1847 = vunpack.c.h.b16 %v858
        %v1848 = vunpack.c.l.b16 %v859
        %v1849 = vunpack.c.h.b16 %v859
        %v1850 = vunpack.c.l.b16 %v860
        %v1851 = vunpack.c.h.b16 %v860
        %v1852 = vunpack.c.l.b16 %v861
        %v1853 = vunpack.c.h.b16 %v861
        %v1854 = vunpack.c.l.b16 %v862
        %v1855 = vunpack.c.h.b16 %v862
        %v1856 = vunpack.c.l.b16 %v863
        %v1857 = vunpack.c.h.b16 %v863
        %v1858 = vunpack.c.l.b16 %v864
        %v1859 = vunpack.c.h.b16 %v864
        %v1860 = vunpack.c.l.b16 %v865
        %v1861 = vunpack.c.h.b16 %v865
        %v1862 = vunpack.c.l.b16 %v866
        %v1863 = vunpack.c.h.b16 %v866
        %v1864 = vunpack.c.l.b16 %v867
        %v1865 = vunpack.c.h.b16 %v867
        %v1866 = vunpack.c.l.b16 %v868
        %v1867 = vunpack.c.h.b16 %v868
        %v1868 = vunpack.c.l.b16 %v869
        %v1869 = vunpack.c.h.b16 %v869
        %v1870 = vunpack.c.l.b16 %v870
        %v1871 = vunpack.c.h.b16 %v870
        %v1872 = vunpack.c.l.b16 %v871
        %v1873 = vunpack.c.h.b16 %v871
        %v1874 = vunpack.c.l.b16 %v872
        %v1875 = vunpack.c.h.b16 %v872
        %v1876 = vunpack.c.l.b16 %v873
        %v1877 = vunpack.c.h.b16 %v873
        %v1878 = vunpack.c.l.b16 %v874
        %v1879 = vunpack.c.h.b16 %v874
        %v1880 = vunpack.c.l.b16 %v875
        %v1881 = vunpack.c.h.b16 %v875
        %v1882 = vunpack.c.l.b16 %v876
        %v1883 = vunpack.c.h.b16 %v876
        %v1884 = vunpack.c.l.b16 %v877
        %v1885 = vunpack.c.h.b16 %v877
        %v1886 = vunpack.c.l.b16 %v878
        %v1887 = vunpack.c.h.b16 %v878
        %v1888 = vunpack.c.l.b16 %v879
        %v1889 = vunpack.c.h.b16 %v879
        %v1890 = vunpack.c.l.b16 %v880
        %v1891 = vunpack.c.h.b16 %v880
        %v1892 = vunpack.c.l.b16 %v881
        %v1893 = vunpack.c.h.b16 %v881
        %v1894 = vunpack.c.l.b16 %v882
        %v1895 = vunpack.c.h.b16 %v882
        %v1896 = vunpack.c.l.b16 %v883
        %v1897 = vunpack.c.h.b16 %v883
        %v1898 = vunpack.c.l.b16 %v884
        %v1899 = vunpack.c.h.b16 %v884
        %v1900 = vunpack.c.l.b16 %v885
        %v1901 = vunpack.c.h.b16 %v885
        %v1902 = vunpack.c.l.b16 %v886
        %v1903 = vunpack.c.h.b16 %v886
        %v1904 = vunpack.c.l.b16 %v887
        %v1905 = vunpack.c.h.b16 %v887
        %v1906 = vunpack.c.l.b16 %v888
        %v1907 = vunpack.c.h.b16 %v888
        %v1908 = vunpack.c.l.b16 %v889
        %v1909 = vunpack.c.h.b16 %v889
        %v1910 = vunpack.c.l.b16 %v890
        %v1911 = vunpack.c.h.b16 %v890
        %v1912 = vunpack.c.l.b16 %v891
        %v1913 = vunpack.c.h.b16 %v891
        %v1914 = vunpack.c.l.b16 %v892
        %v1915 = vunpack.c.h.b16 %v892
        %v1916 = vunpack.c.l.b16 %v893
        %v1917 = vunpack.c.h.b16 %v893
        %v1918 = vunpack.c.l.b16 %v894
        %v1919 = vunpack.c.h.b16 %v894
        %v1920 = vunpack.c.l.b16 %v895
        %v1921 = vunpack.c.h.b16 %v895
        %v1922 = vunpack.c.l.b16 %v896
        %v1923 = vunpack.c.h.b16 %v896
        %v1924 = vunpack.c.l.b16 %v897
        %v1925 = vunpack.c.h.b16 %v897
        %v1926 = vunpack.c.l.b16 %v898
        %v1927 = vunpack.c.h.b16 %v898
        %v1928 = vunpack.c.l.b16 %v899
        %v1929 = vunpack.c.h.b16 %v899
        %v1930 = vunpack.c.l.b16 %v900
        %v1931 = vunpack.c.h.b16 %v900
        %v1932 = vunpack.c.l.b16 %v901
        %v1933 = vunpack.c.h.b16 %v901
        %v1934 = vunpack.c.l.b16 %v902
        %v1935 = vunpack.c.h.b16 %v902
        %v1936 = vunpack.c.l.b16 %v903
        %v1937 = vunpack.c.h.b16 %v903
        %v1938 = vunpack.c.l.b16 %v904
        %v1939 = vunpack.c.h.b16 %v904
        %v1940 = vunpack.c.l.b16 %v905
        %v1941 = vunpack.c.h.b16 %v905
        %v1942 = vunpack.c.l.b16 %v906
        %v1943 = vunpack.c.h.b16 %v906
        %v1944 = vunpack.c.l.b16 %v907
        %v1945 = vunpack.c.h.b16 %v907
        %v1946 = vunpack.c.l.b16 %v908
        %v1947 = vunpack.c.h.b16 %v908
        %v1948 = vunpack.c.l.b16 %v909
        %v1949 = vunpack.c.h.b16 %v909
        %v1950 = vunpack.c.l.b16 %v910
        %v1951 = vunpack.c.h.b16 %v910
        %v1952 = vunpack.c.l.b16 %v911
        %v1953 = vunpack.c.h.b16 %v911
        %v1954 = vunpack.c.l.b16 %v912
        %v1955 = vunpack.c.h.b16 %v912
        %v1956 = vunpack.c.l.b16 %v913
        %v1957 = vunpack.c.h.b16 %v913
        %v1958 = vunpack.c.l.b16 %v914
        %v1959 = vunpack.c.h.b16 %v914
        %v1960 = vunpack.c.l.b16 %v915
        %v1961 = vunpack.c.h.b16 %v915
        %v1962 = vunpack.c.l.b16 %v916
        %v1963 = vunpack.c.h.b16 %v916
        %v1964 = vunpack.c.l.b16 %v917
        %v1965 = vunpack.c.h.b16 %v917
        %v1966 = vunpack.c.l.b16 %v918
        %v1967 = vunpack.c.h.b16 %v918
        %v1968 = vunpack.c.l.b16 %v919
        %v1969 = vunpack.c.h.b16 %v919
        %v1970 = vunpack.c.l.b16 %v920
        %v1971 = vunpack.c.h.b16 %v920
        %v1972 = vunpack.c.l.b16 %v921
        %v1973 = vunpack.c.h.b16 %v921
        %v1974 = vunpack.c.l.b16 %v922
        %v1975 = vunpack.c.h.b16 %v922
        %v1976 = vunpack.c.l.b16 %v923
        %v1977 = vunpack.c.h.b16 %v923
        %v1978 = vunpack.c.l.b16 %v924
        %v1979 = vunpack.c.h.b16 %v924
        %v1980 = vunpack.c.l.b16 %v925
        %v1981 = vunpack.c.h.b16 %v925
        %v1982 = vunpack.c.l.b16 %v926
        %v1983 = vunpack.c.h.b16 %v926
        %v1984 = vunpack.c.l.b16 %v927
        %v1985 = vunpack.c.h.b16 %v927
        %v1986 = vunpack.c.l.b16 %v928
        %v1987 = vunpack.c.h.b16 %v928
        %v1988 = vunpack.c.l.b16 %v929
        %v1989 = vunpack.c.h.b16 %v929
        %v1990 = vunpack.c.l.b16 %v930
        %v1991 = vunpack.c.h.b16 %v930
        %v1992 = vunpack.c.l.b16 %v931
        %v1993 = vunpack.c.h.b16 %v931
        %v1994 = vunpack.c.l.b16 %v932
        %v1995 = vunpack.c.h.b16 %v932
        %v1996 = vunpack.c.l.b16 %v933
        %v1997 = vunpack.c.h.b16 %v933
        %v1998 = vunpack.c.l.b16 %v934
        %v1999 = vunpack.c.h.b16 %v934
        %v2000 = vunpack.c.l.b16 %v935
        %v2001 = vunpack.c.h.b16 %v935
        %v2002 = vunpack.c.l.b16 %v936
        %v2003 = vunpack.c.h.b16 %v936
        %v2004 = vunpack.c.l.b16 %v937
        %v2005 = vunpack.c.h.b16 %v937
        %v2006 = vunpack.c.l.b16 %v938
        %v2007 = vunpack.c.h.b16 %v938
        %v2008 = vunpack.c.l.b16 %v939
        %v2009 = vunpack.c.h.b16 %v939
        %v2010 = vunpack.c.l.b16 %v940
        %v2011 = vunpack.c.h.b16 %v940
        %v2012 = vunpack.c.l.b16 %v941
        %v2013 = vunpack.c.h.b16 %v941
        %v2014 = vunpack.c.l.b16 %v942
        %v2015 = vunpack.c.h.b16 %v942
        %v2016 = vunpack.c.l.b16 %v943
        %v2017 = vunpack.c.h.b16 %v943
        %v2018 = vunpack.c.l.b16 %v944
        %v2019 = vunpack.c.h.b16 %v944
        %v2020 = vunpack.c.l.b16 %v945
        %v2021 = vunpack.c.h.b16 %v945
        %v2022 = vunpack.c.l.b16 %v946
        %v2023 = vunpack.c.h.b16 %v946
        %v2024 = vunpack.c.l.b16 %v947
        %v2025 = vunpack.c.h.b16 %v947
        %v2026 = vunpack.c.l.b16 %v948
        %v2027 = vunpack.c.h.b16 %v948
        %v2028 = vunpack.c.l.b16 %v949
        %v2029 = vunpack.c.h.b16 %v949
        %v2030 = vunpack.c.l.b16 %v950
        %v2031 = vunpack.c.h.b16 %v950
        %v2032 = vunpack.c.l.b16 %v951
        %v2033 = vunpack.c.h.b16 %v951
        %v2034 = vunpack.c.l.b16 %v952
        %v2035 = vunpack.c.h.b16 %v952
        %v2036 = vunpack.c.l.b16 %v953
        %v2037 = vunpack.c.h.b16 %v953
        %v2038 = vunpack.c.l.b16 %v954
        %v2039 = vunpack.c.h.b16 %v954
        %v2040 = vunpack.c.l.b16 %v955
        %v2041 = vunpack.c.h.b16 %v955
        %v2042 = vunpack.c.l.b16 %v956
        %v2043 = vunpack.c.h.b16 %v956
        %v2044 = vunpack.c.l.b16 %v957
        %v2045 = vunpack.c.h.b16 %v957
        %v2046 = vunpack.c.l.b16 %v958
        %v2047 = vunpack.c.h.b16 %v958
        %v2048 = vunpack.c.l.b16 %v959
        %v2049 = vunpack.c.h.b16 %v959
        %v2050 = vunpack.c.l.b16 %v960
        %v2051 = vunpack.c.h.b16 %v960
        %v2052 = vunpack.c.l.b16 %v961
        %v2053 = vunpack.c.h.b16 %v961
        %v2054 = vunpack.c.l.b16 %v962
        %v2055 = vunpack.c.h.b16 %v962
        %v2056 = vunpack.c.l.b16 %v963
        %v2057 = vunpack.c.h.b16 %v963
        %v2058 = vunpack.c.l.b16 %v964
        %v2059 = vunpack.c.h.b16 %v964
        %v2060 = vunpack.c.l.b16 %v965
        %v2061 = vunpack.c.h.b16 %v965
        %v2062 = vunpack.c.l.b16 %v966
        %v2063 = vunpack.c.h.b16 %v966
        %v2064 = vunpack.c.l.b16 %v967
        %v2065 = vunpack.c.h.b16 %v967
        %v2066 = vunpack.c.l.b16 %v968
        %v2067 = vunpack.c.h.b16 %v968
        %v2068 = vunpack.c.l.b16 %v969
        %v2069 = vunpack.c.h.b16 %v969
        %v2070 = vunpack.c.l.b16 %v970
        %v2071 = vunpack.c.h.b16 %v970
        %v2072 = vunpack.c.l.b16 %v971
        %v2073 = vunpack.c.h.b16 %v971
        %v2074 = vunpack.c.l.b16 %v972
        %v2075 = vunpack.c.h.b16 %v972
        %v2076 = vunpack.c.l.b16 %v973
        %v2077 = vunpack.c.h.b16 %v973
        %v2078 = vunpack.c.l.b16 %v974
        %v2079 = vunpack.c.h.b16 %v974
        %v2080 = vunpack.c.l.b16 %v975
        %v2081 = vunpack.c.h.b16 %v975
        %v2082 = vunpack.c.l.b16 %v976
        %v2083 = vunpack.c.h.b16 %v976
        %v2084 = vunpack.c.l.b16 %v977
        %v2085 = vunpack.c.h.b16 %v977
        %v2086 = vunpack.c.l.b16 %v978
        %v2087 = vunpack.c.h.b16 %v978
        %v2088 = vunpack.c.l.b16 %v979
        %v2089 = vunpack.c.h.b16 %v979
        %v2090 = vpack.c.b16 %v1582, %v1578
        %v2091 = vpack.c.b16 %v1583, %v1579
        %v2092 = vpack.c.b16 %v1584, %v1580
        %v2093 = vpack.c.b16 %v1585, %v1581
        %v2094 = vpack.c.b16 %v1590, %v1586
        %v2095 = vpack.c.b16 %v1591, %v1587
        %v2096 = vpack.c.b16 %v1592, %v1588
        %v2097 = vpack.c.b16 %v1593, %v1589
        %v2098 = vpack.c.b16 %v1598, %v1594
        %v2099 = vpack.c.b16 %v1599, %v1595
        %v2100 = vpack.c.b16 %v1600, %v1596
        %v2101 = vpack.c.b16 %v1601, %v1597
        %v2102 = vpack.c.b16 %v1606, %v1602
        %v2103 = vpack.c.b16 %v1607, %v1603
        %v2104 = vpack.c.b16 %v1608, %v1604
        %v2105 = vpack.c.b16 %v1609, %v1605
        %v2106 = vpack.c.b16 %v1614, %v1610
        %v2107 = vpack.c.b16 %v1615, %v1611
        %v2108 = vpack.c.b16 %v1616, %v1612
        %v2109 = vpack.c.b16 %v1617, %v1613
        %v2110 = vpack.c.b16 %v1622, %v1618
        %v2111 = vpack.c.b16 %v1623, %v1619
        %v2112 = vpack.c.b16 %v1624, %v1620
        %v2113 = vpack.c.b16 %v1625, %v1621
        %v2114 = vpack.c.b16 %v1630, %v1626
        %v2115 = vpack.c.b16 %v1631, %v1627
        %v2116 = vpack.c.b16 %v1632, %v1628
        %v2117 = vpack.c.b16 %v1633, %v1629
        %v2118 = vpack.c.b16 %v1638, %v1634
        %v2119 = vpack.c.b16 %v1639, %v1635
        %v2120 = vpack.c.b16 %v1640, %v1636
        %v2121 = vpack.c.b16 %v1641, %v1637
        %v2122 = vpack.c.b16 %v1646, %v1642
        %v2123 = vpack.c.b16 %v1647, %v1643
        %v2124 = vpack.c.b16 %v1648, %v1644
        %v2125 = vpack.c.b16 %v1649, %v1645
        %v2126 = vpack.c.b16 %v1654, %v1650
        %v2127 = vpack.c.b16 %v1655, %v1651
        %v2128 = vpack.c.b16 %v1656, %v1652
        %v2129 = vpack.c.b16 %v1657, %v1653
        %v2130 = vpack.c.b16 %v1662, %v1658
        %v2131 = vpack.c.b16 %v1663, %v1659
        %v2132 = vpack.c.b16 %v1664, %v1660
        %v2133 = vpack.c.b16 %v1665, %v1661
        %v2134 = vpack.c.b16 %v1670, %v1666
        %v2135 = vpack.c.b16 %v1671, %v1667
        %v2136 = vpack.c.b16 %v1672, %v1668
        %v2137 = vpack.c.b16 %v1673, %v1669
        %v2138 = vpack.c.b16 %v1678, %v1674
        %v2139 = vpack.c.b16 %v1679, %v1675
        %v2140 = vpack.c.b16 %v1680, %v1676
        %v2141 = vpack.c.b16 %v1681, %v1677
        %v2142 = vpack.c.b16 %v1686, %v1682
        %v2143 = vpack.c.b16 %v1687, %v1683
        %v2144 = vpack.c.b16 %v1688, %v1684
        %v2145 = vpack.c.b16 %v1689, %v1685
        %v2146 = vpack.c.b16 %v1694, %v1690
        %v2147 = vpack.c.b16 %v1695, %v1691
        %v2148 = vpack.c.b16 %v1696, %v1692
        %v2149 = vpack.c.b16 %v1697, %v1693
        %v2150 = vpack.c.b16 %v1702, %v1698
        %v2151 = vpack.c.b16 %v1703, %v1699
        %v2152 = vpack.c.b16 %v1704, %v1700
        %v2153 = vpack.c.b16 %v1705, %v1701
        %v2154 = vpack.c.b16 %v1710, %v1706
        %v2155 = vpack.c.b16 %v1711, %v1707
        %v2156 = vpack.c.b16 %v1712, %v1708
        %v2157 = vpack.c.b16 %v1713, %v1709
        %v2158 = vpack.c.b16 %v1718, %v1714
        %v2159 = vpack.c.b16 %v1719, %v1715
        %v2160 = vpack.c.b16 %v1720, %v1716
        %v2161 = vpack.c.b16 %v1721, %v1717
        %v2162 = vpack.c.b16 %v1726, %v1722
        %v2163 = vpack.c.b16 %v1727, %v1723
        %v2164 = vpack.c.b16 %v1728, %v1724
        %v2165 = vpack.c.b16 %v1729, %v1725
        %v2166 = vpack.c.b16 %v1734, %v1730
        %v2167 = vpack.c.b16 %v1735, %v1731
        %v2168 = vpack.c.b16 %v1736, %v1732
        %v2169 = vpack.c.b16 %v1737, %v1733
        %v2170 = vpack.c.b16 %v1742, %v1738
        %v2171 = vpack.c.b16 %v1743, %v1739
        %v2172 = vpack.c.b16 %v1744, %v1740
        %v2173 = vpack.c.b16 %v1745, %v1741
        %v2174 = vpack.c.b16 %v1750, %v1746
        %v2175 = vpack.c.b16 %v1751, %v1747
        %v2176 = vpack.c.b16 %v1752, %v1748
        %v2177 = vpack.c.b16 %v1753, %v1749
        %v2178 = vpack.c.b16 %v1758, %v1754
        %v2179 = vpack.c.b16 %v1759, %v1755
        %v2180 = vpack.c.b16 %v1760, %v1756
        %v2181 = vpack.c.b16 %v1761, %v1757
        %v2182 = vpack.c.b16 %v1766, %v1762
        %v2183 = vpack.c.b16 %v1767, %v1763
        %v2184 = vpack.c.b16 %v1768, %v1764
        %v2185 = vpack.c.b16 %v1769, %v1765
        %v2186 = vpack.c.b16 %v1774, %v1770
        %v2187 = vpack.c.b16 %v1775, %v1771
        %v2188 = vpack.c.b16 %v1776, %v1772
        %v2189 = vpack.c.b16 %v1777, %v1773
        %v2190 = vpack.c.b16 %v1782, %v1778
        %v2191 = vpack.c.b16 %v1783, %v1779
        %v2192 = vpack.c.b16 %v1784, %v1780
        %v2193 = vpack.c.b16 %v1785, %v1781
        %v2194 = vpack.c.b16 %v1790, %v1786
        %v2195 = vpack.c.b16 %v1791, %v1787
        %v2196 = vpack.c.b16 %v1792, %v1788
        %v2197 = vpack.c.b16 %v1793, %v1789
        %v2198 = vpack.c.b16 %v1798, %v1794
        %v2199 = vpack.c.b16 %v1799, %v1795
        %v2200 = vpack.c.b16 %v1800, %v1796
        %v2201 = vpack.c.b16 %v1801, %v1797
        %v2202 = vpack.c.b16 %v1806, %v1802
        %v2203 = vpack.c.b16 %v1807, %v1803
        %v2204 = vpack.c.b16 %v1808, %v1804
        %v2205 = vpack.c.b16 %v1809, %v1805
        %v2206 = vpack.c.b16 %v1814, %v1810
        %v2207 = vpack.c.b16 %v1815, %v1811
        %v2208 = vpack.c.b16 %v1816, %v1812
        %v2209 = vpack.c.b16 %v1817, %v1813
        %v2210 = vpack.c.b16 %v1822, %v1818
        %v2211 = vpack.c.b16 %v1823, %v1819
        %v2212 = vpack.c.b16 %v1824, %v1820
        %v2213 = vpack.c.b16 %v1825, %v1821
        %v2214 = vpack.c.b16 %v1830, %v1826
        %v2215 = vpack.c.b16 %v1831, %v1827
        %v2216 = vpack.c.b16 %v1832, %v1828
        %v2217 = vpack.c.b16 %v1833, %v1829
        %v2218 = vpack.c.b16 %v1838, %v1834
        %v2219 = vpack.c.b16 %v1839, %v1835
        %v2220 = vpack.c.b16 %v1840, %v1836
        %v2221 = vpack.c.b16 %v1841, %v1837
        %v2222 = vpack.c.b16 %v1846, %v1842
        %v2223 = vpack.c.b16 %v1847, %v1843
        %v2224 = vpack.c.b16 %v1848, %v1844
        %v2225 = vpack.c.b16 %v1849, %v1845
        %v2226 = vpack.c.b16 %v1854, %v1850
        %v2227 = vpack.c.b16 %v1855, %v1851
        %v2228 = vpack.c.b16 %v1856, %v1852
        %v2229 = vpack.c.b16 %v1857, %v1853
        %v2230 = vpack.c.b16 %v1862, %v1858
        %v2231 = vpack.c.b16 %v1863, %v1859
        %v2232 = vpack.c.b16 %v1864, %v1860
        %v2233 = vpack.c.b16 %v1865, %v1861
        %v2234 = vpack.c.b16 %v1870, %v1866
        %v2235 = vpack.c.b16 %v1871, %v1867
        %v2236 = vpack.c.b16 %v1872, %v1868
        %v2237 = vpack.c.b16 %v1873, %v1869
        %v2238 = vpack.c.b16 %v1878, %v1874
        %v2239 = vpack.c.b16 %v1879, %v1875
        %v2240 = vpack.c.b16 %v1880, %v1876
        %v2241 = vpack.c.b16 %v1881, %v1877
        %v2242 = vpack.c.b16 %v1886, %v1882
        %v2243 = vpack.c.b16 %v1887, %v1883
        %v2244 = vpack.c.b16 %v1888, %v1884
        %v2245 = vpack.c.b16 %v1889, %v1885
        %v2246 = vpack.c.b16 %v1894, %v1890
        %v2247 = vpack.c.b16 %v1895, %v1891
        %v2248 = vpack.c.b16 %v1896, %v1892
        %v2249 = vpack.c.b16 %v1897, %v1893
        %v2250 = vpack.c.b16 %v1902, %v1898
        %v2251 = vpack.c.b16 %v1903, %v1899
        %v2252 = vpack.c.b16 %v1904, %v1900
        %v2253 = vpack.c.b16 %v1905, %v1901
        %v2254 = vpack.c.b16 %v1910, %v1906
        %v2255 = vpack.c.b16 %v1911, %v1907
        %v2256 = vpack.c.b16 %v1912, %v1908
        %v2257 = vpack.c.b16 %v1913, %v1909
        %v2258 = vpack.c.b16 %v1918, %v1914
        %v2259 = vpack.c.b16 %v1919, %v1915
        %v2260 = vpack.c.b16 %v1920, %v1916
        %v2261 = vpack.c.b16 %v1921, %v1917
        %v2262 = vpack.c.b16 %v1926, %v1922
        %v2263 = vpack.c.b16 %v1927, %v1923
        %v2264 = vpack.c.b16 %v1928, %v1924
        %v2265 = vpack.c.b16 %v1929, %v1925
        %v2266 = vpack.c.b16 %v1934, %v1930
        %v2267 = vpack.c.b16 %v1935, %v1931
        %v2268 = vpack.c.b16 %v1936, %v1932
        %v2269 = vpack.c.b16 %v1937, %v1933
        %v2270 = vpack.c.b16 %v1942, %v1938
        %v2271 = vpack.c.b16 %v1943, %v1939
        %v2272 = vpack.c.b16 %v1944, %v1940
        %v2273 = vpack.c.b16 %v1945, %v1941
        %v2274 = vpack.c.b16 %v1950, %v1946
        %v2275 = vpack.c.b16 %v1951, %v1947
        %v2276 = vpack.c.b16 %v1952, %v1948
        %v2277 = vpack.c.b16 %v1953, %v1949
        %v2278 = vpack.c.b16 %v1958, %v1954
        %v2279 = vpack.c.b16 %v1959, %v1955
        %v2280 = vpack.c.b16 %v1960, %v1956
        %v2281 = vpack.c.b16 %v1961, %v1957
        %v2282 = vpack.c.b16 %v1966, %v1962
        %v2283 = vpack.c.b16 %v1967, %v1963
        %v2284 = vpack.c.b16 %v1968, %v1964
        %v2285 = vpack.c.b16 %v1969, %v1965
        %v2286 = vpack.c.b16 %v1974, %v1970
        %v2287 = vpack.c.b16 %v1975, %v1971
        %v2288 = vpack.c.b16 %v1976, %v1972
        %v2289 = vpack.c.b16 %v1977, %v1973
        %v2290 = vpack.c.b16 %v1982, %v1978
        %v2291 = vpack.c.b16 %v1983, %v1979
        %v2292 = vpack.c.b16 %v1984, %v1980
        %v2293 = vpack.c.b16 %v1985, %v1981
        %v2294 = vpack.c.b16 %v1990, %v1986
        %v2295 = vpack.c.b16 %v1991, %v1987
        %v2296 = vpack.c.b16 %v1992, %v1988
        %v2297 = vpack.c.b16 %v1993, %v1989
        %v2298 = vpack.c.b16 %v1998, %v1994
        %v2299 = vpack.c.b16 %v1999, %v1995
        %v2300 = vpack.c.b16 %v2000, %v1996
        %v2301 = vpack.c.b16 %v2001, %v1997
        %v2302 = vpack.c.b16 %v2006, %v2002
        %v2303 = vpack.c.b16 %v2007, %v2003
        %v2304 = vpack.c.b16 %v2008, %v2004
        %v2305 = vpack.c.b16 %v2009, %v2005
        %v2306 = vpack.c.b16 %v2014, %v2010
        %v2307 = vpack.c.b16 %v2015, %v2011
        %v2308 = vpack.c.b16 %v2016, %v2012
        %v2309 = vpack.c.b16 %v2017, %v2013
        %v2310 = vpack.c.b16 %v2022, %v2018
        %v2311 = vpack.c.b16 %v2023, %v2019
        %v2312 = vpack.c.b16 %v2024, %v2020
        %v2313 = vpack.c.b16 %v2025, %v2021
        %v2314 = vpack.c.b16 %v2030, %v2026
        %v2315 = vpack.c.b16 %v2031, %v2027
        %v2316 = vpack.c.b16 %v2032, %v2028
        %v2317 = vpack.c.b16 %v2033, %v2029
        %v2318 = vpack.c.b16 %v2038, %v2034
        %v2319 = vpack.c.b16 %v2039, %v2035
        %v2320 = vpack.c.b16 %v2040, %v2036
        %v2321 = vpack.c.b16 %v2041, %v2037
        %v2322 = vpack.c.b16 %v2046, %v2042
        %v2323 = vpack.c.b16 %v2047, %v2043
        %v2324 = vpack.c.b16 %v2048, %v2044
        %v2325 = vpack.c.b16 %v2049, %v2045
        %v2326 = vpack.c.b16 %v2054, %v2050
        %v2327 = vpack.c.b16 %v2055, %v2051
        %v2328 = vpack.c.b16 %v2056, %v2052
        %v2329 = vpack.c.b16 %v2057, %v2053
        %v2330 = vpack.c.b16 %v2062, %v2058
        %v2331 = vpack.c.b16 %v2063, %v2059
        %v2332 = vpack.c.b16 %v2064, %v2060
        %v2333 = vpack.c.b16 %v2065, %v2061
        %v2334 = vpack.c.b16 %v2070, %v2066
        %v2335 = vpack.c.b16 %v2071, %v2067
        %v2336 = vpack.c.b16 %v2072, %v2068
        %v2337 = vpack.c.b16 %v2073, %v2069
        %v2338 = vpack.c.b16 %v2078, %v2074
        %v2339 = vpack.c.b16 %v2079, %v2075
        %v2340 = vpack.c.b16 %v2080, %v2076
        %v2341 = vpack.c.b16 %v2081, %v2077
        %v2342 = vpack.c.b16 %v2086, %v2082
        %v2343 = vpack.c.b16 %v2087, %v2083
        %v2344 = vpack.c.b16 %v2088, %v2084
        %v2345 = vpack.c.b16 %v2089, %v2085
        %2602 = vmatprep.subr.bf16.mxu0 %v2091
        %2603 = vmatpush1.bf16.msra.mxu0 %v2090
        %2604 = vmatprep.subr.bf16.mxu0 %v2095
        %2605 = vmatpush1.bf16.msra.mxu0 %v2094
        %2606 = vmatprep.subr.bf16.mxu0 %v2099
        %2607 = vmatpush1.bf16.msra.mxu0 %v2098
        %2608 = vmatprep.subr.bf16.mxu0 %v2103
        %2609 = vmatpush1.bf16.msra.mxu0 %v2102
        %2610 = vmatprep.subr.bf16.mxu0 %v2107
        %2611 = vmatpush1.bf16.msra.mxu0 %v2106
        %2612 = vmatprep.subr.bf16.mxu0 %v2111
        %2613 = vmatpush1.bf16.msra.mxu0 %v2110
        %2614 = vmatprep.subr.bf16.mxu0 %v2115
        %2615 = vmatpush1.bf16.msra.mxu0 %v2114
        %2616 = vmatprep.subr.bf16.mxu0 %v2119
        %2617 = vmatpush1.bf16.msra.mxu0 %v2118
        %2618 = vmatprep.subr.bf16.mxu0 %v2123
        %2619 = vmatpush1.bf16.msra.mxu0 %v2122
        %2620 = vmatprep.subr.bf16.mxu0 %v2127
        %2621 = vmatpush1.bf16.msra.mxu0 %v2126
        %2622 = vmatprep.subr.bf16.mxu0 %v2131
        %2623 = vmatpush1.bf16.msra.mxu0 %v2130
        %2624 = vmatprep.subr.bf16.mxu0 %v2135
        %2625 = vmatpush1.bf16.msra.mxu0 %v2134
        %2626 = vmatprep.subr.bf16.mxu0 %v2139
        %2627 = vmatpush1.bf16.msra.mxu0 %v2138
        %2628 = vmatprep.subr.bf16.mxu0 %v2143
        %2629 = vmatpush1.bf16.msra.mxu0 %v2142
        %2630 = vmatprep.subr.bf16.mxu0 %v2147
        %2631 = vmatpush1.bf16.msra.mxu0 %v2146
        %2632 = vmatprep.subr.bf16.mxu0 %v2151
        %2633 = vmatpush1.bf16.msra.mxu0 %v2150
        %2634 = vmatprep.mubr.bf16.mxu0 %v1195
        %2635 = vmatmul.mubr.bf16.gmra.mrb[0].mxu0 %v1194
        %v2636 = vpop.f32.mrb[0].mxu0
        %v2637 = vadd.f32 %v985, %v2636
        %v2638 = vpop.f32.mrb[0].mxu0
        %v2639 = vadd.f32 %v989, %v2638
        %v2640 = vpop.f32.mrb[0].mxu0
        %v2641 = vadd.f32 %v985, %v2640
        %v2642 = vpop.f32.mrb[0].mxu0
        %v2643 = vadd.f32 %v989, %v2642
        %2644 = vmatprep.mubr.bf16.mxu0 %v1203
        %2645 = vmatmul.mubr.bf16.gmra.mrb[0].mxu0 %v1202
        %v2646 = vpop.f32.mrb[0].mxu0
        %v2647 = vadd.f32 %v985, %v2646
        %v2648 = vpop.f32.mrb[0].mxu0
        %v2649 = vadd.f32 %v989, %v2648
        %v2650 = vpop.f32.mrb[0].mxu0
        %v2651 = vadd.f32 %v985, %v2650
        %v2652 = vpop.f32.mrb[0].mxu0
        %v2653 = vadd.f32 %v989, %v2652
        %2654 = vmatprep.mubr.bf16.mxu0 %v1211
        %2655 = vmatmul.mubr.bf16.gmra.mrb[0].mxu0 %v1210
        %v2656 = vpop.f32.mrb[0].mxu0
        %v2657 = vadd.f32 %v985, %v2656
        %v2658 = vpop.f32.mrb[0].mxu0
        %v2659 = vadd.f32 %v989, %v2658
        %v2660 = vpop.f32.mrb[0].mxu0
        %v2661 = vadd.f32 %v985, %v2660
        %v2662 = vpop.f32.mrb[0].mxu0
        %v2663 = vadd.f32 %v989, %v2662
        %2664 = vmatprep.mubr.bf16.mxu0 %v1219
        %2665 = vmatmul.mubr.bf16.gmra.mrb[0].mxu0 %v1218
        %v2666 = vpop.f32.mrb[0].mxu0
        %v2667 = vadd.f32 %v985, %v2666
        %v2668 = vpop.f32.mrb[0].mxu0
        %v2669 = vadd.f32 %v989, %v2668
        %v2670 = vpop.f32.mrb[0].mxu0
        %v2671 = vadd.f32 %v985, %v2670
        %v2672 = vpop.f32.mrb[0].mxu0
        %v2673 = vadd.f32 %v989, %v2672
        %2674 = vmatprep.mubr.bf16.mxu0 %v1227
        %2675 = vmatmul.mubr.bf16.gmra.mrb[0].mxu0 %v1226
        %v2676 = vpop.f32.mrb[0].mxu0
        %v2677 = vadd.f32 %v985, %v2676
        %v2678 = vpop.f32.mrb[0].mxu0
        %v2679 = vadd.f32 %v989, %v2678
        %v2680 = vpop.f32.mrb[0].mxu0
        %v2681 = vadd.f32 %v985, %v2680
        %v2682 = vpop.f32.mrb[0].mxu0
        %v2683 = vadd.f32 %v989, %v2682
        %2684 = vmatprep.mubr.bf16.mxu0 %v1235
        %2685 = vmatmul.mubr.bf16.gmra.mrb[0].mxu0 %v1234
        %v2686 = vpop.f32.mrb[0].mxu0
        %v2687 = vadd.f32 %v985, %v2686
        %v2688 = vpop.f32.mrb[0].mxu0
        %v2689 = vadd.f32 %v989, %v2688
        %v2690 = vpop.f32.mrb[0].mxu0
        %v2691 = vadd.f32 %v985, %v2690
        %v2692 = vpop.f32.mrb[0].mxu0
        %v2693 = vadd.f32 %v989, %v2692
        %2694 = vmatprep.mubr.bf16.mxu0 %v1243
        %2695 = vmatmul.mubr.bf16.gmra.mrb[0].mxu0 %v1242
        %v2696 = vpop.f32.mrb[0].mxu0
        %v2697 = vadd.f32 %v985, %v2696
        %v2698 = vpop.f32.mrb[0].mxu0
        %v2699 = vadd.f32 %v989, %v2698
        %v2700 = vpop.f32.mrb[0].mxu0
        %v2701 = vadd.f32 %v985, %v2700
        %v2702 = vpop.f32.mrb[0].mxu0
        %v2703 = vadd.f32 %v989, %v2702
        %2704 = vmatprep.mubr.bf16.mxu0 %v1251
        %2705 = vmatmul.mubr.bf16.gmra.mrb[0].mxu0 %v1250
        %v2706 = vpop.f32.mrb[0].mxu0
        %v2707 = vadd.f32 %v985, %v2706
        %v2708 = vpop.f32.mrb[0].mxu0
        %v2709 = vadd.f32 %v989, %v2708
        %v2710 = vpop.f32.mrb[0].mxu0
        %v2711 = vadd.f32 %v985, %v2710
        %v2712 = vpop.f32.mrb[0].mxu0
        %v2713 = vadd.f32 %v989, %v2712
        %2714 = vdwg.mxu0
        %2715 = vmatprep.subr.bf16.mxu0 %v2155
        %2716 = vmatpush1.bf16.msra.mxu0 %v2154
        %2717 = vmatprep.subr.bf16.mxu0 %v2159
        %2718 = vmatpush1.bf16.msra.mxu0 %v2158
        %2719 = vmatprep.subr.bf16.mxu0 %v2163
        %2720 = vmatpush1.bf16.msra.mxu0 %v2162
        %2721 = vmatprep.subr.bf16.mxu0 %v2167
        %2722 = vmatpush1.bf16.msra.mxu0 %v2166
        %2723 = vmatprep.subr.bf16.mxu0 %v2171
        %2724 = vmatpush1.bf16.msra.mxu0 %v2170
        %2725 = vmatprep.subr.bf16.mxu0 %v2175
        %2726 = vmatpush1.bf16.msra.mxu0 %v2174
        %2727 = vmatprep.subr.bf16.mxu0 %v2179
        %2728 = vmatpush1.bf16.msra.mxu0 %v2178
        %2729 = vmatprep.subr.bf16.mxu0 %v2183
        %2730 = vmatpush1.bf16.msra.mxu0 %v2182
        %2731 = vmatprep.subr.bf16.mxu0 %v2187
        %2732 = vmatpush1.bf16.msra.mxu0 %v2186
        %2733 = vmatprep.subr.bf16.mxu0 %v2191
        %2734 = vmatpush1.bf16.msra.mxu0 %v2190
        %2735 = vmatprep.subr.bf16.mxu0 %v2195
        %2736 = vmatpush1.bf16.msra.mxu0 %v2194
        %2737 = vmatprep.subr.bf16.mxu0 %v2199
        %2738 = vmatpush1.bf16.msra.mxu0 %v2198
        %2739 = vmatprep.subr.bf16.mxu0 %v2203
        %2740 = vmatpush1.bf16.msra.mxu0 %v2202
        %2741 = vmatprep.subr.bf16.mxu0 %v2207
        %2742 = vmatpush1.bf16.msra.mxu0 %v2206
        %2743 = vmatprep.subr.bf16.mxu0 %v2211
        %2744 = vmatpush1.bf16.msra.mxu0 %v2210
        %2745 = vmatprep.subr.bf16.mxu0 %v2215
        %2746 = vmatpush1.bf16.msra.mxu0 %v2214
        %2747 = vmatprep.mubr.bf16.mxu0 %v1197
        %2748 = vmatmul.mubr.bf16.gmra.mrb[0].mxu0 %v1196
        %v2749 = vpop.f32.mrb[0].mxu0
        %v2750 = vadd.f32 %v2637, %v2749
        %v2751 = vpop.f32.mrb[0].mxu0
        %v2752 = vadd.f32 %v2639, %v2751
        %v2753 = vpop.f32.mrb[0].mxu0
        %v2754 = vadd.f32 %v2641, %v2753
        %v2755 = vpop.f32.mrb[0].mxu0
        %v2756 = vadd.f32 %v2643, %v2755
        %2757 = vmatprep.mubr.bf16.mxu0 %v1205
        %2758 = vmatmul.mubr.bf16.gmra.mrb[0].mxu0 %v1204
        %v2759 = vpop.f32.mrb[0].mxu0
        %v2760 = vadd.f32 %v2647, %v2759
        %v2761 = vpop.f32.mrb[0].mxu0
        %v2762 = vadd.f32 %v2649, %v2761
        %v2763 = vpop.f32.mrb[0].mxu0
        %v2764 = vadd.f32 %v2651, %v2763
        %v2765 = vpop.f32.mrb[0].mxu0
        %v2766 = vadd.f32 %v2653, %v2765
        %2767 = vmatprep.mubr.bf16.mxu0 %v1213
        %2768 = vmatmul.mubr.bf16.gmra.mrb[0].mxu0 %v1212
        %v2769 = vpop.f32.mrb[0].mxu0
        %v2770 = vadd.f32 %v2657, %v2769
        %v2771 = vpop.f32.mrb[0].mxu0
        %v2772 = vadd.f32 %v2659, %v2771
        %v2773 = vpop.f32.mrb[0].mxu0
        %v2774 = vadd.f32 %v2661, %v2773
        %v2775 = vpop.f32.mrb[0].mxu0
        %v2776 = vadd.f32 %v2663, %v2775
        %2777 = vmatprep.mubr.bf16.mxu0 %v1221
        %2778 = vmatmul.mubr.bf16.gmra.mrb[0].mxu0 %v1220
        %v2779 = vpop.f32.mrb[0].mxu0
        %v2780 = vadd.f32 %v2667, %v2779
        %v2781 = vpop.f32.mrb[0].mxu0
        %v2782 = vadd.f32 %v2669, %v2781
        %v2783 = vpop.f32.mrb[0].mxu0
        %v2784 = vadd.f32 %v2671, %v2783
        %v2785 = vpop.f32.mrb[0].mxu0
        %v2786 = vadd.f32 %v2673, %v2785
        %2787 = vmatprep.mubr.bf16.mxu0 %v1229
        %2788 = vmatmul.mubr.bf16.gmra.mrb[0].mxu0 %v1228
        %v2789 = vpop.f32.mrb[0].mxu0
        %v2790 = vadd.f32 %v2677, %v2789
        %v2791 = vpop.f32.mrb[0].mxu0
        %v2792 = vadd.f32 %v2679, %v2791
        %v2793 = vpop.f32.mrb[0].mxu0
        %v2794 = vadd.f32 %v2681, %v2793
        %v2795 = vpop.f32.mrb[0].mxu0
        %v2796 = vadd.f32 %v2683, %v2795
        %2797 = vmatprep.mubr.bf16.mxu0 %v1237
        %2798 = vmatmul.mubr.bf16.gmra.mrb[0].mxu0 %v1236
        %v2799 = vpop.f32.mrb[0].mxu0
        %v2800 = vadd.f32 %v2687, %v2799
        %v2801 = vpop.f32.mrb[0].mxu0
        %v2802 = vadd.f32 %v2689, %v2801
        %v2803 = vpop.f32.mrb[0].mxu0
        %v2804 = vadd.f32 %v2691, %v2803
        %v2805 = vpop.f32.mrb[0].mxu0
        %v2806 = vadd.f32 %v2693, %v2805
        %2807 = vmatprep.mubr.bf16.mxu0 %v1245
        %2808 = vmatmul.mubr.bf16.gmra.mrb[0].mxu0 %v1244
        %v2809 = vpop.f32.mrb[0].mxu0
        %v2810 = vadd.f32 %v2697, %v2809
        %v2811 = vpop.f32.mrb[0].mxu0
        %v2812 = vadd.f32 %v2699, %v2811
        %v2813 = vpop.f32.mrb[0].mxu0
        %v2814 = vadd.f32 %v2701, %v2813
        %v2815 = vpop.f32.mrb[0].mxu0
        %v2816 = vadd.f32 %v2703, %v2815
        %2817 = vmatprep.mubr.bf16.mxu0 %v1253
        %2818 = vmatmul.mubr.bf16.gmra.mrb[0].mxu0 %v1252
        %v2819 = vpop.f32.mrb[0].mxu0
        %v2820 = vadd.f32 %v2707, %v2819
        %v2821 = vpop.f32.mrb[0].mxu0
        %v2822 = vadd.f32 %v2709, %v2821
        %v2823 = vpop.f32.mrb[0].mxu0
        %v2824 = vadd.f32 %v2711, %v2823
        %v2825 = vpop.f32.mrb[0].mxu0
        %v2826 = vadd.f32 %v2713, %v2825
        %2827 = vdwg.mxu0
        %2828 = vmatprep.subr.bf16.mxu0 %v2219
        %2829 = vmatpush1.bf16.msra.mxu0 %v2218
        %2830 = vmatprep.subr.bf16.mxu0 %v2223
        %2831 = vmatpush1.bf16.msra.mxu0 %v2222
        %2832 = vmatprep.subr.bf16.mxu0 %v2227
        %2833 = vmatpush1.bf16.msra.mxu0 %v2226
        %2834 = vmatprep.subr.bf16.mxu0 %v2231
        %2835 = vmatpush1.bf16.msra.mxu0 %v2230
        %2836 = vmatprep.subr.bf16.mxu0 %v2235
        %2837 = vmatpush1.bf16.msra.mxu0 %v2234
        %2838 = vmatprep.subr.bf16.mxu0 %v2239
        %2839 = vmatpush1.bf16.msra.mxu0 %v2238
        %2840 = vmatprep.subr.bf16.mxu0 %v2243
        %2841 = vmatpush1.bf16.msra.mxu0 %v2242
        %2842 = vmatprep.subr.bf16.mxu0 %v2247
        %2843 = vmatpush1.bf16.msra.mxu0 %v2246
        %2844 = vmatprep.subr.bf16.mxu0 %v2251
        %2845 = vmatpush1.bf16.msra.mxu0 %v2250
        %2846 = vmatprep.subr.bf16.mxu0 %v2255
        %2847 = vmatpush1.bf16.msra.mxu0 %v2254
        %2848 = vmatprep.subr.bf16.mxu0 %v2259
        %2849 = vmatpush1.bf16.msra.mxu0 %v2258
        %2850 = vmatprep.subr.bf16.mxu0 %v2263
        %2851 = vmatpush1.bf16.msra.mxu0 %v2262
        %2852 = vmatprep.subr.bf16.mxu0 %v2267
        %2853 = vmatpush1.bf16.msra.mxu0 %v2266
        %2854 = vmatprep.subr.bf16.mxu0 %v2271
        %2855 = vmatpush1.bf16.msra.mxu0 %v2270
        %2856 = vmatprep.subr.bf16.mxu0 %v2275
        %2857 = vmatpush1.bf16.msra.mxu0 %v2274
        %2858 = vmatprep.subr.bf16.mxu0 %v2279
        %2859 = vmatpush1.bf16.msra.mxu0 %v2278
        %2860 = vmatprep.mubr.bf16.mxu0 %v1199
        %2861 = vmatmul.mubr.bf16.gmra.mrb[0].mxu0 %v1198
        %v2862 = vpop.f32.mrb[0].mxu0
        %v2863 = vadd.f32 %v2750, %v2862
        %v2864 = vpop.f32.mrb[0].mxu0
        %v2865 = vadd.f32 %v2752, %v2864
        %v2866 = vpop.f32.mrb[0].mxu0
        %v2867 = vadd.f32 %v2754, %v2866
        %v2868 = vpop.f32.mrb[0].mxu0
        %v2869 = vadd.f32 %v2756, %v2868
        %2870 = vmatprep.mubr.bf16.mxu0 %v1207
        %2871 = vmatmul.mubr.bf16.gmra.mrb[0].mxu0 %v1206
        %v2872 = vpop.f32.mrb[0].mxu0
        %v2873 = vadd.f32 %v2760, %v2872
        %v2874 = vpop.f32.mrb[0].mxu0
        %v2875 = vadd.f32 %v2762, %v2874
        %v2876 = vpop.f32.mrb[0].mxu0
        %v2877 = vadd.f32 %v2764, %v2876
        %v2878 = vpop.f32.mrb[0].mxu0
        %v2879 = vadd.f32 %v2766, %v2878
        %2880 = vmatprep.mubr.bf16.mxu0 %v1215
        %2881 = vmatmul.mubr.bf16.gmra.mrb[0].mxu0 %v1214
        %v2882 = vpop.f32.mrb[0].mxu0
        %v2883 = vadd.f32 %v2770, %v2882
        %v2884 = vpop.f32.mrb[0].mxu0
        %v2885 = vadd.f32 %v2772, %v2884
        %v2886 = vpop.f32.mrb[0].mxu0
        %v2887 = vadd.f32 %v2774, %v2886
        %v2888 = vpop.f32.mrb[0].mxu0
        %v2889 = vadd.f32 %v2776, %v2888
        %2890 = vmatprep.mubr.bf16.mxu0 %v1223
        %2891 = vmatmul.mubr.bf16.gmra.mrb[0].mxu0 %v1222
        %v2892 = vpop.f32.mrb[0].mxu0
        %v2893 = vadd.f32 %v2780, %v2892
        %v2894 = vpop.f32.mrb[0].mxu0
        %v2895 = vadd.f32 %v2782, %v2894
        %v2896 = vpop.f32.mrb[0].mxu0
        %v2897 = vadd.f32 %v2784, %v2896
        %v2898 = vpop.f32.mrb[0].mxu0
        %v2899 = vadd.f32 %v2786, %v2898
        %2900 = vmatprep.mubr.bf16.mxu0 %v1231
        %2901 = vmatmul.mubr.bf16.gmra.mrb[0].mxu0 %v1230
        %v2902 = vpop.f32.mrb[0].mxu0
        %v2903 = vadd.f32 %v2790, %v2902
        %v2904 = vpop.f32.mrb[0].mxu0
        %v2905 = vadd.f32 %v2792, %v2904
        %v2906 = vpop.f32.mrb[0].mxu0
        %v2907 = vadd.f32 %v2794, %v2906
        %v2908 = vpop.f32.mrb[0].mxu0
        %v2909 = vadd.f32 %v2796, %v2908
        %2910 = vmatprep.mubr.bf16.mxu0 %v1239
        %2911 = vmatmul.mubr.bf16.gmra.mrb[0].mxu0 %v1238
        %v2912 = vpop.f32.mrb[0].mxu0
        %v2913 = vadd.f32 %v2800, %v2912
        %v2914 = vpop.f32.mrb[0].mxu0
        %v2915 = vadd.f32 %v2802, %v2914
        %v2916 = vpop.f32.mrb[0].mxu0
        %v2917 = vadd.f32 %v2804, %v2916
        %v2918 = vpop.f32.mrb[0].mxu0
        %v2919 = vadd.f32 %v2806, %v2918
        %2920 = vmatprep.mubr.bf16.mxu0 %v1247
        %2921 = vmatmul.mubr.bf16.gmra.mrb[0].mxu0 %v1246
        %v2922 = vpop.f32.mrb[0].mxu0
        %v2923 = vadd.f32 %v2810, %v2922
        %v2924 = vpop.f32.mrb[0].mxu0
        %v2925 = vadd.f32 %v2812, %v2924
        %v2926 = vpop.f32.mrb[0].mxu0
        %v2927 = vadd.f32 %v2814, %v2926
        %v2928 = vpop.f32.mrb[0].mxu0
        %v2929 = vadd.f32 %v2816, %v2928
        %2930 = vmatprep.mubr.bf16.mxu0 %v1255
        %2931 = vmatmul.mubr.bf16.gmra.mrb[0].mxu0 %v1254
        %v2932 = vpop.f32.mrb[0].mxu0
        %v2933 = vadd.f32 %v2820, %v2932
        %v2934 = vpop.f32.mrb[0].mxu0
        %v2935 = vadd.f32 %v2822, %v2934
        %v2936 = vpop.f32.mrb[0].mxu0
        %v2937 = vadd.f32 %v2824, %v2936
        %v2938 = vpop.f32.mrb[0].mxu0
        %v2939 = vadd.f32 %v2826, %v2938
        %2940 = vdwg.mxu0
        %2941 = vmatprep.subr.bf16.mxu0 %v2283
        %2942 = vmatpush1.bf16.msra.mxu0 %v2282
        %2943 = vmatprep.subr.bf16.mxu0 %v2287
        %2944 = vmatpush1.bf16.msra.mxu0 %v2286
        %2945 = vmatprep.subr.bf16.mxu0 %v2291
        %2946 = vmatpush1.bf16.msra.mxu0 %v2290
        %2947 = vmatprep.subr.bf16.mxu0 %v2295
        %2948 = vmatpush1.bf16.msra.mxu0 %v2294
        %2949 = vmatprep.subr.bf16.mxu0 %v2299
        %2950 = vmatpush1.bf16.msra.mxu0 %v2298
        %2951 = vmatprep.subr.bf16.mxu0 %v2303
        %2952 = vmatpush1.bf16.msra.mxu0 %v2302
        %2953 = vmatprep.subr.bf16.mxu0 %v2307
        %2954 = vmatpush1.bf16.msra.mxu0 %v2306
        %2955 = vmatprep.subr.bf16.mxu0 %v2311
        %2956 = vmatpush1.bf16.msra.mxu0 %v2310
        %2957 = vmatprep.subr.bf16.mxu0 %v2315
        %2958 = vmatpush1.bf16.msra.mxu0 %v2314
        %2959 = vmatprep.subr.bf16.mxu0 %v2319
        %2960 = vmatpush1.bf16.msra.mxu0 %v2318
        %2961 = vmatprep.subr.bf16.mxu0 %v2323
        %2962 = vmatpush1.bf16.msra.mxu0 %v2322
        %2963 = vmatprep.subr.bf16.mxu0 %v2327
        %2964 = vmatpush1.bf16.msra.mxu0 %v2326
        %2965 = vmatprep.subr.bf16.mxu0 %v2331
        %2966 = vmatpush1.bf16.msra.mxu0 %v2330
        %2967 = vmatprep.subr.bf16.mxu0 %v2335
        %2968 = vmatpush1.bf16.msra.mxu0 %v2334
        %2969 = vmatprep.subr.bf16.mxu0 %v2339
        %2970 = vmatpush1.bf16.msra.mxu0 %v2338
        %2971 = vmatprep.subr.bf16.mxu0 %v2343
        %2972 = vmatpush1.bf16.msra.mxu0 %v2342
        %2973 = vmatprep.mubr.bf16.mxu0 %v1201
        %2974 = vmatmul.mubr.bf16.gmra.mrb[0].mxu0 %v1200
        %v2975 = vpop.f32.mrb[0].mxu0
        %v2976 = vadd.f32 %v2863, %v2975
        %v2977 = vpop.f32.mrb[0].mxu0
        %v2978 = vadd.f32 %v2865, %v2977
        %v2979 = vpop.f32.mrb[0].mxu0
        %v2980 = vadd.f32 %v2867, %v2979
        %v2981 = vpop.f32.mrb[0].mxu0
        %v2982 = vadd.f32 %v2869, %v2981
        %2983 = vmatprep.mubr.bf16.mxu0 %v1209
        %2984 = vmatmul.mubr.bf16.gmra.mrb[0].mxu0 %v1208
        %v2985 = vpop.f32.mrb[0].mxu0
        %v2986 = vadd.f32 %v2873, %v2985
        %v2987 = vpop.f32.mrb[0].mxu0
        %v2988 = vadd.f32 %v2875, %v2987
        %v2989 = vpop.f32.mrb[0].mxu0
        %v2990 = vadd.f32 %v2877, %v2989
        %v2991 = vpop.f32.mrb[0].mxu0
        %v2992 = vadd.f32 %v2879, %v2991
        %2993 = vmatprep.mubr.bf16.mxu0 %v1217
        %2994 = vmatmul.mubr.bf16.gmra.mrb[0].mxu0 %v1216
        %v2995 = vpop.f32.mrb[0].mxu0
        %v2996 = vadd.f32 %v2883, %v2995
        %v2997 = vpop.f32.mrb[0].mxu0
        %v2998 = vadd.f32 %v2885, %v2997
        %v2999 = vpop.f32.mrb[0].mxu0
        %v3000 = vadd.f32 %v2887, %v2999
        %v3001 = vpop.f32.mrb[0].mxu0
        %v3002 = vadd.f32 %v2889, %v3001
        %3003 = vmatprep.mubr.bf16.mxu0 %v1225
        %3004 = vmatmul.mubr.bf16.gmra.mrb[0].mxu0 %v1224
        %v3005 = vpop.f32.mrb[0].mxu0
        %v3006 = vadd.f32 %v2893, %v3005
        %v3007 = vpop.f32.mrb[0].mxu0
        %v3008 = vadd.f32 %v2895, %v3007
        %v3009 = vpop.f32.mrb[0].mxu0
        %v3010 = vadd.f32 %v2897, %v3009
        %v3011 = vpop.f32.mrb[0].mxu0
        %v3012 = vadd.f32 %v2899, %v3011
        %3013 = vmatprep.mubr.bf16.mxu0 %v1233
        %3014 = vmatmul.mubr.bf16.gmra.mrb[0].mxu0 %v1232
        %v3015 = vpop.f32.mrb[0].mxu0
        %v3016 = vadd.f32 %v2903, %v3015
        %v3017 = vpop.f32.mrb[0].mxu0
        %v3018 = vadd.f32 %v2905, %v3017
        %v3019 = vpop.f32.mrb[0].mxu0
        %v3020 = vadd.f32 %v2907, %v3019
        %v3021 = vpop.f32.mrb[0].mxu0
        %v3022 = vadd.f32 %v2909, %v3021
        %3023 = vmatprep.mubr.bf16.mxu0 %v1241
        %3024 = vmatmul.mubr.bf16.gmra.mrb[0].mxu0 %v1240
        %v3025 = vpop.f32.mrb[0].mxu0
        %v3026 = vadd.f32 %v2913, %v3025
        %v3027 = vpop.f32.mrb[0].mxu0
        %v3028 = vadd.f32 %v2915, %v3027
        %v3029 = vpop.f32.mrb[0].mxu0
        %v3030 = vadd.f32 %v2917, %v3029
        %v3031 = vpop.f32.mrb[0].mxu0
        %v3032 = vadd.f32 %v2919, %v3031
        %3033 = vmatprep.mubr.bf16.mxu0 %v1249
        %3034 = vmatmul.mubr.bf16.gmra.mrb[0].mxu0 %v1248
        %v3035 = vpop.f32.mrb[0].mxu0
        %v3036 = vadd.f32 %v2923, %v3035
        %v3037 = vpop.f32.mrb[0].mxu0
        %v3038 = vadd.f32 %v2925, %v3037
        %v3039 = vpop.f32.mrb[0].mxu0
        %v3040 = vadd.f32 %v2927, %v3039
        %v3041 = vpop.f32.mrb[0].mxu0
        %v3042 = vadd.f32 %v2929, %v3041
        %3043 = vmatprep.mubr.bf16.mxu0 %v1257
        %3044 = vmatmul.mubr.bf16.gmra.mrb[0].mxu0 %v1256
        %v3045 = vpop.f32.mrb[0].mxu0
        %v3046 = vadd.f32 %v2933, %v3045
        %v3047 = vpop.f32.mrb[0].mxu0
        %v3048 = vadd.f32 %v2935, %v3047
        %v3049 = vpop.f32.mrb[0].mxu0
        %v3050 = vadd.f32 %v2937, %v3049
        %v3051 = vpop.f32.mrb[0].mxu0
        %v3052 = vadd.f32 %v2939, %v3051
        %3053 = vdwg.mxu0
        %3054 = vmatprep.subr.bf16.mxu0 %v2093
        %3055 = vmatpush1.bf16.msra.mxu0 %v2092
        %3056 = vmatprep.subr.bf16.mxu0 %v2097
        %3057 = vmatpush1.bf16.msra.mxu0 %v2096
        %3058 = vmatprep.subr.bf16.mxu0 %v2101
        %3059 = vmatpush1.bf16.msra.mxu0 %v2100
        %3060 = vmatprep.subr.bf16.mxu0 %v2105
        %3061 = vmatpush1.bf16.msra.mxu0 %v2104
        %3062 = vmatprep.subr.bf16.mxu0 %v2109
        %3063 = vmatpush1.bf16.msra.mxu0 %v2108
        %3064 = vmatprep.subr.bf16.mxu0 %v2113
        %3065 = vmatpush1.bf16.msra.mxu0 %v2112
        %3066 = vmatprep.subr.bf16.mxu0 %v2117
        %3067 = vmatpush1.bf16.msra.mxu0 %v2116
        %3068 = vmatprep.subr.bf16.mxu0 %v2121
        %3069 = vmatpush1.bf16.msra.mxu0 %v2120
        %3070 = vmatprep.subr.bf16.mxu0 %v2125
        %3071 = vmatpush1.bf16.msra.mxu0 %v2124
        %3072 = vmatprep.subr.bf16.mxu0 %v2129
        %3073 = vmatpush1.bf16.msra.mxu0 %v2128
        %3074 = vmatprep.subr.bf16.mxu0 %v2133
        %3075 = vmatpush1.bf16.msra.mxu0 %v2132
        %3076 = vmatprep.subr.bf16.mxu0 %v2137
        %3077 = vmatpush1.bf16.msra.mxu0 %v2136
        %3078 = vmatprep.subr.bf16.mxu0 %v2141
        %3079 = vmatpush1.bf16.msra.mxu0 %v2140
        %3080 = vmatprep.subr.bf16.mxu0 %v2145
        %3081 = vmatpush1.bf16.msra.mxu0 %v2144
        %3082 = vmatprep.subr.bf16.mxu0 %v2149
        %3083 = vmatpush1.bf16.msra.mxu0 %v2148
        %3084 = vmatprep.subr.bf16.mxu0 %v2153
        %3085 = vmatpush1.bf16.msra.mxu0 %v2152
        %3086 = vmatprep.mubr.bf16.mxu0 %v1195
        %3087 = vmatmul.mubr.bf16.gmra.mrb[0].mxu0 %v1194
        %v3088 = vpop.f32.mrb[0].mxu0
        %v3089 = vadd.f32 %v993, %v3088
        %v3090 = vpop.f32.mrb[0].mxu0
        %v3091 = vadd.f32 %v997, %v3090
        %v3092 = vpop.f32.mrb[0].mxu0
        %v3093 = vadd.f32 %v993, %v3092
        %v3094 = vpop.f32.mrb[0].mxu0
        %v3095 = vadd.f32 %v997, %v3094
        %3096 = vmatprep.mubr.bf16.mxu0 %v1203
        %3097 = vmatmul.mubr.bf16.gmra.mrb[0].mxu0 %v1202
        %v3098 = vpop.f32.mrb[0].mxu0
        %v3099 = vadd.f32 %v993, %v3098
        %v3100 = vpop.f32.mrb[0].mxu0
        %v3101 = vadd.f32 %v997, %v3100
        %v3102 = vpop.f32.mrb[0].mxu0
        %v3103 = vadd.f32 %v993, %v3102
        %v3104 = vpop.f32.mrb[0].mxu0
        %v3105 = vadd.f32 %v997, %v3104
        %3106 = vmatprep.mubr.bf16.mxu0 %v1211
        %3107 = vmatmul.mubr.bf16.gmra.mrb[0].mxu0 %v1210
        %v3108 = vpop.f32.mrb[0].mxu0
        %v3109 = vadd.f32 %v993, %v3108
        %v3110 = vpop.f32.mrb[0].mxu0
        %v3111 = vadd.f32 %v997, %v3110
        %v3112 = vpop.f32.mrb[0].mxu0
        %v3113 = vadd.f32 %v993, %v3112
        %v3114 = vpop.f32.mrb[0].mxu0
        %v3115 = vadd.f32 %v997, %v3114
        %3116 = vmatprep.mubr.bf16.mxu0 %v1219
        %3117 = vmatmul.mubr.bf16.gmra.mrb[0].mxu0 %v1218
        %v3118 = vpop.f32.mrb[0].mxu0
        %v3119 = vadd.f32 %v993, %v3118
        %v3120 = vpop.f32.mrb[0].mxu0
        %v3121 = vadd.f32 %v997, %v3120
        %v3122 = vpop.f32.mrb[0].mxu0
        %v3123 = vadd.f32 %v993, %v3122
        %v3124 = vpop.f32.mrb[0].mxu0
        %v3125 = vadd.f32 %v997, %v3124
        %3126 = vmatprep.mubr.bf16.mxu0 %v1227
        %3127 = vmatmul.mubr.bf16.gmra.mrb[0].mxu0 %v1226
        %v3128 = vpop.f32.mrb[0].mxu0
        %v3129 = vadd.f32 %v993, %v3128
        %v3130 = vpop.f32.mrb[0].mxu0
        %v3131 = vadd.f32 %v997, %v3130
        %v3132 = vpop.f32.mrb[0].mxu0
        %v3133 = vadd.f32 %v993, %v3132
        %v3134 = vpop.f32.mrb[0].mxu0
        %v3135 = vadd.f32 %v997, %v3134
        %3136 = vmatprep.mubr.bf16.mxu0 %v1235
        %3137 = vmatmul.mubr.bf16.gmra.mrb[0].mxu0 %v1234
        %v3138 = vpop.f32.mrb[0].mxu0
        %v3139 = vadd.f32 %v993, %v3138
        %v3140 = vpop.f32.mrb[0].mxu0
        %v3141 = vadd.f32 %v997, %v3140
        %v3142 = vpop.f32.mrb[0].mxu0
        %v3143 = vadd.f32 %v993, %v3142
        %v3144 = vpop.f32.mrb[0].mxu0
        %v3145 = vadd.f32 %v997, %v3144
        %3146 = vmatprep.mubr.bf16.mxu0 %v1243
        %3147 = vmatmul.mubr.bf16.gmra.mrb[0].mxu0 %v1242
        %v3148 = vpop.f32.mrb[0].mxu0
        %v3149 = vadd.f32 %v993, %v3148
        %v3150 = vpop.f32.mrb[0].mxu0
        %v3151 = vadd.f32 %v997, %v3150
        %v3152 = vpop.f32.mrb[0].mxu0
        %v3153 = vadd.f32 %v993, %v3152
        %v3154 = vpop.f32.mrb[0].mxu0
        %v3155 = vadd.f32 %v997, %v3154
        %3156 = vmatprep.mubr.bf16.mxu0 %v1251
        %3157 = vmatmul.mubr.bf16.gmra.mrb[0].mxu0 %v1250
        %v3158 = vpop.f32.mrb[0].mxu0
        %v3159 = vadd.f32 %v993, %v3158
        %v3160 = vpop.f32.mrb[0].mxu0
        %v3161 = vadd.f32 %v997, %v3160
        %v3162 = vpop.f32.mrb[0].mxu0
        %v3163 = vadd.f32 %v993, %v3162
        %v3164 = vpop.f32.mrb[0].mxu0
        %v3165 = vadd.f32 %v997, %v3164
        %3166 = vdwg.mxu0
        %3167 = vmatprep.subr.bf16.mxu0 %v2157
        %3168 = vmatpush1.bf16.msra.mxu0 %v2156
        %3169 = vmatprep.subr.bf16.mxu0 %v2161
        %3170 = vmatpush1.bf16.msra.mxu0 %v2160
        %3171 = vmatprep.subr.bf16.mxu0 %v2165
        %3172 = vmatpush1.bf16.msra.mxu0 %v2164
        %3173 = vmatprep.subr.bf16.mxu0 %v2169
        %3174 = vmatpush1.bf16.msra.mxu0 %v2168
        %3175 = vmatprep.subr.bf16.mxu0 %v2173
        %3176 = vmatpush1.bf16.msra.mxu0 %v2172
        %3177 = vmatprep.subr.bf16.mxu0 %v2177
        %3178 = vmatpush1.bf16.msra.mxu0 %v2176
        %3179 = vmatprep.subr.bf16.mxu0 %v2181
        %3180 = vmatpush1.bf16.msra.mxu0 %v2180
        %3181 = vmatprep.subr.bf16.mxu0 %v2185
        %3182 = vmatpush1.bf16.msra.mxu0 %v2184
        %3183 = vmatprep.subr.bf16.mxu0 %v2189
        %3184 = vmatpush1.bf16.msra.mxu0 %v2188
        %3185 = vmatprep.subr.bf16.mxu0 %v2193
        %3186 = vmatpush1.bf16.msra.mxu0 %v2192
        %3187 = vmatprep.subr.bf16.mxu0 %v2197
        %3188 = vmatpush1.bf16.msra.mxu0 %v2196
        %3189 = vmatprep.subr.bf16.mxu0 %v2201
        %3190 = vmatpush1.bf16.msra.mxu0 %v2200
        %3191 = vmatprep.subr.bf16.mxu0 %v2205
        %3192 = vmatpush1.bf16.msra.mxu0 %v2204
        %3193 = vmatprep.subr.bf16.mxu0 %v2209
        %3194 = vmatpush1.bf16.msra.mxu0 %v2208
        %3195 = vmatprep.subr.bf16.mxu0 %v2213
        %3196 = vmatpush1.bf16.msra.mxu0 %v2212
        %3197 = vmatprep.subr.bf16.mxu0 %v2217
        %3198 = vmatpush1.bf16.msra.mxu0 %v2216
        %3199 = vmatprep.mubr.bf16.mxu0 %v1197
        %3200 = vmatmul.mubr.bf16.gmra.mrb[0].mxu0 %v1196
        %v3201 = vpop.f32.mrb[0].mxu0
        %v3202 = vadd.f32 %v3089, %v3201
        %v3203 = vpop.f32.mrb[0].mxu0
        %v3204 = vadd.f32 %v3091, %v3203
        %v3205 = vpop.f32.mrb[0].mxu0
        %v3206 = vadd.f32 %v3093, %v3205
        %v3207 = vpop.f32.mrb[0].mxu0
        %v3208 = vadd.f32 %v3095, %v3207
        %3209 = vmatprep.mubr.bf16.mxu0 %v1205
        %3210 = vmatmul.mubr.bf16.gmra.mrb[0].mxu0 %v1204
        %v3211 = vpop.f32.mrb[0].mxu0
        %v3212 = vadd.f32 %v3099, %v3211
        %v3213 = vpop.f32.mrb[0].mxu0
        %v3214 = vadd.f32 %v3101, %v3213
        %v3215 = vpop.f32.mrb[0].mxu0
        %v3216 = vadd.f32 %v3103, %v3215
        %v3217 = vpop.f32.mrb[0].mxu0
        %v3218 = vadd.f32 %v3105, %v3217
        %3219 = vmatprep.mubr.bf16.mxu0 %v1213
        %3220 = vmatmul.mubr.bf16.gmra.mrb[0].mxu0 %v1212
        %v3221 = vpop.f32.mrb[0].mxu0
        %v3222 = vadd.f32 %v3109, %v3221
        %v3223 = vpop.f32.mrb[0].mxu0
        %v3224 = vadd.f32 %v3111, %v3223
        %v3225 = vpop.f32.mrb[0].mxu0
        %v3226 = vadd.f32 %v3113, %v3225
        %v3227 = vpop.f32.mrb[0].mxu0
        %v3228 = vadd.f32 %v3115, %v3227
        %3229 = vmatprep.mubr.bf16.mxu0 %v1221
        %3230 = vmatmul.mubr.bf16.gmra.mrb[0].mxu0 %v1220
        %v3231 = vpop.f32.mrb[0].mxu0
        %v3232 = vadd.f32 %v3119, %v3231
        %v3233 = vpop.f32.mrb[0].mxu0
        %v3234 = vadd.f32 %v3121, %v3233
        %v3235 = vpop.f32.mrb[0].mxu0
        %v3236 = vadd.f32 %v3123, %v3235
        %v3237 = vpop.f32.mrb[0].mxu0
        %v3238 = vadd.f32 %v3125, %v3237
        %3239 = vmatprep.mubr.bf16.mxu0 %v1229
        %3240 = vmatmul.mubr.bf16.gmra.mrb[0].mxu0 %v1228
        %v3241 = vpop.f32.mrb[0].mxu0
        %v3242 = vadd.f32 %v3129, %v3241
        %v3243 = vpop.f32.mrb[0].mxu0
        %v3244 = vadd.f32 %v3131, %v3243
        %v3245 = vpop.f32.mrb[0].mxu0
        %v3246 = vadd.f32 %v3133, %v3245
        %v3247 = vpop.f32.mrb[0].mxu0
        %v3248 = vadd.f32 %v3135, %v3247
        %3249 = vmatprep.mubr.bf16.mxu0 %v1237
        %3250 = vmatmul.mubr.bf16.gmra.mrb[0].mxu0 %v1236
        %v3251 = vpop.f32.mrb[0].mxu0
        %v3252 = vadd.f32 %v3139, %v3251
        %v3253 = vpop.f32.mrb[0].mxu0
        %v3254 = vadd.f32 %v3141, %v3253
        %v3255 = vpop.f32.mrb[0].mxu0
        %v3256 = vadd.f32 %v3143, %v3255
        %v3257 = vpop.f32.mrb[0].mxu0
        %v3258 = vadd.f32 %v3145, %v3257
        %3259 = vmatprep.mubr.bf16.mxu0 %v1245
        %3260 = vmatmul.mubr.bf16.gmra.mrb[0].mxu0 %v1244
        %v3261 = vpop.f32.mrb[0].mxu0
        %v3262 = vadd.f32 %v3149, %v3261
        %v3263 = vpop.f32.mrb[0].mxu0
        %v3264 = vadd.f32 %v3151, %v3263
        %v3265 = vpop.f32.mrb[0].mxu0
        %v3266 = vadd.f32 %v3153, %v3265
        %v3267 = vpop.f32.mrb[0].mxu0
        %v3268 = vadd.f32 %v3155, %v3267
        %3269 = vmatprep.mubr.bf16.mxu0 %v1253
        %3270 = vmatmul.mubr.bf16.gmra.mrb[0].mxu0 %v1252
        %v3271 = vpop.f32.mrb[0].mxu0
        %v3272 = vadd.f32 %v3159, %v3271
        %v3273 = vpop.f32.mrb[0].mxu0
        %v3274 = vadd.f32 %v3161, %v3273
        %v3275 = vpop.f32.mrb[0].mxu0
        %v3276 = vadd.f32 %v3163, %v3275
        %v3277 = vpop.f32.mrb[0].mxu0
        %v3278 = vadd.f32 %v3165, %v3277
        %3279 = vdwg.mxu0
        %3280 = vmatprep.subr.bf16.mxu0 %v2221
        %3281 = vmatpush1.bf16.msra.mxu0 %v2220
        %3282 = vmatprep.subr.bf16.mxu0 %v2225
        %3283 = vmatpush1.bf16.msra.mxu0 %v2224
        %3284 = vmatprep.subr.bf16.mxu0 %v2229
        %3285 = vmatpush1.bf16.msra.mxu0 %v2228
        %3286 = vmatprep.subr.bf16.mxu0 %v2233
        %3287 = vmatpush1.bf16.msra.mxu0 %v2232
        %3288 = vmatprep.subr.bf16.mxu0 %v2237
        %3289 = vmatpush1.bf16.msra.mxu0 %v2236
        %3290 = vmatprep.subr.bf16.mxu0 %v2241
        %3291 = vmatpush1.bf16.msra.mxu0 %v2240
        %3292 = vmatprep.subr.bf16.mxu0 %v2245
        %3293 = vmatpush1.bf16.msra.mxu0 %v2244
        %3294 = vmatprep.subr.bf16.mxu0 %v2249
        %3295 = vmatpush1.bf16.msra.mxu0 %v2248
        %3296 = vmatprep.subr.bf16.mxu0 %v2253
        %3297 = vmatpush1.bf16.msra.mxu0 %v2252
        %3298 = vmatprep.subr.bf16.mxu0 %v2257
        %3299 = vmatpush1.bf16.msra.mxu0 %v2256
        %3300 = vmatprep.subr.bf16.mxu0 %v2261
        %3301 = vmatpush1.bf16.msra.mxu0 %v2260
        %3302 = vmatprep.subr.bf16.mxu0 %v2265
        %3303 = vmatpush1.bf16.msra.mxu0 %v2264
        %3304 = vmatprep.subr.bf16.mxu0 %v2269
        %3305 = vmatpush1.bf16.msra.mxu0 %v2268
        %3306 = vmatprep.subr.bf16.mxu0 %v2273
        %3307 = vmatpush1.bf16.msra.mxu0 %v2272
        %3308 = vmatprep.subr.bf16.mxu0 %v2277
        %3309 = vmatpush1.bf16.msra.mxu0 %v2276
        %3310 = vmatprep.subr.bf16.mxu0 %v2281
        %3311 = vmatpush1.bf16.msra.mxu0 %v2280
        %3312 = vmatprep.mubr.bf16.mxu0 %v1199
        %3313 = vmatmul.mubr.bf16.gmra.mrb[0].mxu0 %v1198
        %v3314 = vpop.f32.mrb[0].mxu0
        %v3315 = vadd.f32 %v3202, %v3314
        %v3316 = vpop.f32.mrb[0].mxu0
        %v3317 = vadd.f32 %v3204, %v3316
        %v3318 = vpop.f32.mrb[0].mxu0
        %v3319 = vadd.f32 %v3206, %v3318
        %v3320 = vpop.f32.mrb[0].mxu0
        %v3321 = vadd.f32 %v3208, %v3320
        %3322 = vmatprep.mubr.bf16.mxu0 %v1207
        %3323 = vmatmul.mubr.bf16.gmra.mrb[0].mxu0 %v1206
        %v3324 = vpop.f32.mrb[0].mxu0
        %v3325 = vadd.f32 %v3212, %v3324
        %v3326 = vpop.f32.mrb[0].mxu0
        %v3327 = vadd.f32 %v3214, %v3326
        %v3328 = vpop.f32.mrb[0].mxu0
        %v3329 = vadd.f32 %v3216, %v3328
        %v3330 = vpop.f32.mrb[0].mxu0
        %v3331 = vadd.f32 %v3218, %v3330
        %3332 = vmatprep.mubr.bf16.mxu0 %v1215
        %3333 = vmatmul.mubr.bf16.gmra.mrb[0].mxu0 %v1214
        %v3334 = vpop.f32.mrb[0].mxu0
        %v3335 = vadd.f32 %v3222, %v3334
        %v3336 = vpop.f32.mrb[0].mxu0
        %v3337 = vadd.f32 %v3224, %v3336
        %v3338 = vpop.f32.mrb[0].mxu0
        %v3339 = vadd.f32 %v3226, %v3338
        %v3340 = vpop.f32.mrb[0].mxu0
        %v3341 = vadd.f32 %v3228, %v3340
        %3342 = vmatprep.mubr.bf16.mxu0 %v1223
        %3343 = vmatmul.mubr.bf16.gmra.mrb[0].mxu0 %v1222
        %v3344 = vpop.f32.mrb[0].mxu0
        %v3345 = vadd.f32 %v3232, %v3344
        %v3346 = vpop.f32.mrb[0].mxu0
        %v3347 = vadd.f32 %v3234, %v3346
        %v3348 = vpop.f32.mrb[0].mxu0
        %v3349 = vadd.f32 %v3236, %v3348
        %v3350 = vpop.f32.mrb[0].mxu0
        %v3351 = vadd.f32 %v3238, %v3350
        %3352 = vmatprep.mubr.bf16.mxu0 %v1231
        %3353 = vmatmul.mubr.bf16.gmra.mrb[0].mxu0 %v1230
        %v3354 = vpop.f32.mrb[0].mxu0
        %v3355 = vadd.f32 %v3242, %v3354
        %v3356 = vpop.f32.mrb[0].mxu0
        %v3357 = vadd.f32 %v3244, %v3356
        %v3358 = vpop.f32.mrb[0].mxu0
        %v3359 = vadd.f32 %v3246, %v3358
        %v3360 = vpop.f32.mrb[0].mxu0
        %v3361 = vadd.f32 %v3248, %v3360
        %3362 = vmatprep.mubr.bf16.mxu0 %v1239
        %3363 = vmatmul.mubr.bf16.gmra.mrb[0].mxu0 %v1238
        %v3364 = vpop.f32.mrb[0].mxu0
        %v3365 = vadd.f32 %v3252, %v3364
        %v3366 = vpop.f32.mrb[0].mxu0
        %v3367 = vadd.f32 %v3254, %v3366
        %v3368 = vpop.f32.mrb[0].mxu0
        %v3369 = vadd.f32 %v3256, %v3368
        %v3370 = vpop.f32.mrb[0].mxu0
        %v3371 = vadd.f32 %v3258, %v3370
        %3372 = vmatprep.mubr.bf16.mxu0 %v1247
        %3373 = vmatmul.mubr.bf16.gmra.mrb[0].mxu0 %v1246
        %v3374 = vpop.f32.mrb[0].mxu0
        %v3375 = vadd.f32 %v3262, %v3374
        %v3376 = vpop.f32.mrb[0].mxu0
        %v3377 = vadd.f32 %v3264, %v3376
        %v3378 = vpop.f32.mrb[0].mxu0
        %v3379 = vadd.f32 %v3266, %v3378
        %v3380 = vpop.f32.mrb[0].mxu0
        %v3381 = vadd.f32 %v3268, %v3380
        %3382 = vmatprep.mubr.bf16.mxu0 %v1255
        %3383 = vmatmul.mubr.bf16.gmra.mrb[0].mxu0 %v1254
        %v3384 = vpop.f32.mrb[0].mxu0
        %v3385 = vadd.f32 %v3272, %v3384
        %v3386 = vpop.f32.mrb[0].mxu0
        %v3387 = vadd.f32 %v3274, %v3386
        %v3388 = vpop.f32.mrb[0].mxu0
        %v3389 = vadd.f32 %v3276, %v3388
        %v3390 = vpop.f32.mrb[0].mxu0
        %v3391 = vadd.f32 %v3278, %v3390
        %3392 = vdwg.mxu0
        %3393 = vmatprep.subr.bf16.mxu0 %v2285
        %3394 = vmatpush1.bf16.msra.mxu0 %v2284
        %3395 = vmatprep.subr.bf16.mxu0 %v2289
        %3396 = vmatpush1.bf16.msra.mxu0 %v2288
        %3397 = vmatprep.subr.bf16.mxu0 %v2293
        %3398 = vmatpush1.bf16.msra.mxu0 %v2292
        %3399 = vmatprep.subr.bf16.mxu0 %v2297
        %3400 = vmatpush1.bf16.msra.mxu0 %v2296
        %3401 = vmatprep.subr.bf16.mxu0 %v2301
        %3402 = vmatpush1.bf16.msra.mxu0 %v2300
        %3403 = vmatprep.subr.bf16.mxu0 %v2305
        %3404 = vmatpush1.bf16.msra.mxu0 %v2304
        %3405 = vmatprep.subr.bf16.mxu0 %v2309
        %3406 = vmatpush1.bf16.msra.mxu0 %v2308
        %3407 = vmatprep.subr.bf16.mxu0 %v2313
        %3408 = vmatpush1.bf16.msra.mxu0 %v2312
        %3409 = vmatprep.subr.bf16.mxu0 %v2317
        %3410 = vmatpush1.bf16.msra.mxu0 %v2316
        %3411 = vmatprep.subr.bf16.mxu0 %v2321
        %3412 = vmatpush1.bf16.msra.mxu0 %v2320
        %3413 = vmatprep.subr.bf16.mxu0 %v2325
        %3414 = vmatpush1.bf16.msra.mxu0 %v2324
        %3415 = vmatprep.subr.bf16.mxu0 %v2329
        %3416 = vmatpush1.bf16.msra.mxu0 %v2328
        %3417 = vmatprep.subr.bf16.mxu0 %v2333
        %3418 = vmatpush1.bf16.msra.mxu0 %v2332
        %3419 = vmatprep.subr.bf16.mxu0 %v2337
        %3420 = vmatpush1.bf16.msra.mxu0 %v2336
        %3421 = vmatprep.subr.bf16.mxu0 %v2341
        %3422 = vmatpush1.bf16.msra.mxu0 %v2340
        %3423 = vmatprep.subr.bf16.mxu0 %v2345
        %3424 = vmatpush1.bf16.msra.mxu0 %v2344
        %3425 = vmatprep.mubr.bf16.mxu0 %v1201
        %3426 = vmatmul.mubr.bf16.gmra.mrb[0].mxu0 %v1200
        %v3427 = vpop.f32.mrb[0].mxu0
        %v3428 = vadd.f32 %v3315, %v3427
        %v3429 = vpop.f32.mrb[0].mxu0
        %v3430 = vadd.f32 %v3317, %v3429
        %v3431 = vpop.f32.mrb[0].mxu0
        %v3432 = vadd.f32 %v3319, %v3431
        %v3433 = vpop.f32.mrb[0].mxu0
        %v3434 = vadd.f32 %v3321, %v3433
        %3435 = vmatprep.mubr.bf16.mxu0 %v1209
        %3436 = vmatmul.mubr.bf16.gmra.mrb[0].mxu0 %v1208
        %v3437 = vpop.f32.mrb[0].mxu0
        %v3438 = vadd.f32 %v3325, %v3437
        %v3439 = vpop.f32.mrb[0].mxu0
        %v3440 = vadd.f32 %v3327, %v3439
        %v3441 = vpop.f32.mrb[0].mxu0
        %v3442 = vadd.f32 %v3329, %v3441
        %v3443 = vpop.f32.mrb[0].mxu0
        %v3444 = vadd.f32 %v3331, %v3443
        %3445 = vmatprep.mubr.bf16.mxu0 %v1217
        %3446 = vmatmul.mubr.bf16.gmra.mrb[0].mxu0 %v1216
        %v3447 = vpop.f32.mrb[0].mxu0
        %v3448 = vadd.f32 %v3335, %v3447
        %v3449 = vpop.f32.mrb[0].mxu0
        %v3450 = vadd.f32 %v3337, %v3449
        %v3451 = vpop.f32.mrb[0].mxu0
        %v3452 = vadd.f32 %v3339, %v3451
        %v3453 = vpop.f32.mrb[0].mxu0
        %v3454 = vadd.f32 %v3341, %v3453
        %3455 = vmatprep.mubr.bf16.mxu0 %v1225
        %3456 = vmatmul.mubr.bf16.gmra.mrb[0].mxu0 %v1224
        %v3457 = vpop.f32.mrb[0].mxu0
        %v3458 = vadd.f32 %v3345, %v3457
        %v3459 = vpop.f32.mrb[0].mxu0
        %v3460 = vadd.f32 %v3347, %v3459
        %v3461 = vpop.f32.mrb[0].mxu0
        %v3462 = vadd.f32 %v3349, %v3461
        %v3463 = vpop.f32.mrb[0].mxu0
        %v3464 = vadd.f32 %v3351, %v3463
        %3465 = vmatprep.mubr.bf16.mxu0 %v1233
        %3466 = vmatmul.mubr.bf16.gmra.mrb[0].mxu0 %v1232
        %v3467 = vpop.f32.mrb[0].mxu0
        %v3468 = vadd.f32 %v3355, %v3467
        %v3469 = vpop.f32.mrb[0].mxu0
        %v3470 = vadd.f32 %v3357, %v3469
        %v3471 = vpop.f32.mrb[0].mxu0
        %v3472 = vadd.f32 %v3359, %v3471
        %v3473 = vpop.f32.mrb[0].mxu0
        %v3474 = vadd.f32 %v3361, %v3473
        %3475 = vmatprep.mubr.bf16.mxu0 %v1241
        %3476 = vmatmul.mubr.bf16.gmra.mrb[0].mxu0 %v1240
        %v3477 = vpop.f32.mrb[0].mxu0
        %v3478 = vadd.f32 %v3365, %v3477
        %v3479 = vpop.f32.mrb[0].mxu0
        %v3480 = vadd.f32 %v3367, %v3479
        %v3481 = vpop.f32.mrb[0].mxu0
        %v3482 = vadd.f32 %v3369, %v3481
        %v3483 = vpop.f32.mrb[0].mxu0
        %v3484 = vadd.f32 %v3371, %v3483
        %3485 = vmatprep.mubr.bf16.mxu0 %v1249
        %3486 = vmatmul.mubr.bf16.gmra.mrb[0].mxu0 %v1248
        %v3487 = vpop.f32.mrb[0].mxu0
        %v3488 = vadd.f32 %v3375, %v3487
        %v3489 = vpop.f32.mrb[0].mxu0
        %v3490 = vadd.f32 %v3377, %v3489
        %v3491 = vpop.f32.mrb[0].mxu0
        %v3492 = vadd.f32 %v3379, %v3491
        %v3493 = vpop.f32.mrb[0].mxu0
        %v3494 = vadd.f32 %v3381, %v3493
        %3495 = vmatprep.mubr.bf16.mxu0 %v1257
        %3496 = vmatmul.mubr.bf16.gmra.mrb[0].mxu0 %v1256
        %v3497 = vpop.f32.mrb[0].mxu0
        %v3498 = vadd.f32 %v3385, %v3497
        %v3499 = vpop.f32.mrb[0].mxu0
        %v3500 = vadd.f32 %v3387, %v3499
        %v3501 = vpop.f32.mrb[0].mxu0
        %v3502 = vadd.f32 %v3389, %v3501
        %v3503 = vpop.f32.mrb[0].mxu0
        %v3504 = vadd.f32 %v3391, %v3503
        %3505 = vdwg.mxu0
        %v3506 = vmax.f32 %v2976, 0.0
        %v3507 = vmax.f32 %v2978, 0.0
        %v3508 = vmax.f32 %v3428, 0.0
        %v3509 = vmax.f32 %v3430, 0.0
        %v3510 = vmax.f32 %v2980, 0.0
        %v3511 = vmax.f32 %v2982, 0.0
        %v3512 = vmax.f32 %v3432, 0.0
        %v3513 = vmax.f32 %v3434, 0.0
        %v3514 = vmax.f32 %v2986, 0.0
        %v3515 = vmax.f32 %v2988, 0.0
        %v3516 = vmax.f32 %v3438, 0.0
        %v3517 = vmax.f32 %v3440, 0.0
        %v3518 = vmax.f32 %v2990, 0.0
        %v3519 = vmax.f32 %v2992, 0.0
        %v3520 = vmax.f32 %v3442, 0.0
        %v3521 = vmax.f32 %v3444, 0.0
        %v3522 = vmax.f32 %v2996, 0.0
        %v3523 = vmax.f32 %v2998, 0.0
        %v3524 = vmax.f32 %v3448, 0.0
        %v3525 = vmax.f32 %v3450, 0.0
        %v3526 = vmax.f32 %v3000, 0.0
        %v3527 = vmax.f32 %v3002, 0.0
        %v3528 = vmax.f32 %v3452, 0.0
        %v3529 = vmax.f32 %v3454, 0.0
        %v3530 = vmax.f32 %v3006, 0.0
        %v3531 = vmax.f32 %v3008, 0.0
        %v3532 = vmax.f32 %v3458, 0.0
        %v3533 = vmax.f32 %v3460, 0.0
        %v3534 = vmax.f32 %v3010, 0.0
        %v3535 = vmax.f32 %v3012, 0.0
        %v3536 = vmax.f32 %v3462, 0.0
        %v3537 = vmax.f32 %v3464, 0.0
        %v3538 = vmax.f32 %v3016, 0.0
        %v3539 = vmax.f32 %v3018, 0.0
        %v3540 = vmax.f32 %v3468, 0.0
        %v3541 = vmax.f32 %v3470, 0.0
        %v3542 = vmax.f32 %v3020, 0.0
        %v3543 = vmax.f32 %v3022, 0.0
        %v3544 = vmax.f32 %v3472, 0.0
        %v3545 = vmax.f32 %v3474, 0.0
        %v3546 = vmax.f32 %v3026, 0.0
        %v3547 = vmax.f32 %v3028, 0.0
        %v3548 = vmax.f32 %v3478, 0.0
        %v3549 = vmax.f32 %v3480, 0.0
        %v3550 = vmax.f32 %v3030, 0.0
        %v3551 = vmax.f32 %v3032, 0.0
        %v3552 = vmax.f32 %v3482, 0.0
        %v3553 = vmax.f32 %v3484, 0.0
        %v3554 = vmax.f32 %v3036, 0.0
        %v3555 = vmax.f32 %v3038, 0.0
        %v3556 = vmax.f32 %v3488, 0.0
        %v3557 = vmax.f32 %v3490, 0.0
        %v3558 = vmax.f32 %v3040, 0.0
        %v3559 = vmax.f32 %v3042, 0.0
        %v3560 = vmax.f32 %v3492, 0.0
        %v3561 = vmax.f32 %v3494, 0.0
        %v3562 = vmax.f32 %v3046, 0.0
        %v3563 = vmax.f32 %v3048, 0.0
        %v3564 = vmax.f32 %v3498, 0.0
        %v3565 = vmax.f32 %v3500, 0.0
        %v3566 = vmax.f32 %v3050, 0.0
        %v3567 = vmax.f32 %v3052, 0.0
        %v3568 = vmax.f32 %v3502, 0.0
        %v3569 = vmax.f32 %v3504, 0.0
        %v3570 = vsel %vm644, 1, 0
        %v3571 = vsel %vm645, 1, 0
        %v3572 = vsel %vm646, 1, 0
        %v3573 = vsel %vm647, 1, 0
        %v3574 = vsel %vm648, 1, 0
        %v3575 = vsel %vm649, 1, 0
        %v3576 = vsel %vm650, 1, 0
        %v3577 = vsel %vm651, 1, 0
        %v3578 = vsel %vm652, 1, 0
        %v3579 = vsel %vm653, 1, 0
        %v3580 = vsel %vm654, 1, 0
        %v3581 = vsel %vm655, 1, 0
        %v3582 = vsel %vm656, 1, 0
        %v3583 = vsel %vm657, 1, 0
        %v3584 = vsel %vm658, 1, 0
        %v3585 = vsel %vm659, 1, 0
        %vm3586 = vcmp.eq.s32.totalorder %v3570, 1
        %vm3587 = vcmp.eq.s32.totalorder %v3571, 1
        %vm3588 = vcmp.eq.s32.totalorder %v3572, 1
        %vm3589 = vcmp.eq.s32.totalorder %v3573, 1
        %vm3590 = vcmp.eq.s32.totalorder %v3574, 1
        %vm3591 = vcmp.eq.s32.totalorder %v3575, 1
        %vm3592 = vcmp.eq.s32.totalorder %v3576, 1
        %vm3593 = vcmp.eq.s32.totalorder %v3577, 1
        %vm3594 = vcmp.eq.s32.totalorder %v3578, 1
        %vm3595 = vcmp.eq.s32.totalorder %v3579, 1
        %vm3596 = vcmp.eq.s32.totalorder %v3580, 1
        %vm3597 = vcmp.eq.s32.totalorder %v3581, 1
        %vm3598 = vcmp.eq.s32.totalorder %v3582, 1
        %vm3599 = vcmp.eq.s32.totalorder %v3583, 1
        %vm3600 = vcmp.eq.s32.totalorder %v3584, 1
        %vm3601 = vcmp.eq.s32.totalorder %v3585, 1
        %v3602 = vsel %vm3586, %v3506, 0.0
        %v3603 = vsel %vm3586, %v3507, 0.0
        %v3604 = vsel %vm3586, %v3508, 0.0
        %v3605 = vsel %vm3586, %v3509, 0.0
        %v3606 = vsel %vm3587, %v3510, 0.0
        %v3607 = vsel %vm3587, %v3511, 0.0
        %v3608 = vsel %vm3587, %v3512, 0.0
        %v3609 = vsel %vm3587, %v3513, 0.0
        %v3610 = vsel %vm3588, %v3514, 0.0
        %v3611 = vsel %vm3588, %v3515, 0.0
        %v3612 = vsel %vm3588, %v3516, 0.0
        %v3613 = vsel %vm3588, %v3517, 0.0
        %v3614 = vsel %vm3589, %v3518, 0.0
        %v3615 = vsel %vm3589, %v3519, 0.0
        %v3616 = vsel %vm3589, %v3520, 0.0
        %v3617 = vsel %vm3589, %v3521, 0.0
        %v3618 = vsel %vm3590, %v3522, 0.0
        %v3619 = vsel %vm3590, %v3523, 0.0
        %v3620 = vsel %vm3590, %v3524, 0.0
        %v3621 = vsel %vm3590, %v3525, 0.0
        %v3622 = vsel %vm3591, %v3526, 0.0
        %v3623 = vsel %vm3591, %v3527, 0.0
        %v3624 = vsel %vm3591, %v3528, 0.0
        %v3625 = vsel %vm3591, %v3529, 0.0
        %v3626 = vsel %vm3592, %v3530, 0.0
        %v3627 = vsel %vm3592, %v3531, 0.0
        %v3628 = vsel %vm3592, %v3532, 0.0
        %v3629 = vsel %vm3592, %v3533, 0.0
        %v3630 = vsel %vm3593, %v3534, 0.0
        %v3631 = vsel %vm3593, %v3535, 0.0
        %v3632 = vsel %vm3593, %v3536, 0.0
        %v3633 = vsel %vm3593, %v3537, 0.0
        %v3634 = vsel %vm3594, %v3538, 0.0
        %v3635 = vsel %vm3594, %v3539, 0.0
        %v3636 = vsel %vm3594, %v3540, 0.0
        %v3637 = vsel %vm3594, %v3541, 0.0
        %v3638 = vsel %vm3595, %v3542, 0.0
        %v3639 = vsel %vm3595, %v3543, 0.0
        %v3640 = vsel %vm3595, %v3544, 0.0
        %v3641 = vsel %vm3595, %v3545, 0.0
        %v3642 = vsel %vm3596, %v3546, 0.0
        %v3643 = vsel %vm3596, %v3547, 0.0
        %v3644 = vsel %vm3596, %v3548, 0.0
        %v3645 = vsel %vm3596, %v3549, 0.0
        %v3646 = vsel %vm3597, %v3550, 0.0
        %v3647 = vsel %vm3597, %v3551, 0.0
        %v3648 = vsel %vm3597, %v3552, 0.0
        %v3649 = vsel %vm3597, %v3553, 0.0
        %v3650 = vsel %vm3598, %v3554, 0.0
        %v3651 = vsel %vm3598, %v3555, 0.0
        %v3652 = vsel %vm3598, %v3556, 0.0
        %v3653 = vsel %vm3598, %v3557, 0.0
        %v3654 = vsel %vm3599, %v3558, 0.0
        %v3655 = vsel %vm3599, %v3559, 0.0
        %v3656 = vsel %vm3599, %v3560, 0.0
        %v3657 = vsel %vm3599, %v3561, 0.0
        %v3658 = vsel %vm3600, %v3562, 0.0
        %v3659 = vsel %vm3600, %v3563, 0.0
        %v3660 = vsel %vm3600, %v3564, 0.0
        %v3661 = vsel %vm3600, %v3565, 0.0
        %v3662 = vsel %vm3601, %v3566, 0.0
        %v3663 = vsel %vm3601, %v3567, 0.0
        %v3664 = vsel %vm3601, %v3568, 0.0
        %v3665 = vsel %vm3601, %v3569, 0.0
        %v3666 = vpack.c.bf16 %v3606, %v3602
        %v3667 = vpack.c.bf16 %v3607, %v3603
        %v3668 = vpack.c.bf16 %v3608, %v3604
        %v3669 = vpack.c.bf16 %v3609, %v3605
        %v3670 = vpack.c.bf16 %v3614, %v3610
        %v3671 = vpack.c.bf16 %v3615, %v3611
        %v3672 = vpack.c.bf16 %v3616, %v3612
        %v3673 = vpack.c.bf16 %v3617, %v3613
        %v3674 = vpack.c.bf16 %v3622, %v3618
        %v3675 = vpack.c.bf16 %v3623, %v3619
        %v3676 = vpack.c.bf16 %v3624, %v3620
        %v3677 = vpack.c.bf16 %v3625, %v3621
        %v3678 = vpack.c.bf16 %v3630, %v3626
        %v3679 = vpack.c.bf16 %v3631, %v3627
        %v3680 = vpack.c.bf16 %v3632, %v3628
        %v3681 = vpack.c.bf16 %v3633, %v3629
        %v3682 = vpack.c.bf16 %v3638, %v3634
        %v3683 = vpack.c.bf16 %v3639, %v3635
        %v3684 = vpack.c.bf16 %v3640, %v3636
        %v3685 = vpack.c.bf16 %v3641, %v3637
        %v3686 = vpack.c.bf16 %v3646, %v3642
        %v3687 = vpack.c.bf16 %v3647, %v3643
        %v3688 = vpack.c.bf16 %v3648, %v3644
        %v3689 = vpack.c.bf16 %v3649, %v3645
        %v3690 = vpack.c.bf16 %v3654, %v3650
        %v3691 = vpack.c.bf16 %v3655, %v3651
        %v3692 = vpack.c.bf16 %v3656, %v3652
        %v3693 = vpack.c.bf16 %v3657, %v3653
        %v3694 = vpack.c.bf16 %v3662, %v3658
        %v3695 = vpack.c.bf16 %v3663, %v3659
        %v3696 = vpack.c.bf16 %v3664, %v3660
        %v3697 = vpack.c.bf16 %v3665, %v3661
        %v3698 = vld [vmem:[#allocation12] sm:$0xff]
        %v3699 = vld [vmem:[#allocation12 + $0x8] sm:$0xff]
        %v3700 = vld [vmem:[#allocation12 + $0x10] sm:$0xff]
        %v3701 = vld [vmem:[#allocation12 + $0x18] sm:$0xff]
        %v3702 = vld [vmem:[#allocation12 + $0x20] sm:$0xff]
        %v3703 = vld [vmem:[#allocation12 + $0x28] sm:$0xff]
        %v3704 = vld [vmem:[#allocation12 + $0x30] sm:$0xff]
        %v3705 = vld [vmem:[#allocation12 + $0x38] sm:$0xff]
        %v3706 = vld [vmem:[#allocation12 + $0x40] sm:$0xff]
        %v3707 = vld [vmem:[#allocation12 + $0x48] sm:$0xff]
        %v3708 = vld [vmem:[#allocation12 + $0x50] sm:$0xff]
        %v3709 = vld [vmem:[#allocation12 + $0x58] sm:$0xff]
        %v3710 = vld [vmem:[#allocation12 + $0x60] sm:$0xff]
        %v3711 = vld [vmem:[#allocation12 + $0x68] sm:$0xff]
        %v3712 = vld [vmem:[#allocation12 + $0x70] sm:$0xff]
        %v3713 = vld [vmem:[#allocation12 + $0x78] sm:$0xff]
        %v3714 = vld [vmem:[#allocation12 + $0x80] sm:$0xff]
        %v3715 = vld [vmem:[#allocation12 + $0x88] sm:$0xff]
        %v3716 = vld [vmem:[#allocation12 + $0x90] sm:$0xff]
        %v3717 = vld [vmem:[#allocation12 + $0x98] sm:$0xff]
        %v3718 = vld [vmem:[#allocation12 + $0xa0] sm:$0xff]
        %v3719 = vld [vmem:[#allocation12 + $0xa8] sm:$0xff]
        %v3720 = vld [vmem:[#allocation12 + $0xb0] sm:$0xff]
        %v3721 = vld [vmem:[#allocation12 + $0xb8] sm:$0xff]
        %v3722 = vld [vmem:[#allocation12 + $0xc0] sm:$0xff]
        %v3723 = vld [vmem:[#allocation12 + $0xc8] sm:$0xff]
        %v3724 = vld [vmem:[#allocation12 + $0xd0] sm:$0xff]
        %v3725 = vld [vmem:[#allocation12 + $0xd8] sm:$0xff]
        %v3726 = vld [vmem:[#allocation12 + $0xe0] sm:$0xff]
        %v3727 = vld [vmem:[#allocation12 + $0xe8] sm:$0xff]
        %v3728 = vld [vmem:[#allocation12 + $0xf0] sm:$0xff]
        %v3729 = vld [vmem:[#allocation12 + $0xf8] sm:$0xff]
        %v3730 = vld [vmem:[#allocation12 + $0x100] sm:$0xff]
        %v3731 = vld [vmem:[#allocation12 + $0x108] sm:$0xff]
        %v3732 = vld [vmem:[#allocation12 + $0x110] sm:$0xff]
        %v3733 = vld [vmem:[#allocation12 + $0x118] sm:$0xff]
        %v3734 = vld [vmem:[#allocation12 + $0x120] sm:$0xff]
        %v3735 = vld [vmem:[#allocation12 + $0x128] sm:$0xff]
        %v3736 = vld [vmem:[#allocation12 + $0x130] sm:$0xff]
        %v3737 = vld [vmem:[#allocation12 + $0x138] sm:$0xff]
        %v3738 = vld [vmem:[#allocation12 + $0x140] sm:$0xff]
        %v3739 = vld [vmem:[#allocation12 + $0x148] sm:$0xff]
        %v3740 = vld [vmem:[#allocation12 + $0x150] sm:$0xff]
        %v3741 = vld [vmem:[#allocation12 + $0x158] sm:$0xff]
        %v3742 = vld [vmem:[#allocation12 + $0x160] sm:$0xff]
        %v3743 = vld [vmem:[#allocation12 + $0x168] sm:$0xff]
        %v3744 = vld [vmem:[#allocation12 + $0x170] sm:$0xff]
        %v3745 = vld [vmem:[#allocation12 + $0x178] sm:$0xff]
        %v3746 = vld [vmem:[#allocation12 + $0x180] sm:$0xff]
        %v3747 = vld [vmem:[#allocation12 + $0x188] sm:$0xff]
        %v3748 = vld [vmem:[#allocation12 + $0x190] sm:$0xff]
        %v3749 = vld [vmem:[#allocation12 + $0x198] sm:$0xff]
        %v3750 = vld [vmem:[#allocation12 + $0x1a0] sm:$0xff]
        %v3751 = vld [vmem:[#allocation12 + $0x1a8] sm:$0xff]
        %v3752 = vld [vmem:[#allocation12 + $0x1b0] sm:$0xff]
        %v3753 = vld [vmem:[#allocation12 + $0x1b8] sm:$0xff]
        %v3754 = vld [vmem:[#allocation12 + $0x1c0] sm:$0xff]
        %v3755 = vld [vmem:[#allocation12 + $0x1c8] sm:$0xff]
        %v3756 = vld [vmem:[#allocation12 + $0x1d0] sm:$0xff]
        %v3757 = vld [vmem:[#allocation12 + $0x1d8] sm:$0xff]
        %v3758 = vld [vmem:[#allocation12 + $0x1e0] sm:$0xff]
        %v3759 = vld [vmem:[#allocation12 + $0x1e8] sm:$0xff]
        %v3760 = vld [vmem:[#allocation12 + $0x1f0] sm:$0xff]
        %v3761 = vld [vmem:[#allocation12 + $0x1f8] sm:$0xff]
        %v3762 = vld [vmem:[#allocation14] sm:$0x3]
        %v3764 = vlaneseq
        %v3765 = vshrl.u32 %v3764, 7
        %v3766 = vsub.s32 0, %v3765
        %v3767 = vrot.slane %v3762, %v3766
        %v3768 = vlaneseq
        %v3769 = vshrl.u32 %v3768, 7
        %v3770 = vsub.s32 1, %v3769
        %v3771 = vrot.slane %v3762, %v3770
        %v3838 = vunpack.c.l.b16 %v3698
        %v3839 = vunpack.c.h.b16 %v3698
        %v3840 = vunpack.c.l.b16 %v3699
        %v3841 = vunpack.c.h.b16 %v3699
        %v3842 = vunpack.c.l.b16 %v3700
        %v3843 = vunpack.c.h.b16 %v3700
        %v3844 = vunpack.c.l.b16 %v3701
        %v3845 = vunpack.c.h.b16 %v3701
        %v3846 = vunpack.c.l.b16 %v3702
        %v3847 = vunpack.c.h.b16 %v3702
        %v3848 = vunpack.c.l.b16 %v3703
        %v3849 = vunpack.c.h.b16 %v3703
        %v3850 = vunpack.c.l.b16 %v3704
        %v3851 = vunpack.c.h.b16 %v3704
        %v3852 = vunpack.c.l.b16 %v3705
        %v3853 = vunpack.c.h.b16 %v3705
        %v3854 = vunpack.c.l.b16 %v3706
        %v3855 = vunpack.c.h.b16 %v3706
        %v3856 = vunpack.c.l.b16 %v3707
        %v3857 = vunpack.c.h.b16 %v3707
        %v3858 = vunpack.c.l.b16 %v3708
        %v3859 = vunpack.c.h.b16 %v3708
        %v3860 = vunpack.c.l.b16 %v3709
        %v3861 = vunpack.c.h.b16 %v3709
        %v3862 = vunpack.c.l.b16 %v3710
        %v3863 = vunpack.c.h.b16 %v3710
        %v3864 = vunpack.c.l.b16 %v3711
        %v3865 = vunpack.c.h.b16 %v3711
        %v3866 = vunpack.c.l.b16 %v3712
        %v3867 = vunpack.c.h.b16 %v3712
        %v3868 = vunpack.c.l.b16 %v3713
        %v3869 = vunpack.c.h.b16 %v3713
        %v3870 = vunpack.c.l.b16 %v3714
        %v3871 = vunpack.c.h.b16 %v3714
        %v3872 = vunpack.c.l.b16 %v3715
        %v3873 = vunpack.c.h.b16 %v3715
        %v3874 = vunpack.c.l.b16 %v3716
        %v3875 = vunpack.c.h.b16 %v3716
        %v3876 = vunpack.c.l.b16 %v3717
        %v3877 = vunpack.c.h.b16 %v3717
        %v3878 = vunpack.c.l.b16 %v3718
        %v3879 = vunpack.c.h.b16 %v3718
        %v3880 = vunpack.c.l.b16 %v3719
        %v3881 = vunpack.c.h.b16 %v3719
        %v3882 = vunpack.c.l.b16 %v3720
        %v3883 = vunpack.c.h.b16 %v3720
        %v3884 = vunpack.c.l.b16 %v3721
        %v3885 = vunpack.c.h.b16 %v3721
        %v3886 = vunpack.c.l.b16 %v3722
        %v3887 = vunpack.c.h.b16 %v3722
        %v3888 = vunpack.c.l.b16 %v3723
        %v3889 = vunpack.c.h.b16 %v3723
        %v3890 = vunpack.c.l.b16 %v3724
        %v3891 = vunpack.c.h.b16 %v3724
        %v3892 = vunpack.c.l.b16 %v3725
        %v3893 = vunpack.c.h.b16 %v3725
        %v3894 = vunpack.c.l.b16 %v3726
        %v3895 = vunpack.c.h.b16 %v3726
        %v3896 = vunpack.c.l.b16 %v3727
        %v3897 = vunpack.c.h.b16 %v3727
        %v3898 = vunpack.c.l.b16 %v3728
        %v3899 = vunpack.c.h.b16 %v3728
        %v3900 = vunpack.c.l.b16 %v3729
        %v3901 = vunpack.c.h.b16 %v3729
        %v3902 = vunpack.c.l.b16 %v3730
        %v3903 = vunpack.c.h.b16 %v3730
        %v3904 = vunpack.c.l.b16 %v3731
        %v3905 = vunpack.c.h.b16 %v3731
        %v3906 = vunpack.c.l.b16 %v3732
        %v3907 = vunpack.c.h.b16 %v3732
        %v3908 = vunpack.c.l.b16 %v3733
        %v3909 = vunpack.c.h.b16 %v3733
        %v3910 = vunpack.c.l.b16 %v3734
        %v3911 = vunpack.c.h.b16 %v3734
        %v3912 = vunpack.c.l.b16 %v3735
        %v3913 = vunpack.c.h.b16 %v3735
        %v3914 = vunpack.c.l.b16 %v3736
        %v3915 = vunpack.c.h.b16 %v3736
        %v3916 = vunpack.c.l.b16 %v3737
        %v3917 = vunpack.c.h.b16 %v3737
        %v3918 = vunpack.c.l.b16 %v3738
        %v3919 = vunpack.c.h.b16 %v3738
        %v3920 = vunpack.c.l.b16 %v3739
        %v3921 = vunpack.c.h.b16 %v3739
        %v3922 = vunpack.c.l.b16 %v3740
        %v3923 = vunpack.c.h.b16 %v3740
        %v3924 = vunpack.c.l.b16 %v3741
        %v3925 = vunpack.c.h.b16 %v3741
        %v3926 = vunpack.c.l.b16 %v3742
        %v3927 = vunpack.c.h.b16 %v3742
        %v3928 = vunpack.c.l.b16 %v3743
        %v3929 = vunpack.c.h.b16 %v3743
        %v3930 = vunpack.c.l.b16 %v3744
        %v3931 = vunpack.c.h.b16 %v3744
        %v3932 = vunpack.c.l.b16 %v3745
        %v3933 = vunpack.c.h.b16 %v3745
        %v3934 = vunpack.c.l.b16 %v3746
        %v3935 = vunpack.c.h.b16 %v3746
        %v3936 = vunpack.c.l.b16 %v3747
        %v3937 = vunpack.c.h.b16 %v3747
        %v3938 = vunpack.c.l.b16 %v3748
        %v3939 = vunpack.c.h.b16 %v3748
        %v3940 = vunpack.c.l.b16 %v3749
        %v3941 = vunpack.c.h.b16 %v3749
        %v3942 = vunpack.c.l.b16 %v3750
        %v3943 = vunpack.c.h.b16 %v3750
        %v3944 = vunpack.c.l.b16 %v3751
        %v3945 = vunpack.c.h.b16 %v3751
        %v3946 = vunpack.c.l.b16 %v3752
        %v3947 = vunpack.c.h.b16 %v3752
        %v3948 = vunpack.c.l.b16 %v3753
        %v3949 = vunpack.c.h.b16 %v3753
        %v3950 = vunpack.c.l.b16 %v3754
        %v3951 = vunpack.c.h.b16 %v3754
        %v3952 = vunpack.c.l.b16 %v3755
        %v3953 = vunpack.c.h.b16 %v3755
        %v3954 = vunpack.c.l.b16 %v3756
        %v3955 = vunpack.c.h.b16 %v3756
        %v3956 = vunpack.c.l.b16 %v3757
        %v3957 = vunpack.c.h.b16 %v3757
        %v3958 = vunpack.c.l.b16 %v3758
        %v3959 = vunpack.c.h.b16 %v3758
        %v3960 = vunpack.c.l.b16 %v3759
        %v3961 = vunpack.c.h.b16 %v3759
        %v3962 = vunpack.c.l.b16 %v3760
        %v3963 = vunpack.c.h.b16 %v3760
        %v3964 = vunpack.c.l.b16 %v3761
        %v3965 = vunpack.c.h.b16 %v3761
        %v3966 = vpack.c.b16 %v3840, %v3838
        %v3967 = vpack.c.b16 %v3841, %v3839
        %v3968 = vpack.c.b16 %v3844, %v3842
        %v3969 = vpack.c.b16 %v3845, %v3843
        %v3970 = vpack.c.b16 %v3848, %v3846
        %v3971 = vpack.c.b16 %v3849, %v3847
        %v3972 = vpack.c.b16 %v3852, %v3850
        %v3973 = vpack.c.b16 %v3853, %v3851
        %v3974 = vpack.c.b16 %v3856, %v3854
        %v3975 = vpack.c.b16 %v3857, %v3855
        %v3976 = vpack.c.b16 %v3860, %v3858
        %v3977 = vpack.c.b16 %v3861, %v3859
        %v3978 = vpack.c.b16 %v3864, %v3862
        %v3979 = vpack.c.b16 %v3865, %v3863
        %v3980 = vpack.c.b16 %v3868, %v3866
        %v3981 = vpack.c.b16 %v3869, %v3867
        %v3982 = vpack.c.b16 %v3872, %v3870
        %v3983 = vpack.c.b16 %v3873, %v3871
        %v3984 = vpack.c.b16 %v3876, %v3874
        %v3985 = vpack.c.b16 %v3877, %v3875
        %v3986 = vpack.c.b16 %v3880, %v3878
        %v3987 = vpack.c.b16 %v3881, %v3879
        %v3988 = vpack.c.b16 %v3884, %v3882
        %v3989 = vpack.c.b16 %v3885, %v3883
        %v3990 = vpack.c.b16 %v3888, %v3886
        %v3991 = vpack.c.b16 %v3889, %v3887
        %v3992 = vpack.c.b16 %v3892, %v3890
        %v3993 = vpack.c.b16 %v3893, %v3891
        %v3994 = vpack.c.b16 %v3896, %v3894
        %v3995 = vpack.c.b16 %v3897, %v3895
        %v3996 = vpack.c.b16 %v3900, %v3898
        %v3997 = vpack.c.b16 %v3901, %v3899
        %v3998 = vpack.c.b16 %v3904, %v3902
        %v3999 = vpack.c.b16 %v3905, %v3903
        %v4000 = vpack.c.b16 %v3908, %v3906
        %v4001 = vpack.c.b16 %v3909, %v3907
        %v4002 = vpack.c.b16 %v3912, %v3910
        %v4003 = vpack.c.b16 %v3913, %v3911
        %v4004 = vpack.c.b16 %v3916, %v3914
        %v4005 = vpack.c.b16 %v3917, %v3915
        %v4006 = vpack.c.b16 %v3920, %v3918
        %v4007 = vpack.c.b16 %v3921, %v3919
        %v4008 = vpack.c.b16 %v3924, %v3922
        %v4009 = vpack.c.b16 %v3925, %v3923
        %v4010 = vpack.c.b16 %v3928, %v3926
        %v4011 = vpack.c.b16 %v3929, %v3927
        %v4012 = vpack.c.b16 %v3932, %v3930
        %v4013 = vpack.c.b16 %v3933, %v3931
        %v4014 = vpack.c.b16 %v3936, %v3934
        %v4015 = vpack.c.b16 %v3937, %v3935
        %v4016 = vpack.c.b16 %v3940, %v3938
        %v4017 = vpack.c.b16 %v3941, %v3939
        %v4018 = vpack.c.b16 %v3944, %v3942
        %v4019 = vpack.c.b16 %v3945, %v3943
        %v4020 = vpack.c.b16 %v3948, %v3946
        %v4021 = vpack.c.b16 %v3949, %v3947
        %v4022 = vpack.c.b16 %v3952, %v3950
        %v4023 = vpack.c.b16 %v3953, %v3951
        %v4024 = vpack.c.b16 %v3956, %v3954
        %v4025 = vpack.c.b16 %v3957, %v3955
        %v4026 = vpack.c.b16 %v3960, %v3958
        %v4027 = vpack.c.b16 %v3961, %v3959
        %v4028 = vpack.c.b16 %v3964, %v3962
        %v4029 = vpack.c.b16 %v3965, %v3963
        %4094 = vmatprep.subr.bf16.mxu0 %v3967
        %4095 = vmatpush1.bf16.msra.mxu0 %v3966
        %4096 = vmatprep.subr.bf16.mxu0 %v3969
        %4097 = vmatpush1.bf16.msra.mxu0 %v3968
        %4098 = vmatprep.subr.bf16.mxu0 %v3971
        %4099 = vmatpush1.bf16.msra.mxu0 %v3970
        %4100 = vmatprep.subr.bf16.mxu0 %v3973
        %4101 = vmatpush1.bf16.msra.mxu0 %v3972
        %4102 = vmatprep.subr.bf16.mxu0 %v3975
        %4103 = vmatpush1.bf16.msra.mxu0 %v3974
        %4104 = vmatprep.subr.bf16.mxu0 %v3977
        %4105 = vmatpush1.bf16.msra.mxu0 %v3976
        %4106 = vmatprep.subr.bf16.mxu0 %v3979
        %4107 = vmatpush1.bf16.msra.mxu0 %v3978
        %4108 = vmatprep.subr.bf16.mxu0 %v3981
        %4109 = vmatpush1.bf16.msra.mxu0 %v3980
        %4110 = vmatprep.subr.bf16.mxu0 %v3983
        %4111 = vmatpush1.bf16.msra.mxu0 %v3982
        %4112 = vmatprep.subr.bf16.mxu0 %v3985
        %4113 = vmatpush1.bf16.msra.mxu0 %v3984
        %4114 = vmatprep.subr.bf16.mxu0 %v3987
        %4115 = vmatpush1.bf16.msra.mxu0 %v3986
        %4116 = vmatprep.subr.bf16.mxu0 %v3989
        %4117 = vmatpush1.bf16.msra.mxu0 %v3988
        %4118 = vmatprep.subr.bf16.mxu0 %v3991
        %4119 = vmatpush1.bf16.msra.mxu0 %v3990
        %4120 = vmatprep.subr.bf16.mxu0 %v3993
        %4121 = vmatpush1.bf16.msra.mxu0 %v3992
        %4122 = vmatprep.subr.bf16.mxu0 %v3995
        %4123 = vmatpush1.bf16.msra.mxu0 %v3994
        %4124 = vmatprep.subr.bf16.mxu0 %v3997
        %4125 = vmatpush1.bf16.msra.mxu0 %v3996
        %4126 = vmatprep.mubr.bf16.mxu0 %v3667
        %4127 = vmatmul.mubr.bf16.gmra.mrb[0].mxu0 %v3666
        %v4128 = vpop.f32.mrb[0].mxu0
        %v4129 = vadd.f32 %v3767, %v4128
        %v4130 = vpop.f32.mrb[0].mxu0
        %v4131 = vadd.f32 %v3771, %v4130
        %v4132 = vpop.f32.mrb[0].mxu0
        %v4133 = vadd.f32 %v3767, %v4132
        %v4134 = vpop.f32.mrb[0].mxu0
        %v4135 = vadd.f32 %v3771, %v4134
        %4136 = vmatprep.mubr.bf16.mxu0 %v3671
        %4137 = vmatmul.mubr.bf16.gmra.mrb[0].mxu0 %v3670
        %v4138 = vpop.f32.mrb[0].mxu0
        %v4139 = vadd.f32 %v3767, %v4138
        %v4140 = vpop.f32.mrb[0].mxu0
        %v4141 = vadd.f32 %v3771, %v4140
        %v4142 = vpop.f32.mrb[0].mxu0
        %v4143 = vadd.f32 %v3767, %v4142
        %v4144 = vpop.f32.mrb[0].mxu0
        %v4145 = vadd.f32 %v3771, %v4144
        %4146 = vmatprep.mubr.bf16.mxu0 %v3675
        %4147 = vmatmul.mubr.bf16.gmra.mrb[0].mxu0 %v3674
        %v4148 = vpop.f32.mrb[0].mxu0
        %v4149 = vadd.f32 %v3767, %v4148
        %v4150 = vpop.f32.mrb[0].mxu0
        %v4151 = vadd.f32 %v3771, %v4150
        %v4152 = vpop.f32.mrb[0].mxu0
        %v4153 = vadd.f32 %v3767, %v4152
        %v4154 = vpop.f32.mrb[0].mxu0
        %v4155 = vadd.f32 %v3771, %v4154
        %4156 = vmatprep.mubr.bf16.mxu0 %v3679
        %4157 = vmatmul.mubr.bf16.gmra.mrb[0].mxu0 %v3678
        %v4158 = vpop.f32.mrb[0].mxu0
        %v4159 = vadd.f32 %v3767, %v4158
        %v4160 = vpop.f32.mrb[0].mxu0
        %v4161 = vadd.f32 %v3771, %v4160
        %v4162 = vpop.f32.mrb[0].mxu0
        %v4163 = vadd.f32 %v3767, %v4162
        %v4164 = vpop.f32.mrb[0].mxu0
        %v4165 = vadd.f32 %v3771, %v4164
        %4166 = vmatprep.mubr.bf16.mxu0 %v3683
        %4167 = vmatmul.mubr.bf16.gmra.mrb[0].mxu0 %v3682
        %v4168 = vpop.f32.mrb[0].mxu0
        %v4169 = vadd.f32 %v3767, %v4168
        %v4170 = vpop.f32.mrb[0].mxu0
        %v4171 = vadd.f32 %v3771, %v4170
        %v4172 = vpop.f32.mrb[0].mxu0
        %v4173 = vadd.f32 %v3767, %v4172
        %v4174 = vpop.f32.mrb[0].mxu0
        %v4175 = vadd.f32 %v3771, %v4174
        %4176 = vmatprep.mubr.bf16.mxu0 %v3687
        %4177 = vmatmul.mubr.bf16.gmra.mrb[0].mxu0 %v3686
        %v4178 = vpop.f32.mrb[0].mxu0
        %v4179 = vadd.f32 %v3767, %v4178
        %v4180 = vpop.f32.mrb[0].mxu0
        %v4181 = vadd.f32 %v3771, %v4180
        %v4182 = vpop.f32.mrb[0].mxu0
        %v4183 = vadd.f32 %v3767, %v4182
        %v4184 = vpop.f32.mrb[0].mxu0
        %v4185 = vadd.f32 %v3771, %v4184
        %4186 = vmatprep.mubr.bf16.mxu0 %v3691
        %4187 = vmatmul.mubr.bf16.gmra.mrb[0].mxu0 %v3690
        %v4188 = vpop.f32.mrb[0].mxu0
        %v4189 = vadd.f32 %v3767, %v4188
        %v4190 = vpop.f32.mrb[0].mxu0
        %v4191 = vadd.f32 %v3771, %v4190
        %v4192 = vpop.f32.mrb[0].mxu0
        %v4193 = vadd.f32 %v3767, %v4192
        %v4194 = vpop.f32.mrb[0].mxu0
        %v4195 = vadd.f32 %v3771, %v4194
        %4196 = vmatprep.mubr.bf16.mxu0 %v3695
        %4197 = vmatmul.mubr.bf16.gmra.mrb[0].mxu0 %v3694
        %v4198 = vpop.f32.mrb[0].mxu0
        %v4199 = vadd.f32 %v3767, %v4198
        %v4200 = vpop.f32.mrb[0].mxu0
        %v4201 = vadd.f32 %v3771, %v4200
        %v4202 = vpop.f32.mrb[0].mxu0
        %v4203 = vadd.f32 %v3767, %v4202
        %v4204 = vpop.f32.mrb[0].mxu0
        %v4205 = vadd.f32 %v3771, %v4204
        %4206 = vdwg.mxu0
        %4207 = vmatprep.subr.bf16.mxu0 %v3999
        %4208 = vmatpush1.bf16.msra.mxu0 %v3998
        %4209 = vmatprep.subr.bf16.mxu0 %v4001
        %4210 = vmatpush1.bf16.msra.mxu0 %v4000
        %4211 = vmatprep.subr.bf16.mxu0 %v4003
        %4212 = vmatpush1.bf16.msra.mxu0 %v4002
        %4213 = vmatprep.subr.bf16.mxu0 %v4005
        %4214 = vmatpush1.bf16.msra.mxu0 %v4004
        %4215 = vmatprep.subr.bf16.mxu0 %v4007
        %4216 = vmatpush1.bf16.msra.mxu0 %v4006
        %4217 = vmatprep.subr.bf16.mxu0 %v4009
        %4218 = vmatpush1.bf16.msra.mxu0 %v4008
        %4219 = vmatprep.subr.bf16.mxu0 %v4011
        %4220 = vmatpush1.bf16.msra.mxu0 %v4010
        %4221 = vmatprep.subr.bf16.mxu0 %v4013
        %4222 = vmatpush1.bf16.msra.mxu0 %v4012
        %4223 = vmatprep.subr.bf16.mxu0 %v4015
        %4224 = vmatpush1.bf16.msra.mxu0 %v4014
        %4225 = vmatprep.subr.bf16.mxu0 %v4017
        %4226 = vmatpush1.bf16.msra.mxu0 %v4016
        %4227 = vmatprep.subr.bf16.mxu0 %v4019
        %4228 = vmatpush1.bf16.msra.mxu0 %v4018
        %4229 = vmatprep.subr.bf16.mxu0 %v4021
        %4230 = vmatpush1.bf16.msra.mxu0 %v4020
        %4231 = vmatprep.subr.bf16.mxu0 %v4023
        %4232 = vmatpush1.bf16.msra.mxu0 %v4022
        %4233 = vmatprep.subr.bf16.mxu0 %v4025
        %4234 = vmatpush1.bf16.msra.mxu0 %v4024
        %4235 = vmatprep.subr.bf16.mxu0 %v4027
        %4236 = vmatpush1.bf16.msra.mxu0 %v4026
        %4237 = vmatprep.subr.bf16.mxu0 %v4029
        %4238 = vmatpush1.bf16.msra.mxu0 %v4028
        %4239 = vmatprep.mubr.bf16.mxu0 %v3669
        %4240 = vmatmul.mubr.bf16.gmra.mrb[0].mxu0 %v3668
        %v4241 = vpop.f32.mrb[0].mxu0
        %v4242 = vadd.f32 %v4129, %v4241
        %v4243 = vpop.f32.mrb[0].mxu0
        %v4244 = vadd.f32 %v4131, %v4243
        %v4245 = vpop.f32.mrb[0].mxu0
        %v4246 = vadd.f32 %v4133, %v4245
        %v4247 = vpop.f32.mrb[0].mxu0
        %v4248 = vadd.f32 %v4135, %v4247
        %4249 = vmatprep.mubr.bf16.mxu0 %v3673
        %4250 = vmatmul.mubr.bf16.gmra.mrb[0].mxu0 %v3672
        %v4251 = vpop.f32.mrb[0].mxu0
        %v4252 = vadd.f32 %v4139, %v4251
        %v4253 = vpop.f32.mrb[0].mxu0
        %v4254 = vadd.f32 %v4141, %v4253
        %v4255 = vpop.f32.mrb[0].mxu0
        %v4256 = vadd.f32 %v4143, %v4255
        %v4257 = vpop.f32.mrb[0].mxu0
        %v4258 = vadd.f32 %v4145, %v4257
        %4259 = vmatprep.mubr.bf16.mxu0 %v3677
        %4260 = vmatmul.mubr.bf16.gmra.mrb[0].mxu0 %v3676
        %v4261 = vpop.f32.mrb[0].mxu0
        %v4262 = vadd.f32 %v4149, %v4261
        %v4263 = vpop.f32.mrb[0].mxu0
        %v4264 = vadd.f32 %v4151, %v4263
        %v4265 = vpop.f32.mrb[0].mxu0
        %v4266 = vadd.f32 %v4153, %v4265
        %v4267 = vpop.f32.mrb[0].mxu0
        %v4268 = vadd.f32 %v4155, %v4267
        %4269 = vmatprep.mubr.bf16.mxu0 %v3681
        %4270 = vmatmul.mubr.bf16.gmra.mrb[0].mxu0 %v3680
        %v4271 = vpop.f32.mrb[0].mxu0
        %v4272 = vadd.f32 %v4159, %v4271
        %v4273 = vpop.f32.mrb[0].mxu0
        %v4274 = vadd.f32 %v4161, %v4273
        %v4275 = vpop.f32.mrb[0].mxu0
        %v4276 = vadd.f32 %v4163, %v4275
        %v4277 = vpop.f32.mrb[0].mxu0
        %v4278 = vadd.f32 %v4165, %v4277
        %4279 = vmatprep.mubr.bf16.mxu0 %v3685
        %4280 = vmatmul.mubr.bf16.gmra.mrb[0].mxu0 %v3684
        %v4281 = vpop.f32.mrb[0].mxu0
        %v4282 = vadd.f32 %v4169, %v4281
        %v4283 = vpop.f32.mrb[0].mxu0
        %v4284 = vadd.f32 %v4171, %v4283
        %v4285 = vpop.f32.mrb[0].mxu0
        %v4286 = vadd.f32 %v4173, %v4285
        %v4287 = vpop.f32.mrb[0].mxu0
        %v4288 = vadd.f32 %v4175, %v4287
        %4289 = vmatprep.mubr.bf16.mxu0 %v3689
        %4290 = vmatmul.mubr.bf16.gmra.mrb[0].mxu0 %v3688
        %v4291 = vpop.f32.mrb[0].mxu0
        %v4292 = vadd.f32 %v4179, %v4291
        %v4293 = vpop.f32.mrb[0].mxu0
        %v4294 = vadd.f32 %v4181, %v4293
        %v4295 = vpop.f32.mrb[0].mxu0
        %v4296 = vadd.f32 %v4183, %v4295
        %v4297 = vpop.f32.mrb[0].mxu0
        %v4298 = vadd.f32 %v4185, %v4297
        %4299 = vmatprep.mubr.bf16.mxu0 %v3693
        %4300 = vmatmul.mubr.bf16.gmra.mrb[0].mxu0 %v3692
        %v4301 = vpop.f32.mrb[0].mxu0
        %v4302 = vadd.f32 %v4189, %v4301
        %v4303 = vpop.f32.mrb[0].mxu0
        %v4304 = vadd.f32 %v4191, %v4303
        %v4305 = vpop.f32.mrb[0].mxu0
        %v4306 = vadd.f32 %v4193, %v4305
        %v4307 = vpop.f32.mrb[0].mxu0
        %v4308 = vadd.f32 %v4195, %v4307
        %4309 = vmatprep.mubr.bf16.mxu0 %v3697
        %4310 = vmatmul.mubr.bf16.gmra.mrb[0].mxu0 %v3696
        %v4311 = vpop.f32.mrb[0].mxu0
        %v4312 = vadd.f32 %v4199, %v4311
        %v4313 = vpop.f32.mrb[0].mxu0
        %v4314 = vadd.f32 %v4201, %v4313
        %v4315 = vpop.f32.mrb[0].mxu0
        %v4316 = vadd.f32 %v4203, %v4315
        %v4317 = vpop.f32.mrb[0].mxu0
        %v4318 = vadd.f32 %v4205, %v4317
        %4319 = vdwg.mxu0
        %v4320 = vtanh.pop %v4242
        %v4321 = vtanh.pop %v4244
        %v4322 = vtanh.pop %v4246
        %v4323 = vtanh.pop %v4248
        %v4324 = vtanh.pop %v4252
        %v4325 = vtanh.pop %v4254
        %v4326 = vtanh.pop %v4256
        %v4327 = vtanh.pop %v4258
        %v4328 = vtanh.pop %v4262
        %v4329 = vtanh.pop %v4264
        %v4330 = vtanh.pop %v4266
        %v4331 = vtanh.pop %v4268
        %v4332 = vtanh.pop %v4272
        %v4333 = vtanh.pop %v4274
        %v4334 = vtanh.pop %v4276
        %v4335 = vtanh.pop %v4278
        %v4336 = vtanh.pop %v4282
        %v4337 = vtanh.pop %v4284
        %v4338 = vtanh.pop %v4286
        %v4339 = vtanh.pop %v4288
        %v4340 = vtanh.pop %v4292
        %v4341 = vtanh.pop %v4294
        %v4342 = vtanh.pop %v4296
        %v4343 = vtanh.pop %v4298
        %v4344 = vtanh.pop %v4302
        %v4345 = vtanh.pop %v4304
        %v4346 = vtanh.pop %v4306
        %v4347 = vtanh.pop %v4308
        %v4348 = vtanh.pop %v4312
        %v4349 = vtanh.pop %v4314
        %v4350 = vtanh.pop %v4316
        %v4351 = vtanh.pop %v4318
        %v4352 = vld [vmem:[#allocation15] sm:$0xff]
        %v4353 = vld [vmem:[#allocation15 + $0x8] sm:$0xff]
        %v4354 = vld [vmem:[#allocation15 + $0x10] sm:$0xff]
        %v4355 = vld [vmem:[#allocation15 + $0x18] sm:$0xff]
        %v4356 = vld [vmem:[#allocation15 + $0x20] sm:$0xff]
        %v4357 = vld [vmem:[#allocation15 + $0x28] sm:$0xff]
        %v4358 = vld [vmem:[#allocation15 + $0x30] sm:$0xff]
        %v4359 = vld [vmem:[#allocation15 + $0x38] sm:$0xff]
        %v4360 = vld [vmem:[#allocation15 + $0x40] sm:$0xff]
        %v4361 = vld [vmem:[#allocation15 + $0x48] sm:$0xff]
        %v4362 = vld [vmem:[#allocation15 + $0x50] sm:$0xff]
        %v4363 = vld [vmem:[#allocation15 + $0x58] sm:$0xff]
        %v4364 = vld [vmem:[#allocation15 + $0x60] sm:$0xff]
        %v4365 = vld [vmem:[#allocation15 + $0x68] sm:$0xff]
        %v4366 = vld [vmem:[#allocation15 + $0x70] sm:$0xff]
        %v4367 = vld [vmem:[#allocation15 + $0x78] sm:$0xff]
        %v4368 = vld [vmem:[#allocation15 + $0x80] sm:$0xff]
        %v4369 = vld [vmem:[#allocation15 + $0x88] sm:$0xff]
        %v4370 = vld [vmem:[#allocation15 + $0x90] sm:$0xff]
        %v4371 = vld [vmem:[#allocation15 + $0x98] sm:$0xff]
        %v4372 = vld [vmem:[#allocation15 + $0xa0] sm:$0xff]
        %v4373 = vld [vmem:[#allocation15 + $0xa8] sm:$0xff]
        %v4374 = vld [vmem:[#allocation15 + $0xb0] sm:$0xff]
        %v4375 = vld [vmem:[#allocation15 + $0xb8] sm:$0xff]
        %v4376 = vld [vmem:[#allocation15 + $0xc0] sm:$0xff]
        %v4377 = vld [vmem:[#allocation15 + $0xc8] sm:$0xff]
        %v4378 = vld [vmem:[#allocation15 + $0xd0] sm:$0xff]
        %v4379 = vld [vmem:[#allocation15 + $0xd8] sm:$0xff]
        %v4380 = vld [vmem:[#allocation15 + $0xe0] sm:$0xff]
        %v4381 = vld [vmem:[#allocation15 + $0xe8] sm:$0xff]
        %v4382 = vld [vmem:[#allocation15 + $0xf0] sm:$0xff]
        %v4383 = vld [vmem:[#allocation15 + $0xf8] sm:$0xff]
        %v4384 = vld [vmem:[#allocation15 + $0x100] sm:$0xff]
        %v4385 = vld [vmem:[#allocation15 + $0x108] sm:$0xff]
        %v4386 = vld [vmem:[#allocation15 + $0x110] sm:$0xff]
        %v4387 = vld [vmem:[#allocation15 + $0x118] sm:$0xff]
        %v4388 = vld [vmem:[#allocation15 + $0x120] sm:$0xff]
        %v4389 = vld [vmem:[#allocation15 + $0x128] sm:$0xff]
        %v4390 = vld [vmem:[#allocation15 + $0x130] sm:$0xff]
        %v4391 = vld [vmem:[#allocation15 + $0x138] sm:$0xff]
        %v4392 = vld [vmem:[#allocation15 + $0x140] sm:$0xff]
        %v4393 = vld [vmem:[#allocation15 + $0x148] sm:$0xff]
        %v4394 = vld [vmem:[#allocation15 + $0x150] sm:$0xff]
        %v4395 = vld [vmem:[#allocation15 + $0x158] sm:$0xff]
        %v4396 = vld [vmem:[#allocation15 + $0x160] sm:$0xff]
        %v4397 = vld [vmem:[#allocation15 + $0x168] sm:$0xff]
        %v4398 = vld [vmem:[#allocation15 + $0x170] sm:$0xff]
        %v4399 = vld [vmem:[#allocation15 + $0x178] sm:$0xff]
        %v4400 = vld [vmem:[#allocation15 + $0x180] sm:$0xff]
        %v4401 = vld [vmem:[#allocation15 + $0x188] sm:$0xff]
        %v4402 = vld [vmem:[#allocation15 + $0x190] sm:$0xff]
        %v4403 = vld [vmem:[#allocation15 + $0x198] sm:$0xff]
        %v4404 = vld [vmem:[#allocation15 + $0x1a0] sm:$0xff]
        %v4405 = vld [vmem:[#allocation15 + $0x1a8] sm:$0xff]
        %v4406 = vld [vmem:[#allocation15 + $0x1b0] sm:$0xff]
        %v4407 = vld [vmem:[#allocation15 + $0x1b8] sm:$0xff]
        %v4408 = vld [vmem:[#allocation15 + $0x1c0] sm:$0xff]
        %v4409 = vld [vmem:[#allocation15 + $0x1c8] sm:$0xff]
        %v4410 = vld [vmem:[#allocation15 + $0x1d0] sm:$0xff]
        %v4411 = vld [vmem:[#allocation15 + $0x1d8] sm:$0xff]
        %v4412 = vld [vmem:[#allocation15 + $0x1e0] sm:$0xff]
        %v4413 = vld [vmem:[#allocation15 + $0x1e8] sm:$0xff]
        %v4414 = vld [vmem:[#allocation15 + $0x1f0] sm:$0xff]
        %v4415 = vld [vmem:[#allocation15 + $0x1f8] sm:$0xff]
        %v4416 = vld [vmem:[#allocation17] sm:$0x3]
        %v4418 = vlaneseq
        %v4419 = vshrl.u32 %v4418, 7
        %v4420 = vsub.s32 0, %v4419
        %v4421 = vrot.slane %v4416, %v4420
        %v4422 = vlaneseq
        %v4423 = vshrl.u32 %v4422, 7
        %v4424 = vsub.s32 1, %v4423
        %v4425 = vrot.slane %v4416, %v4424
        %v4492 = vunpack.c.l.b16 %v4352
        %v4493 = vunpack.c.h.b16 %v4352
        %v4494 = vunpack.c.l.b16 %v4353
        %v4495 = vunpack.c.h.b16 %v4353
        %v4496 = vunpack.c.l.b16 %v4354
        %v4497 = vunpack.c.h.b16 %v4354
        %v4498 = vunpack.c.l.b16 %v4355
        %v4499 = vunpack.c.h.b16 %v4355
        %v4500 = vunpack.c.l.b16 %v4356
        %v4501 = vunpack.c.h.b16 %v4356
        %v4502 = vunpack.c.l.b16 %v4357
        %v4503 = vunpack.c.h.b16 %v4357
        %v4504 = vunpack.c.l.b16 %v4358
        %v4505 = vunpack.c.h.b16 %v4358
        %v4506 = vunpack.c.l.b16 %v4359
        %v4507 = vunpack.c.h.b16 %v4359
        %v4508 = vunpack.c.l.b16 %v4360
        %v4509 = vunpack.c.h.b16 %v4360
        %v4510 = vunpack.c.l.b16 %v4361
        %v4511 = vunpack.c.h.b16 %v4361
        %v4512 = vunpack.c.l.b16 %v4362
        %v4513 = vunpack.c.h.b16 %v4362
        %v4514 = vunpack.c.l.b16 %v4363
        %v4515 = vunpack.c.h.b16 %v4363
        %v4516 = vunpack.c.l.b16 %v4364
        %v4517 = vunpack.c.h.b16 %v4364
        %v4518 = vunpack.c.l.b16 %v4365
        %v4519 = vunpack.c.h.b16 %v4365
        %v4520 = vunpack.c.l.b16 %v4366
        %v4521 = vunpack.c.h.b16 %v4366
        %v4522 = vunpack.c.l.b16 %v4367
        %v4523 = vunpack.c.h.b16 %v4367
        %v4524 = vunpack.c.l.b16 %v4368
        %v4525 = vunpack.c.h.b16 %v4368
        %v4526 = vunpack.c.l.b16 %v4369
        %v4527 = vunpack.c.h.b16 %v4369
        %v4528 = vunpack.c.l.b16 %v4370
        %v4529 = vunpack.c.h.b16 %v4370
        %v4530 = vunpack.c.l.b16 %v4371
        %v4531 = vunpack.c.h.b16 %v4371
        %v4532 = vunpack.c.l.b16 %v4372
        %v4533 = vunpack.c.h.b16 %v4372
        %v4534 = vunpack.c.l.b16 %v4373
        %v4535 = vunpack.c.h.b16 %v4373
        %v4536 = vunpack.c.l.b16 %v4374
        %v4537 = vunpack.c.h.b16 %v4374
        %v4538 = vunpack.c.l.b16 %v4375
        %v4539 = vunpack.c.h.b16 %v4375
        %v4540 = vunpack.c.l.b16 %v4376
        %v4541 = vunpack.c.h.b16 %v4376
        %v4542 = vunpack.c.l.b16 %v4377
        %v4543 = vunpack.c.h.b16 %v4377
        %v4544 = vunpack.c.l.b16 %v4378
        %v4545 = vunpack.c.h.b16 %v4378
        %v4546 = vunpack.c.l.b16 %v4379
        %v4547 = vunpack.c.h.b16 %v4379
        %v4548 = vunpack.c.l.b16 %v4380
        %v4549 = vunpack.c.h.b16 %v4380
        %v4550 = vunpack.c.l.b16 %v4381
        %v4551 = vunpack.c.h.b16 %v4381
        %v4552 = vunpack.c.l.b16 %v4382
        %v4553 = vunpack.c.h.b16 %v4382
        %v4554 = vunpack.c.l.b16 %v4383
        %v4555 = vunpack.c.h.b16 %v4383
        %v4556 = vunpack.c.l.b16 %v4384
        %v4557 = vunpack.c.h.b16 %v4384
        %v4558 = vunpack.c.l.b16 %v4385
        %v4559 = vunpack.c.h.b16 %v4385
        %v4560 = vunpack.c.l.b16 %v4386
        %v4561 = vunpack.c.h.b16 %v4386
        %v4562 = vunpack.c.l.b16 %v4387
        %v4563 = vunpack.c.h.b16 %v4387
        %v4564 = vunpack.c.l.b16 %v4388
        %v4565 = vunpack.c.h.b16 %v4388
        %v4566 = vunpack.c.l.b16 %v4389
        %v4567 = vunpack.c.h.b16 %v4389
        %v4568 = vunpack.c.l.b16 %v4390
        %v4569 = vunpack.c.h.b16 %v4390
        %v4570 = vunpack.c.l.b16 %v4391
        %v4571 = vunpack.c.h.b16 %v4391
        %v4572 = vunpack.c.l.b16 %v4392
        %v4573 = vunpack.c.h.b16 %v4392
        %v4574 = vunpack.c.l.b16 %v4393
        %v4575 = vunpack.c.h.b16 %v4393
        %v4576 = vunpack.c.l.b16 %v4394
        %v4577 = vunpack.c.h.b16 %v4394
        %v4578 = vunpack.c.l.b16 %v4395
        %v4579 = vunpack.c.h.b16 %v4395
        %v4580 = vunpack.c.l.b16 %v4396
        %v4581 = vunpack.c.h.b16 %v4396
        %v4582 = vunpack.c.l.b16 %v4397
        %v4583 = vunpack.c.h.b16 %v4397
        %v4584 = vunpack.c.l.b16 %v4398
        %v4585 = vunpack.c.h.b16 %v4398
        %v4586 = vunpack.c.l.b16 %v4399
        %v4587 = vunpack.c.h.b16 %v4399
        %v4588 = vunpack.c.l.b16 %v4400
        %v4589 = vunpack.c.h.b16 %v4400
        %v4590 = vunpack.c.l.b16 %v4401
        %v4591 = vunpack.c.h.b16 %v4401
        %v4592 = vunpack.c.l.b16 %v4402
        %v4593 = vunpack.c.h.b16 %v4402
        %v4594 = vunpack.c.l.b16 %v4403
        %v4595 = vunpack.c.h.b16 %v4403
        %v4596 = vunpack.c.l.b16 %v4404
        %v4597 = vunpack.c.h.b16 %v4404
        %v4598 = vunpack.c.l.b16 %v4405
        %v4599 = vunpack.c.h.b16 %v4405
        %v4600 = vunpack.c.l.b16 %v4406
        %v4601 = vunpack.c.h.b16 %v4406
        %v4602 = vunpack.c.l.b16 %v4407
        %v4603 = vunpack.c.h.b16 %v4407
        %v4604 = vunpack.c.l.b16 %v4408
        %v4605 = vunpack.c.h.b16 %v4408
        %v4606 = vunpack.c.l.b16 %v4409
        %v4607 = vunpack.c.h.b16 %v4409
        %v4608 = vunpack.c.l.b16 %v4410
        %v4609 = vunpack.c.h.b16 %v4410
        %v4610 = vunpack.c.l.b16 %v4411
        %v4611 = vunpack.c.h.b16 %v4411
        %v4612 = vunpack.c.l.b16 %v4412
        %v4613 = vunpack.c.h.b16 %v4412
        %v4614 = vunpack.c.l.b16 %v4413
        %v4615 = vunpack.c.h.b16 %v4413
        %v4616 = vunpack.c.l.b16 %v4414
        %v4617 = vunpack.c.h.b16 %v4414
        %v4618 = vunpack.c.l.b16 %v4415
        %v4619 = vunpack.c.h.b16 %v4415
        %v4620 = vpack.c.b16 %v4494, %v4492
        %v4621 = vpack.c.b16 %v4495, %v4493
        %v4622 = vpack.c.b16 %v4498, %v4496
        %v4623 = vpack.c.b16 %v4499, %v4497
        %v4624 = vpack.c.b16 %v4502, %v4500
        %v4625 = vpack.c.b16 %v4503, %v4501
        %v4626 = vpack.c.b16 %v4506, %v4504
        %v4627 = vpack.c.b16 %v4507, %v4505
        %v4628 = vpack.c.b16 %v4510, %v4508
        %v4629 = vpack.c.b16 %v4511, %v4509
        %v4630 = vpack.c.b16 %v4514, %v4512
        %v4631 = vpack.c.b16 %v4515, %v4513
        %v4632 = vpack.c.b16 %v4518, %v4516
        %v4633 = vpack.c.b16 %v4519, %v4517
        %v4634 = vpack.c.b16 %v4522, %v4520
        %v4635 = vpack.c.b16 %v4523, %v4521
        %v4636 = vpack.c.b16 %v4526, %v4524
        %v4637 = vpack.c.b16 %v4527, %v4525
        %v4638 = vpack.c.b16 %v4530, %v4528
        %v4639 = vpack.c.b16 %v4531, %v4529
        %v4640 = vpack.c.b16 %v4534, %v4532
        %v4641 = vpack.c.b16 %v4535, %v4533
        %v4642 = vpack.c.b16 %v4538, %v4536
        %v4643 = vpack.c.b16 %v4539, %v4537
        %v4644 = vpack.c.b16 %v4542, %v4540
        %v4645 = vpack.c.b16 %v4543, %v4541
        %v4646 = vpack.c.b16 %v4546, %v4544
        %v4647 = vpack.c.b16 %v4547, %v4545
        %v4648 = vpack.c.b16 %v4550, %v4548
        %v4649 = vpack.c.b16 %v4551, %v4549
        %v4650 = vpack.c.b16 %v4554, %v4552
        %v4651 = vpack.c.b16 %v4555, %v4553
        %v4652 = vpack.c.b16 %v4558, %v4556
        %v4653 = vpack.c.b16 %v4559, %v4557
        %v4654 = vpack.c.b16 %v4562, %v4560
        %v4655 = vpack.c.b16 %v4563, %v4561
        %v4656 = vpack.c.b16 %v4566, %v4564
        %v4657 = vpack.c.b16 %v4567, %v4565
        %v4658 = vpack.c.b16 %v4570, %v4568
        %v4659 = vpack.c.b16 %v4571, %v4569
        %v4660 = vpack.c.b16 %v4574, %v4572
        %v4661 = vpack.c.b16 %v4575, %v4573
        %v4662 = vpack.c.b16 %v4578, %v4576
        %v4663 = vpack.c.b16 %v4579, %v4577
        %v4664 = vpack.c.b16 %v4582, %v4580
        %v4665 = vpack.c.b16 %v4583, %v4581
        %v4666 = vpack.c.b16 %v4586, %v4584
        %v4667 = vpack.c.b16 %v4587, %v4585
        %v4668 = vpack.c.b16 %v4590, %v4588
        %v4669 = vpack.c.b16 %v4591, %v4589
        %v4670 = vpack.c.b16 %v4594, %v4592
        %v4671 = vpack.c.b16 %v4595, %v4593
        %v4672 = vpack.c.b16 %v4598, %v4596
        %v4673 = vpack.c.b16 %v4599, %v4597
        %v4674 = vpack.c.b16 %v4602, %v4600
        %v4675 = vpack.c.b16 %v4603, %v4601
        %v4676 = vpack.c.b16 %v4606, %v4604
        %v4677 = vpack.c.b16 %v4607, %v4605
        %v4678 = vpack.c.b16 %v4610, %v4608
        %v4679 = vpack.c.b16 %v4611, %v4609
        %v4680 = vpack.c.b16 %v4614, %v4612
        %v4681 = vpack.c.b16 %v4615, %v4613
        %v4682 = vpack.c.b16 %v4618, %v4616
        %v4683 = vpack.c.b16 %v4619, %v4617
        %4748 = vmatprep.subr.bf16.mxu0 %v4621
        %4749 = vmatpush1.bf16.msra.mxu0 %v4620
        %4750 = vmatprep.subr.bf16.mxu0 %v4623
        %4751 = vmatpush1.bf16.msra.mxu0 %v4622
        %4752 = vmatprep.subr.bf16.mxu0 %v4625
        %4753 = vmatpush1.bf16.msra.mxu0 %v4624
        %4754 = vmatprep.subr.bf16.mxu0 %v4627
        %4755 = vmatpush1.bf16.msra.mxu0 %v4626
        %4756 = vmatprep.subr.bf16.mxu0 %v4629
        %4757 = vmatpush1.bf16.msra.mxu0 %v4628
        %4758 = vmatprep.subr.bf16.mxu0 %v4631
        %4759 = vmatpush1.bf16.msra.mxu0 %v4630
        %4760 = vmatprep.subr.bf16.mxu0 %v4633
        %4761 = vmatpush1.bf16.msra.mxu0 %v4632
        %4762 = vmatprep.subr.bf16.mxu0 %v4635
        %4763 = vmatpush1.bf16.msra.mxu0 %v4634
        %4764 = vmatprep.subr.bf16.mxu0 %v4637
        %4765 = vmatpush1.bf16.msra.mxu0 %v4636
        %4766 = vmatprep.subr.bf16.mxu0 %v4639
        %4767 = vmatpush1.bf16.msra.mxu0 %v4638
        %4768 = vmatprep.subr.bf16.mxu0 %v4641
        %4769 = vmatpush1.bf16.msra.mxu0 %v4640
        %4770 = vmatprep.subr.bf16.mxu0 %v4643
        %4771 = vmatpush1.bf16.msra.mxu0 %v4642
        %4772 = vmatprep.subr.bf16.mxu0 %v4645
        %4773 = vmatpush1.bf16.msra.mxu0 %v4644
        %4774 = vmatprep.subr.bf16.mxu0 %v4647
        %4775 = vmatpush1.bf16.msra.mxu0 %v4646
        %4776 = vmatprep.subr.bf16.mxu0 %v4649
        %4777 = vmatpush1.bf16.msra.mxu0 %v4648
        %4778 = vmatprep.subr.bf16.mxu0 %v4651
        %4779 = vmatpush1.bf16.msra.mxu0 %v4650
        %4780 = vmatprep.mubr.bf16.mxu0 %v3667
        %4781 = vmatmul.mubr.bf16.gmra.mrb[0].mxu0 %v3666
        %v4782 = vpop.f32.mrb[0].mxu0
        %v4783 = vadd.f32 %v4421, %v4782
        %v4784 = vpop.f32.mrb[0].mxu0
        %v4785 = vadd.f32 %v4425, %v4784
        %v4786 = vpop.f32.mrb[0].mxu0
        %v4787 = vadd.f32 %v4421, %v4786
        %v4788 = vpop.f32.mrb[0].mxu0
        %v4789 = vadd.f32 %v4425, %v4788
        %4790 = vmatprep.mubr.bf16.mxu0 %v3671
        %4791 = vmatmul.mubr.bf16.gmra.mrb[0].mxu0 %v3670
        %v4792 = vpop.f32.mrb[0].mxu0
        %v4793 = vadd.f32 %v4421, %v4792
        %v4794 = vpop.f32.mrb[0].mxu0
        %v4795 = vadd.f32 %v4425, %v4794
        %v4796 = vpop.f32.mrb[0].mxu0
        %v4797 = vadd.f32 %v4421, %v4796
        %v4798 = vpop.f32.mrb[0].mxu0
        %v4799 = vadd.f32 %v4425, %v4798
        %4800 = vmatprep.mubr.bf16.mxu0 %v3675
        %4801 = vmatmul.mubr.bf16.gmra.mrb[0].mxu0 %v3674
        %v4802 = vpop.f32.mrb[0].mxu0
        %v4803 = vadd.f32 %v4421, %v4802
        %v4804 = vpop.f32.mrb[0].mxu0
        %v4805 = vadd.f32 %v4425, %v4804
        %v4806 = vpop.f32.mrb[0].mxu0
        %v4807 = vadd.f32 %v4421, %v4806
        %v4808 = vpop.f32.mrb[0].mxu0
        %v4809 = vadd.f32 %v4425, %v4808
        %4810 = vmatprep.mubr.bf16.mxu0 %v3679
        %4811 = vmatmul.mubr.bf16.gmra.mrb[0].mxu0 %v3678
        %v4812 = vpop.f32.mrb[0].mxu0
        %v4813 = vadd.f32 %v4421, %v4812
        %v4814 = vpop.f32.mrb[0].mxu0
        %v4815 = vadd.f32 %v4425, %v4814
        %v4816 = vpop.f32.mrb[0].mxu0
        %v4817 = vadd.f32 %v4421, %v4816
        %v4818 = vpop.f32.mrb[0].mxu0
        %v4819 = vadd.f32 %v4425, %v4818
        %4820 = vmatprep.mubr.bf16.mxu0 %v3683
        %4821 = vmatmul.mubr.bf16.gmra.mrb[0].mxu0 %v3682
        %v4822 = vpop.f32.mrb[0].mxu0
        %v4823 = vadd.f32 %v4421, %v4822
        %v4824 = vpop.f32.mrb[0].mxu0
        %v4825 = vadd.f32 %v4425, %v4824
        %v4826 = vpop.f32.mrb[0].mxu0
        %v4827 = vadd.f32 %v4421, %v4826
        %v4828 = vpop.f32.mrb[0].mxu0
        %v4829 = vadd.f32 %v4425, %v4828
        %4830 = vmatprep.mubr.bf16.mxu0 %v3687
        %4831 = vmatmul.mubr.bf16.gmra.mrb[0].mxu0 %v3686
        %v4832 = vpop.f32.mrb[0].mxu0
        %v4833 = vadd.f32 %v4421, %v4832
        %v4834 = vpop.f32.mrb[0].mxu0
        %v4835 = vadd.f32 %v4425, %v4834
        %v4836 = vpop.f32.mrb[0].mxu0
        %v4837 = vadd.f32 %v4421, %v4836
        %v4838 = vpop.f32.mrb[0].mxu0
        %v4839 = vadd.f32 %v4425, %v4838
        %4840 = vmatprep.mubr.bf16.mxu0 %v3691
        %4841 = vmatmul.mubr.bf16.gmra.mrb[0].mxu0 %v3690
        %v4842 = vpop.f32.mrb[0].mxu0
        %v4843 = vadd.f32 %v4421, %v4842
        %v4844 = vpop.f32.mrb[0].mxu0
        %v4845 = vadd.f32 %v4425, %v4844
        %v4846 = vpop.f32.mrb[0].mxu0
        %v4847 = vadd.f32 %v4421, %v4846
        %v4848 = vpop.f32.mrb[0].mxu0
        %v4849 = vadd.f32 %v4425, %v4848
        %4850 = vmatprep.mubr.bf16.mxu0 %v3695
        %4851 = vmatmul.mubr.bf16.gmra.mrb[0].mxu0 %v3694
        %v4852 = vpop.f32.mrb[0].mxu0
        %v4853 = vadd.f32 %v4421, %v4852
        %v4854 = vpop.f32.mrb[0].mxu0
        %v4855 = vadd.f32 %v4425, %v4854
        %v4856 = vpop.f32.mrb[0].mxu0
        %v4857 = vadd.f32 %v4421, %v4856
        %v4858 = vpop.f32.mrb[0].mxu0
        %v4859 = vadd.f32 %v4425, %v4858
        %4860 = vdwg.mxu0
        %4861 = vmatprep.subr.bf16.mxu0 %v4653
        %4862 = vmatpush1.bf16.msra.mxu0 %v4652
        %4863 = vmatprep.subr.bf16.mxu0 %v4655
        %4864 = vmatpush1.bf16.msra.mxu0 %v4654
        %4865 = vmatprep.subr.bf16.mxu0 %v4657
        %4866 = vmatpush1.bf16.msra.mxu0 %v4656
        %4867 = vmatprep.subr.bf16.mxu0 %v4659
        %4868 = vmatpush1.bf16.msra.mxu0 %v4658
        %4869 = vmatprep.subr.bf16.mxu0 %v4661
        %4870 = vmatpush1.bf16.msra.mxu0 %v4660
        %4871 = vmatprep.subr.bf16.mxu0 %v4663
        %4872 = vmatpush1.bf16.msra.mxu0 %v4662
        %4873 = vmatprep.subr.bf16.mxu0 %v4665
        %4874 = vmatpush1.bf16.msra.mxu0 %v4664
        %4875 = vmatprep.subr.bf16.mxu0 %v4667
        %4876 = vmatpush1.bf16.msra.mxu0 %v4666
        %4877 = vmatprep.subr.bf16.mxu0 %v4669
        %4878 = vmatpush1.bf16.msra.mxu0 %v4668
        %4879 = vmatprep.subr.bf16.mxu0 %v4671
        %4880 = vmatpush1.bf16.msra.mxu0 %v4670
        %4881 = vmatprep.subr.bf16.mxu0 %v4673
        %4882 = vmatpush1.bf16.msra.mxu0 %v4672
        %4883 = vmatprep.subr.bf16.mxu0 %v4675
        %4884 = vmatpush1.bf16.msra.mxu0 %v4674
        %4885 = vmatprep.subr.bf16.mxu0 %v4677
        %4886 = vmatpush1.bf16.msra.mxu0 %v4676
        %4887 = vmatprep.subr.bf16.mxu0 %v4679
        %4888 = vmatpush1.bf16.msra.mxu0 %v4678
        %4889 = vmatprep.subr.bf16.mxu0 %v4681
        %4890 = vmatpush1.bf16.msra.mxu0 %v4680
        %4891 = vmatprep.subr.bf16.mxu0 %v4683
        %4892 = vmatpush1.bf16.msra.mxu0 %v4682
        %4893 = vmatprep.mubr.bf16.mxu0 %v3669
        %4894 = vmatmul.mubr.bf16.gmra.mrb[0].mxu0 %v3668
        %v4895 = vpop.f32.mrb[0].mxu0
        %v4896 = vadd.f32 %v4783, %v4895
        %v4897 = vpop.f32.mrb[0].mxu0
        %v4898 = vadd.f32 %v4785, %v4897
        %v4899 = vpop.f32.mrb[0].mxu0
        %v4900 = vadd.f32 %v4787, %v4899
        %v4901 = vpop.f32.mrb[0].mxu0
        %v4902 = vadd.f32 %v4789, %v4901
        %4903 = vmatprep.mubr.bf16.mxu0 %v3673
        %4904 = vmatmul.mubr.bf16.gmra.mrb[0].mxu0 %v3672
        %v4905 = vpop.f32.mrb[0].mxu0
        %v4906 = vadd.f32 %v4793, %v4905
        %v4907 = vpop.f32.mrb[0].mxu0
        %v4908 = vadd.f32 %v4795, %v4907
        %v4909 = vpop.f32.mrb[0].mxu0
        %v4910 = vadd.f32 %v4797, %v4909
        %v4911 = vpop.f32.mrb[0].mxu0
        %v4912 = vadd.f32 %v4799, %v4911
        %4913 = vmatprep.mubr.bf16.mxu0 %v3677
        %4914 = vmatmul.mubr.bf16.gmra.mrb[0].mxu0 %v3676
        %v4915 = vpop.f32.mrb[0].mxu0
        %v4916 = vadd.f32 %v4803, %v4915
        %v4917 = vpop.f32.mrb[0].mxu0
        %v4918 = vadd.f32 %v4805, %v4917
        %v4919 = vpop.f32.mrb[0].mxu0
        %v4920 = vadd.f32 %v4807, %v4919
        %v4921 = vpop.f32.mrb[0].mxu0
        %v4922 = vadd.f32 %v4809, %v4921
        %4923 = vmatprep.mubr.bf16.mxu0 %v3681
        %4924 = vmatmul.mubr.bf16.gmra.mrb[0].mxu0 %v3680
        %v4925 = vpop.f32.mrb[0].mxu0
        %v4926 = vadd.f32 %v4813, %v4925
        %v4927 = vpop.f32.mrb[0].mxu0
        %v4928 = vadd.f32 %v4815, %v4927
        %v4929 = vpop.f32.mrb[0].mxu0
        %v4930 = vadd.f32 %v4817, %v4929
        %v4931 = vpop.f32.mrb[0].mxu0
        %v4932 = vadd.f32 %v4819, %v4931
        %4933 = vmatprep.mubr.bf16.mxu0 %v3685
        %4934 = vmatmul.mubr.bf16.gmra.mrb[0].mxu0 %v3684
        %v4935 = vpop.f32.mrb[0].mxu0
        %v4936 = vadd.f32 %v4823, %v4935
        %v4937 = vpop.f32.mrb[0].mxu0
        %v4938 = vadd.f32 %v4825, %v4937
        %v4939 = vpop.f32.mrb[0].mxu0
        %v4940 = vadd.f32 %v4827, %v4939
        %v4941 = vpop.f32.mrb[0].mxu0
        %v4942 = vadd.f32 %v4829, %v4941
        %4943 = vmatprep.mubr.bf16.mxu0 %v3689
        %4944 = vmatmul.mubr.bf16.gmra.mrb[0].mxu0 %v3688
        %v4945 = vpop.f32.mrb[0].mxu0
        %v4946 = vadd.f32 %v4833, %v4945
        %v4947 = vpop.f32.mrb[0].mxu0
        %v4948 = vadd.f32 %v4835, %v4947
        %v4949 = vpop.f32.mrb[0].mxu0
        %v4950 = vadd.f32 %v4837, %v4949
        %v4951 = vpop.f32.mrb[0].mxu0
        %v4952 = vadd.f32 %v4839, %v4951
        %4953 = vmatprep.mubr.bf16.mxu0 %v3693
        %4954 = vmatmul.mubr.bf16.gmra.mrb[0].mxu0 %v3692
        %v4955 = vpop.f32.mrb[0].mxu0
        %v4956 = vadd.f32 %v4843, %v4955
        %v4957 = vpop.f32.mrb[0].mxu0
        %v4958 = vadd.f32 %v4845, %v4957
        %v4959 = vpop.f32.mrb[0].mxu0
        %v4960 = vadd.f32 %v4847, %v4959
        %v4961 = vpop.f32.mrb[0].mxu0
        %v4962 = vadd.f32 %v4849, %v4961
        %4963 = vmatprep.mubr.bf16.mxu0 %v3697
        %4964 = vmatmul.mubr.bf16.gmra.mrb[0].mxu0 %v3696
        %v4965 = vpop.f32.mrb[0].mxu0
        %v4966 = vadd.f32 %v4853, %v4965
        %v4967 = vpop.f32.mrb[0].mxu0
        %v4968 = vadd.f32 %v4855, %v4967
        %v4969 = vpop.f32.mrb[0].mxu0
        %v4970 = vadd.f32 %v4857, %v4969
        %v4971 = vpop.f32.mrb[0].mxu0
        %v4972 = vadd.f32 %v4859, %v4971
        %4973 = vdwg.mxu0
        %v4974 = vxor.u32 %v4896, 2147483648
        %v4975 = vxor.u32 %v4898, 2147483648
        %v4976 = vxor.u32 %v4900, 2147483648
        %v4977 = vxor.u32 %v4902, 2147483648
        %v4978 = vxor.u32 %v4906, 2147483648
        %v4979 = vxor.u32 %v4908, 2147483648
        %v4980 = vxor.u32 %v4910, 2147483648
        %v4981 = vxor.u32 %v4912, 2147483648
        %v4982 = vxor.u32 %v4916, 2147483648
        %v4983 = vxor.u32 %v4918, 2147483648
        %v4984 = vxor.u32 %v4920, 2147483648
        %v4985 = vxor.u32 %v4922, 2147483648
        %v4986 = vxor.u32 %v4926, 2147483648
        %v4987 = vxor.u32 %v4928, 2147483648
        %v4988 = vxor.u32 %v4930, 2147483648
        %v4989 = vxor.u32 %v4932, 2147483648
        %v4990 = vxor.u32 %v4936, 2147483648
        %v4991 = vxor.u32 %v4938, 2147483648
        %v4992 = vxor.u32 %v4940, 2147483648
        %v4993 = vxor.u32 %v4942, 2147483648
        %v4994 = vxor.u32 %v4946, 2147483648
        %v4995 = vxor.u32 %v4948, 2147483648
        %v4996 = vxor.u32 %v4950, 2147483648
        %v4997 = vxor.u32 %v4952, 2147483648
        %v4998 = vxor.u32 %v4956, 2147483648
        %v4999 = vxor.u32 %v4958, 2147483648
        %v5000 = vxor.u32 %v4960, 2147483648
        %v5001 = vxor.u32 %v4962, 2147483648
        %v5002 = vxor.u32 %v4966, 2147483648
        %v5003 = vxor.u32 %v4968, 2147483648
        %v5004 = vxor.u32 %v4970, 2147483648
        %v5005 = vxor.u32 %v4972, 2147483648
        %v5006 = vmul.f32 %v4974, 1.442695
        %v5007 = vpow.pop %v5006
        %v5008 = vmul.f32 %v4975, 1.442695
        %v5009 = vpow.pop %v5008
        %v5010 = vmul.f32 %v4976, 1.442695
        %v5011 = vpow.pop %v5010
        %v5012 = vmul.f32 %v4977, 1.442695
        %v5013 = vpow.pop %v5012
        %v5014 = vmul.f32 %v4978, 1.442695
        %v5015 = vpow.pop %v5014
        %v5016 = vmul.f32 %v4979, 1.442695
        %v5017 = vpow.pop %v5016
        %v5018 = vmul.f32 %v4980, 1.442695
        %v5019 = vpow.pop %v5018
        %v5020 = vmul.f32 %v4981, 1.442695
        %v5021 = vpow.pop %v5020
        %v5022 = vmul.f32 %v4982, 1.442695
        %v5023 = vpow.pop %v5022
        %v5024 = vmul.f32 %v4983, 1.442695
        %v5025 = vpow.pop %v5024
        %v5026 = vmul.f32 %v4984, 1.442695
        %v5027 = vpow.pop %v5026
        %v5028 = vmul.f32 %v4985, 1.442695
        %v5029 = vpow.pop %v5028
        %v5030 = vmul.f32 %v4986, 1.442695
        %v5031 = vpow.pop %v5030
        %v5032 = vmul.f32 %v4987, 1.442695
        %v5033 = vpow.pop %v5032
        %v5034 = vmul.f32 %v4988, 1.442695
        %v5035 = vpow.pop %v5034
        %v5036 = vmul.f32 %v4989, 1.442695
        %v5037 = vpow.pop %v5036
        %v5038 = vmul.f32 %v4990, 1.442695
        %v5039 = vpow.pop %v5038
        %v5040 = vmul.f32 %v4991, 1.442695
        %v5041 = vpow.pop %v5040
        %v5042 = vmul.f32 %v4992, 1.442695
        %v5043 = vpow.pop %v5042
        %v5044 = vmul.f32 %v4993, 1.442695
        %v5045 = vpow.pop %v5044
        %v5046 = vmul.f32 %v4994, 1.442695
        %v5047 = vpow.pop %v5046
        %v5048 = vmul.f32 %v4995, 1.442695
        %v5049 = vpow.pop %v5048
        %v5050 = vmul.f32 %v4996, 1.442695
        %v5051 = vpow.pop %v5050
        %v5052 = vmul.f32 %v4997, 1.442695
        %v5053 = vpow.pop %v5052
        %v5054 = vmul.f32 %v4998, 1.442695
        %v5055 = vpow.pop %v5054
        %v5056 = vmul.f32 %v4999, 1.442695
        %v5057 = vpow.pop %v5056
        %v5058 = vmul.f32 %v5000, 1.442695
        %v5059 = vpow.pop %v5058
        %v5060 = vmul.f32 %v5001, 1.442695
        %v5061 = vpow.pop %v5060
        %v5062 = vmul.f32 %v5002, 1.442695
        %v5063 = vpow.pop %v5062
        %v5064 = vmul.f32 %v5003, 1.442695
        %v5065 = vpow.pop %v5064
        %v5066 = vmul.f32 %v5004, 1.442695
        %v5067 = vpow.pop %v5066
        %v5068 = vmul.f32 %v5005, 1.442695
        %v5069 = vpow.pop %v5068
        %v5070 = vadd.f32 %v5007, 1.0
        %v5071 = vadd.f32 %v5009, 1.0
        %v5072 = vadd.f32 %v5011, 1.0
        %v5073 = vadd.f32 %v5013, 1.0
        %v5074 = vadd.f32 %v5015, 1.0
        %v5075 = vadd.f32 %v5017, 1.0
        %v5076 = vadd.f32 %v5019, 1.0
        %v5077 = vadd.f32 %v5021, 1.0
        %v5078 = vadd.f32 %v5023, 1.0
        %v5079 = vadd.f32 %v5025, 1.0
        %v5080 = vadd.f32 %v5027, 1.0
        %v5081 = vadd.f32 %v5029, 1.0
        %v5082 = vadd.f32 %v5031, 1.0
        %v5083 = vadd.f32 %v5033, 1.0
        %v5084 = vadd.f32 %v5035, 1.0
        %v5085 = vadd.f32 %v5037, 1.0
        %v5086 = vadd.f32 %v5039, 1.0
        %v5087 = vadd.f32 %v5041, 1.0
        %v5088 = vadd.f32 %v5043, 1.0
        %v5089 = vadd.f32 %v5045, 1.0
        %v5090 = vadd.f32 %v5047, 1.0
        %v5091 = vadd.f32 %v5049, 1.0
        %v5092 = vadd.f32 %v5051, 1.0
        %v5093 = vadd.f32 %v5053, 1.0
        %v5094 = vadd.f32 %v5055, 1.0
        %v5095 = vadd.f32 %v5057, 1.0
        %v5096 = vadd.f32 %v5059, 1.0
        %v5097 = vadd.f32 %v5061, 1.0
        %v5098 = vadd.f32 %v5063, 1.0
        %v5099 = vadd.f32 %v5065, 1.0
        %v5100 = vadd.f32 %v5067, 1.0
        %v5101 = vadd.f32 %v5069, 1.0
        %v5102 = vrcp.pop %v5070
        %v5103 = vmul.f32 1.0, %v5102
        %v5104 = vrcp.pop %v5071
        %v5105 = vmul.f32 1.0, %v5104
        %v5106 = vrcp.pop %v5072
        %v5107 = vmul.f32 1.0, %v5106
        %v5108 = vrcp.pop %v5073
        %v5109 = vmul.f32 1.0, %v5108
        %v5110 = vrcp.pop %v5074
        %v5111 = vmul.f32 1.0, %v5110
        %v5112 = vrcp.pop %v5075
        %v5113 = vmul.f32 1.0, %v5112
        %v5114 = vrcp.pop %v5076
        %v5115 = vmul.f32 1.0, %v5114
        %v5116 = vrcp.pop %v5077
        %v5117 = vmul.f32 1.0, %v5116
        %v5118 = vrcp.pop %v5078
        %v5119 = vmul.f32 1.0, %v5118
        %v5120 = vrcp.pop %v5079
        %v5121 = vmul.f32 1.0, %v5120
        %v5122 = vrcp.pop %v5080
        %v5123 = vmul.f32 1.0, %v5122
        %v5124 = vrcp.pop %v5081
        %v5125 = vmul.f32 1.0, %v5124
        %v5126 = vrcp.pop %v5082
        %v5127 = vmul.f32 1.0, %v5126
        %v5128 = vrcp.pop %v5083
        %v5129 = vmul.f32 1.0, %v5128
        %v5130 = vrcp.pop %v5084
        %v5131 = vmul.f32 1.0, %v5130
        %v5132 = vrcp.pop %v5085
        %v5133 = vmul.f32 1.0, %v5132
        %v5134 = vrcp.pop %v5086
        %v5135 = vmul.f32 1.0, %v5134
        %v5136 = vrcp.pop %v5087
        %v5137 = vmul.f32 1.0, %v5136
        %v5138 = vrcp.pop %v5088
        %v5139 = vmul.f32 1.0, %v5138
        %v5140 = vrcp.pop %v5089
        %v5141 = vmul.f32 1.0, %v5140
        %v5142 = vrcp.pop %v5090
        %v5143 = vmul.f32 1.0, %v5142
        %v5144 = vrcp.pop %v5091
        %v5145 = vmul.f32 1.0, %v5144
        %v5146 = vrcp.pop %v5092
        %v5147 = vmul.f32 1.0, %v5146
        %v5148 = vrcp.pop %v5093
        %v5149 = vmul.f32 1.0, %v5148
        %v5150 = vrcp.pop %v5094
        %v5151 = vmul.f32 1.0, %v5150
        %v5152 = vrcp.pop %v5095
        %v5153 = vmul.f32 1.0, %v5152
        %v5154 = vrcp.pop %v5096
        %v5155 = vmul.f32 1.0, %v5154
        %v5156 = vrcp.pop %v5097
        %v5157 = vmul.f32 1.0, %v5156
        %v5158 = vrcp.pop %v5098
        %v5159 = vmul.f32 1.0, %v5158
        %v5160 = vrcp.pop %v5099
        %v5161 = vmul.f32 1.0, %v5160
        %v5162 = vrcp.pop %v5100
        %v5163 = vmul.f32 1.0, %v5162
        %v5164 = vrcp.pop %v5101
        %v5165 = vmul.f32 1.0, %v5164
        %v5166 = vmul.f32 %v4320, %v5103
        %v5167 = vmul.f32 %v4321, %v5105
        %v5168 = vmul.f32 %v4322, %v5107
        %v5169 = vmul.f32 %v4323, %v5109
        %v5170 = vmul.f32 %v4324, %v5111
        %v5171 = vmul.f32 %v4325, %v5113
        %v5172 = vmul.f32 %v4326, %v5115
        %v5173 = vmul.f32 %v4327, %v5117
        %v5174 = vmul.f32 %v4328, %v5119
        %v5175 = vmul.f32 %v4329, %v5121
        %v5176 = vmul.f32 %v4330, %v5123
        %v5177 = vmul.f32 %v4331, %v5125
        %v5178 = vmul.f32 %v4332, %v5127
        %v5179 = vmul.f32 %v4333, %v5129
        %v5180 = vmul.f32 %v4334, %v5131
        %v5181 = vmul.f32 %v4335, %v5133
        %v5182 = vmul.f32 %v4336, %v5135
        %v5183 = vmul.f32 %v4337, %v5137
        %v5184 = vmul.f32 %v4338, %v5139
        %v5185 = vmul.f32 %v4339, %v5141
        %v5186 = vmul.f32 %v4340, %v5143
        %v5187 = vmul.f32 %v4341, %v5145
        %v5188 = vmul.f32 %v4342, %v5147
        %v5189 = vmul.f32 %v4343, %v5149
        %v5190 = vmul.f32 %v4344, %v5151
        %v5191 = vmul.f32 %v4345, %v5153
        %v5192 = vmul.f32 %v4346, %v5155
        %v5193 = vmul.f32 %v4347, %v5157
        %v5194 = vmul.f32 %v4348, %v5159
        %v5195 = vmul.f32 %v4349, %v5161
        %v5196 = vmul.f32 %v4350, %v5163
        %v5197 = vmul.f32 %v4351, %v5165
        %v5198 = vld [vmem:[#allocation18] sm:$0x3]
        %v5200 = vlaneseq
        %v5201 = vshrl.u32 %v5200, 7
        %v5202 = vsub.s32 0, %v5201
        %v5203 = vrot.slane %v5198, %v5202
        %v5204 = vlaneseq
        %v5205 = vshrl.u32 %v5204, 7
        %v5206 = vsub.s32 1, %v5205
        %v5207 = vrot.slane %v5198, %v5206
        %v5210 = vmul.f32 %v5166, %v5203
        %v5211 = vmul.f32 %v5167, %v5207
        %v5212 = vmul.f32 %v5168, %v5203
        %v5213 = vmul.f32 %v5169, %v5207
        %v5214 = vmul.f32 %v5170, %v5203
        %v5215 = vmul.f32 %v5171, %v5207
        %v5216 = vmul.f32 %v5172, %v5203
        %v5217 = vmul.f32 %v5173, %v5207
        %v5218 = vmul.f32 %v5174, %v5203
        %v5219 = vmul.f32 %v5175, %v5207
        %v5220 = vmul.f32 %v5176, %v5203
        %v5221 = vmul.f32 %v5177, %v5207
        %v5222 = vmul.f32 %v5178, %v5203
        %v5223 = vmul.f32 %v5179, %v5207
        %v5224 = vmul.f32 %v5180, %v5203
        %v5225 = vmul.f32 %v5181, %v5207
        %v5226 = vmul.f32 %v5182, %v5203
        %v5227 = vmul.f32 %v5183, %v5207
        %v5228 = vmul.f32 %v5184, %v5203
        %v5229 = vmul.f32 %v5185, %v5207
        %v5230 = vmul.f32 %v5186, %v5203
        %v5231 = vmul.f32 %v5187, %v5207
        %v5232 = vmul.f32 %v5188, %v5203
        %v5233 = vmul.f32 %v5189, %v5207
        %v5234 = vmul.f32 %v5190, %v5203
        %v5235 = vmul.f32 %v5191, %v5207
        %v5236 = vmul.f32 %v5192, %v5203
        %v5237 = vmul.f32 %v5193, %v5207
        %v5238 = vmul.f32 %v5194, %v5203
        %v5239 = vmul.f32 %v5195, %v5207
        %v5240 = vmul.f32 %v5196, %v5203
        %v5241 = vmul.f32 %v5197, %v5207
        %v5242 = vadd.f32 %v5210, %v5211
        %5243 = vadd.xlane.f32.xlu0 %v5242
        %v5244 = vpop.xlane.xlu0 %5243
        %v5245 = vadd.f32 %v5212, %v5213
        %5246 = vadd.xlane.f32.xlu0 %v5245
        %v5247 = vpop.xlane.xlu0 %5246
        %v5248 = vadd.f32 %v5214, %v5215
        %5249 = vadd.xlane.f32.xlu0 %v5248
        %v5250 = vpop.xlane.xlu0 %5249
        %v5251 = vadd.f32 %v5216, %v5217
        %5252 = vadd.xlane.f32.xlu0 %v5251
        %v5253 = vpop.xlane.xlu0 %5252
        %v5254 = vadd.f32 %v5218, %v5219
        %5255 = vadd.xlane.f32.xlu0 %v5254
        %v5256 = vpop.xlane.xlu0 %5255
        %v5257 = vadd.f32 %v5220, %v5221
        %5258 = vadd.xlane.f32.xlu0 %v5257
        %v5259 = vpop.xlane.xlu0 %5258
        %v5260 = vadd.f32 %v5222, %v5223
        %5261 = vadd.xlane.f32.xlu0 %v5260
        %v5262 = vpop.xlane.xlu0 %5261
        %v5263 = vadd.f32 %v5224, %v5225
        %5264 = vadd.xlane.f32.xlu0 %v5263
        %v5265 = vpop.xlane.xlu0 %5264
        %v5266 = vadd.f32 %v5226, %v5227
        %5267 = vadd.xlane.f32.xlu0 %v5266
        %v5268 = vpop.xlane.xlu0 %5267
        %v5269 = vadd.f32 %v5228, %v5229
        %5270 = vadd.xlane.f32.xlu0 %v5269
        %v5271 = vpop.xlane.xlu0 %5270
        %v5272 = vadd.f32 %v5230, %v5231
        %5273 = vadd.xlane.f32.xlu0 %v5272
        %v5274 = vpop.xlane.xlu0 %5273
        %v5275 = vadd.f32 %v5232, %v5233
        %5276 = vadd.xlane.f32.xlu0 %v5275
        %v5277 = vpop.xlane.xlu0 %5276
        %v5278 = vadd.f32 %v5234, %v5235
        %5279 = vadd.xlane.f32.xlu0 %v5278
        %v5280 = vpop.xlane.xlu0 %5279
        %v5281 = vadd.f32 %v5236, %v5237
        %5282 = vadd.xlane.f32.xlu0 %v5281
        %v5283 = vpop.xlane.xlu0 %5282
        %v5284 = vadd.f32 %v5238, %v5239
        %5285 = vadd.xlane.f32.xlu0 %v5284
        %v5286 = vpop.xlane.xlu0 %5285
        %v5287 = vadd.f32 %v5240, %v5241
        %5288 = vadd.xlane.f32.xlu0 %v5287
        %v5289 = vpop.xlane.xlu0 %5288
        %v5290 = vld [vmem:[#allocation5] sm:$0x1]
        %v5292 = vlaneseq
        %v5293 = vshrl.u32 %v5292, 7
        %v5294 = vsub.s32 0, %v5293
        %v5295 = vrot.slane %v5290, %v5294
        %v5297 = vadd.f32 %v5244, %v5295
        %v5298 = vadd.f32 %v5247, %v5295
        %v5299 = vadd.f32 %v5250, %v5295
        %v5300 = vadd.f32 %v5253, %v5295
        %v5301 = vadd.f32 %v5256, %v5295
        %v5302 = vadd.f32 %v5259, %v5295
        %v5303 = vadd.f32 %v5262, %v5295
        %v5304 = vadd.f32 %v5265, %v5295
        %v5305 = vadd.f32 %v5268, %v5295
        %v5306 = vadd.f32 %v5271, %v5295
        %v5307 = vadd.f32 %v5274, %v5295
        %v5308 = vadd.f32 %v5277, %v5295
        %v5309 = vadd.f32 %v5280, %v5295
        %v5310 = vadd.f32 %v5283, %v5295
        %v5311 = vadd.f32 %v5286, %v5295
        %v5312 = vadd.f32 %v5289, %v5295
        %v5313 = vsel %vm644, %v5297, -inf
        %v5314 = vsel %vm645, %v5298, -inf
        %v5315 = vsel %vm646, %v5299, -inf
        %v5316 = vsel %vm647, %v5300, -inf
        %v5317 = vsel %vm648, %v5301, -inf
        %v5318 = vsel %vm649, %v5302, -inf
        %v5319 = vsel %vm650, %v5303, -inf
        %v5320 = vsel %vm651, %v5304, -inf
        %v5321 = vsel %vm652, %v5305, -inf
        %v5322 = vsel %vm653, %v5306, -inf
        %v5323 = vsel %vm654, %v5307, -inf
        %v5324 = vsel %vm655, %v5308, -inf
        %v5325 = vsel %vm656, %v5309, -inf
        %v5326 = vsel %vm657, %v5310, -inf
        %v5327 = vsel %vm658, %v5311, -inf
        %v5328 = vsel %vm659, %v5312, -inf
        %vm5329 = vcmask 7168
        %5330 = vst.msk [vmem:[%s581] sm:$0xff] %vm5329, %v5313
        %5331 = vst.msk [vmem:[%s581 + $0x8] sm:$0xff] %vm5329, %v5314
        %5332 = vst.msk [vmem:[%s581 + $0x10] sm:$0xff] %vm5329, %v5315
        %5333 = vst.msk [vmem:[%s581 + $0x18] sm:$0xff] %vm5329, %v5316
        %5334 = vst.msk [vmem:[%s581 + $0x20] sm:$0xff] %vm5329, %v5317
        %5335 = vst.msk [vmem:[%s581 + $0x28] sm:$0xff] %vm5329, %v5318
        %5336 = vst.msk [vmem:[%s581 + $0x30] sm:$0xff] %vm5329, %v5319
        %5337 = vst.msk [vmem:[%s581 + $0x38] sm:$0xff] %vm5329, %v5320
        %5338 = vst.msk [vmem:[%s581 + $0x40] sm:$0xff] %vm5329, %v5321
        %5339 = vst.msk [vmem:[%s581 + $0x48] sm:$0xff] %vm5329, %v5322
        %5340 = vst.msk [vmem:[%s581 + $0x50] sm:$0xff] %vm5329, %v5323
        %5341 = vst.msk [vmem:[%s581 + $0x58] sm:$0xff] %vm5329, %v5324
        %5342 = vst.msk [vmem:[%s581 + $0x60] sm:$0xff] %vm5329, %v5325
        %5343 = vst.msk [vmem:[%s581 + $0x68] sm:$0xff] %vm5329, %v5326
        %5344 = vst.msk [vmem:[%s581 + $0x70] sm:$0xff] %vm5329, %v5327
        %5345 = vst.msk [vmem:[%s581 + $0x78] sm:$0xff] %vm5329, %v5328
        %v5346 = vld [vmem:[#allocation2] sm:$0x1]
        %v5347 = vsel %vm5329, %v5313, -inf
        %v5348 = vsel %vm5329, %v5314, -inf
        %v5349 = vsel %vm5329, %v5315, -inf
        %v5350 = vsel %vm5329, %v5316, -inf
        %v5351 = vsel %vm5329, %v5317, -inf
        %v5352 = vmax.f32 %v5347, %v5351
        %v5353 = vsel %vm5329, %v5318, -inf
        %v5354 = vmax.f32 %v5348, %v5353
        %v5355 = vsel %vm5329, %v5319, -inf
        %v5356 = vmax.f32 %v5349, %v5355
        %v5357 = vsel %vm5329, %v5320, -inf
        %v5358 = vmax.f32 %v5350, %v5357
        %v5359 = vsel %vm5329, %v5321, -inf
        %v5360 = vmax.f32 %v5352, %v5359
        %v5361 = vsel %vm5329, %v5322, -inf
        %v5362 = vmax.f32 %v5354, %v5361
        %v5363 = vsel %vm5329, %v5323, -inf
        %v5364 = vmax.f32 %v5356, %v5363
        %v5365 = vsel %vm5329, %v5324, -inf
        %v5366 = vmax.f32 %v5358, %v5365
        %v5367 = vsel %vm5329, %v5325, -inf
        %v5368 = vmax.f32 %v5360, %v5367
        %v5369 = vsel %vm5329, %v5326, -inf
        %v5370 = vmax.f32 %v5362, %v5369
        %v5371 = vsel %vm5329, %v5327, -inf
        %v5372 = vmax.f32 %v5364, %v5371
        %v5373 = vsel %vm5329, %v5328, -inf
        %v5374 = vmax.f32 %v5366, %v5373
        %v5375 = vmax.f32 %v5368, %v5370
        %v5376 = vmax.f32 %v5372, %v5374
        %v5377 = vmax.f32 %v5375, %v5376
        %v5378 = vrot.slane %v5377, 4
        %v5379 = vmax.f32 %v5377, %v5378
        %v5380 = vrot.slane %v5379, 2
        %v5381 = vmax.f32 %v5379, %v5380
        %v5382 = vrot.slane %v5381, 1
        %v5383 = vmax.f32 %v5381, %v5382
        %v5384 = vmax.f32 %v5346, %v5383
        %v5385 = vsub.f32 %v5346, %v5384
        %v5386 = vmul.f32 %v5385, 1.442695
        %v5387 = vpow.pop %v5386
        %v5389 = vlaneseq
        %v5390 = vshrl.u32 %v5389, 7
        %v5391 = vsub.s32 0, %v5390
        %v5392 = vrot.slane %v5384, %v5391
        %v5394 = vsub.f32 %v5313, %v5392
        %v5395 = vsub.f32 %v5314, %v5392
        %v5396 = vsub.f32 %v5315, %v5392
        %v5397 = vsub.f32 %v5316, %v5392
        %v5398 = vsub.f32 %v5317, %v5392
        %v5399 = vsub.f32 %v5318, %v5392
        %v5400 = vsub.f32 %v5319, %v5392
        %v5401 = vsub.f32 %v5320, %v5392
        %v5402 = vsub.f32 %v5321, %v5392
        %v5403 = vsub.f32 %v5322, %v5392
        %v5404 = vsub.f32 %v5323, %v5392
        %v5405 = vsub.f32 %v5324, %v5392
        %v5406 = vsub.f32 %v5325, %v5392
        %v5407 = vsub.f32 %v5326, %v5392
        %v5408 = vsub.f32 %v5327, %v5392
        %v5409 = vsub.f32 %v5328, %v5392
        %v5410 = vmul.f32 %v5394, 1.442695
        %v5411 = vpow.pop %v5410
        %v5412 = vmul.f32 %v5395, 1.442695
        %v5413 = vpow.pop %v5412
        %v5414 = vmul.f32 %v5396, 1.442695
        %v5415 = vpow.pop %v5414
        %v5416 = vmul.f32 %v5397, 1.442695
        %v5417 = vpow.pop %v5416
        %v5418 = vmul.f32 %v5398, 1.442695
        %v5419 = vpow.pop %v5418
        %v5420 = vmul.f32 %v5399, 1.442695
        %v5421 = vpow.pop %v5420
        %v5422 = vmul.f32 %v5400, 1.442695
        %v5423 = vpow.pop %v5422
        %v5424 = vmul.f32 %v5401, 1.442695
        %v5425 = vpow.pop %v5424
        %v5426 = vmul.f32 %v5402, 1.442695
        %v5427 = vpow.pop %v5426
        %v5428 = vmul.f32 %v5403, 1.442695
        %v5429 = vpow.pop %v5428
        %v5430 = vmul.f32 %v5404, 1.442695
        %v5431 = vpow.pop %v5430
        %v5432 = vmul.f32 %v5405, 1.442695
        %v5433 = vpow.pop %v5432
        %v5434 = vmul.f32 %v5406, 1.442695
        %v5435 = vpow.pop %v5434
        %v5436 = vmul.f32 %v5407, 1.442695
        %v5437 = vpow.pop %v5436
        %v5438 = vmul.f32 %v5408, 1.442695
        %v5439 = vpow.pop %v5438
        %v5440 = vmul.f32 %v5409, 1.442695
        %v5441 = vpow.pop %v5440
        %v5442 = vld [vmem:[#allocation3] sm:$0x1]
        %v5443 = vmul.f32 %v5442, %v5387
        %v5444 = vsel %vm5329, %v5411, 0.0
        %v5445 = vsel %vm5329, %v5413, 0.0
        %v5446 = vadd.f32 %v5444, %v5445
        %v5447 = vsel %vm5329, %v5415, 0.0
        %v5448 = vadd.f32 %v5446, %v5447
        %v5449 = vsel %vm5329, %v5417, 0.0
        %v5450 = vadd.f32 %v5448, %v5449
        %v5451 = vsel %vm5329, %v5419, 0.0
        %v5452 = vadd.f32 %v5450, %v5451
        %v5453 = vsel %vm5329, %v5421, 0.0
        %v5454 = vadd.f32 %v5452, %v5453
        %v5455 = vsel %vm5329, %v5423, 0.0
        %v5456 = vadd.f32 %v5454, %v5455
        %v5457 = vsel %vm5329, %v5425, 0.0
        %v5458 = vadd.f32 %v5456, %v5457
        %v5459 = vsel %vm5329, %v5427, 0.0
        %v5460 = vadd.f32 %v5458, %v5459
        %v5461 = vsel %vm5329, %v5429, 0.0
        %v5462 = vadd.f32 %v5460, %v5461
        %v5463 = vsel %vm5329, %v5431, 0.0
        %v5464 = vadd.f32 %v5462, %v5463
        %v5465 = vsel %vm5329, %v5433, 0.0
        %v5466 = vadd.f32 %v5464, %v5465
        %v5467 = vsel %vm5329, %v5435, 0.0
        %v5468 = vadd.f32 %v5466, %v5467
        %v5469 = vsel %vm5329, %v5437, 0.0
        %v5470 = vadd.f32 %v5468, %v5469
        %v5471 = vsel %vm5329, %v5439, 0.0
        %v5472 = vadd.f32 %v5470, %v5471
        %v5473 = vsel %vm5329, %v5441, 0.0
        %v5474 = vadd.f32 %v5472, %v5473
        %v5475 = vrot.slane %v5474, 4
        %v5476 = vadd.f32 %v5474, %v5475
        %v5477 = vrot.slane %v5476, 2
        %v5478 = vadd.f32 %v5476, %v5477
        %v5479 = vrot.slane %v5478, 1
        %v5480 = vadd.f32 %v5478, %v5479
        %v5481 = vadd.f32 %v5443, %v5480
        %vm5482 = vcmask 0
        %5483 = vst.msk [vmem:[#allocation3] sm:$0x1] %vm5482, %v5481
        %v5484 = vld [vmem:[#allocation4] sm:$0xf]
        %5486 = vset.pattern.permute.xlu0 0
        %5487 = vperm.xlu0 %5486, %v5387
        %v5488 = vpop.permute.xlu0 %5487
        %v5490 = vlaneseq
        %v5491 = vshrl.u32 %v5490, 7
        %v5492 = vsub.s32 0, %v5491
        %v5493 = vrot.slane %v5488, %v5492
        %v5494 = vmul.f32 %v5484, %v5493
        %5496 = vset.pattern.permute.xlu0 0
        %5497 = vperm.xlu0 %5496, %v5411
        %v5498 = vpop.permute.xlu0 %5497
        %5501 = vset.pattern.permute.xlu0 0
        %5502 = vperm.xlu0 %5501, %v5413
        %v5503 = vpop.permute.xlu0 %5502
        %5506 = vset.pattern.permute.xlu0 0
        %5507 = vperm.xlu0 %5506, %v5415
        %v5508 = vpop.permute.xlu0 %5507
        %5511 = vset.pattern.permute.xlu0 0
        %5512 = vperm.xlu0 %5511, %v5417
        %v5513 = vpop.permute.xlu0 %5512
        %5516 = vset.pattern.permute.xlu0 0
        %5517 = vperm.xlu0 %5516, %v5419
        %v5518 = vpop.permute.xlu0 %5517
        %5521 = vset.pattern.permute.xlu0 0
        %5522 = vperm.xlu0 %5521, %v5421
        %v5523 = vpop.permute.xlu0 %5522
        %5526 = vset.pattern.permute.xlu0 0
        %5527 = vperm.xlu0 %5526, %v5423
        %v5528 = vpop.permute.xlu0 %5527
        %5531 = vset.pattern.permute.xlu0 0
        %5532 = vperm.xlu0 %5531, %v5425
        %v5533 = vpop.permute.xlu0 %5532
        %5536 = vset.pattern.permute.xlu0 0
        %5537 = vperm.xlu0 %5536, %v5427
        %v5538 = vpop.permute.xlu0 %5537
        %5541 = vset.pattern.permute.xlu0 0
        %5542 = vperm.xlu0 %5541, %v5429
        %v5543 = vpop.permute.xlu0 %5542
        %5546 = vset.pattern.permute.xlu0 0
        %5547 = vperm.xlu0 %5546, %v5431
        %v5548 = vpop.permute.xlu0 %5547
        %5551 = vset.pattern.permute.xlu0 0
        %5552 = vperm.xlu0 %5551, %v5433
        %v5553 = vpop.permute.xlu0 %5552
        %5556 = vset.pattern.permute.xlu0 0
        %5557 = vperm.xlu0 %5556, %v5435
        %v5558 = vpop.permute.xlu0 %5557
        %5561 = vset.pattern.permute.xlu0 0
        %5562 = vperm.xlu0 %5561, %v5437
        %v5563 = vpop.permute.xlu0 %5562
        %5566 = vset.pattern.permute.xlu0 0
        %5567 = vperm.xlu0 %5566, %v5439
        %v5568 = vpop.permute.xlu0 %5567
        %5571 = vset.pattern.permute.xlu0 0
        %5572 = vperm.xlu0 %5571, %v5441
        %v5573 = vpop.permute.xlu0 %5572
        %v5575 = vmul.f32 %v5498, %v3602
        %v5576 = vmul.f32 %v5498, %v3603
        %v5577 = vmul.f32 %v5498, %v3604
        %v5578 = vmul.f32 %v5498, %v3605
        %v5579 = vmul.f32 %v5503, %v3606
        %v5580 = vmul.f32 %v5503, %v3607
        %v5581 = vmul.f32 %v5503, %v3608
        %v5582 = vmul.f32 %v5503, %v3609
        %v5583 = vmul.f32 %v5508, %v3610
        %v5584 = vmul.f32 %v5508, %v3611
        %v5585 = vmul.f32 %v5508, %v3612
        %v5586 = vmul.f32 %v5508, %v3613
        %v5587 = vmul.f32 %v5513, %v3614
        %v5588 = vmul.f32 %v5513, %v3615
        %v5589 = vmul.f32 %v5513, %v3616
        %v5590 = vmul.f32 %v5513, %v3617
        %v5591 = vmul.f32 %v5518, %v3618
        %v5592 = vmul.f32 %v5518, %v3619
        %v5593 = vmul.f32 %v5518, %v3620
        %v5594 = vmul.f32 %v5518, %v3621
        %v5595 = vmul.f32 %v5523, %v3622
        %v5596 = vmul.f32 %v5523, %v3623
        %v5597 = vmul.f32 %v5523, %v3624
        %v5598 = vmul.f32 %v5523, %v3625
        %v5599 = vmul.f32 %v5528, %v3626
        %v5600 = vmul.f32 %v5528, %v3627
        %v5601 = vmul.f32 %v5528, %v3628
        %v5602 = vmul.f32 %v5528, %v3629
        %v5603 = vmul.f32 %v5533, %v3630
        %v5604 = vmul.f32 %v5533, %v3631
        %v5605 = vmul.f32 %v5533, %v3632
        %v5606 = vmul.f32 %v5533, %v3633
        %v5607 = vmul.f32 %v5538, %v3634
        %v5608 = vmul.f32 %v5538, %v3635
        %v5609 = vmul.f32 %v5538, %v3636
        %v5610 = vmul.f32 %v5538, %v3637
        %v5611 = vmul.f32 %v5543, %v3638
        %v5612 = vmul.f32 %v5543, %v3639
        %v5613 = vmul.f32 %v5543, %v3640
        %v5614 = vmul.f32 %v5543, %v3641
        %v5615 = vmul.f32 %v5548, %v3642
        %v5616 = vmul.f32 %v5548, %v3643
        %v5617 = vmul.f32 %v5548, %v3644
        %v5618 = vmul.f32 %v5548, %v3645
        %v5619 = vmul.f32 %v5553, %v3646
        %v5620 = vmul.f32 %v5553, %v3647
        %v5621 = vmul.f32 %v5553, %v3648
        %v5622 = vmul.f32 %v5553, %v3649
        %v5623 = vmul.f32 %v5558, %v3650
        %v5624 = vmul.f32 %v5558, %v3651
        %v5625 = vmul.f32 %v5558, %v3652
        %v5626 = vmul.f32 %v5558, %v3653
        %v5627 = vmul.f32 %v5563, %v3654
        %v5628 = vmul.f32 %v5563, %v3655
        %v5629 = vmul.f32 %v5563, %v3656
        %v5630 = vmul.f32 %v5563, %v3657
        %v5631 = vmul.f32 %v5568, %v3658
        %v5632 = vmul.f32 %v5568, %v3659
        %v5633 = vmul.f32 %v5568, %v3660
        %v5634 = vmul.f32 %v5568, %v3661
        %v5635 = vmul.f32 %v5573, %v3662
        %v5636 = vmul.f32 %v5573, %v3663
        %v5637 = vmul.f32 %v5573, %v3664
        %v5638 = vmul.f32 %v5573, %v3665
        %v5639 = vadd.f32 %v5575, %v5579
        %v5640 = vadd.f32 %v5639, %v5583
        %v5641 = vadd.f32 %v5640, %v5587
        %v5642 = vadd.f32 %v5641, %v5591
        %v5643 = vadd.f32 %v5642, %v5595
        %v5644 = vadd.f32 %v5643, %v5599
        %v5645 = vadd.f32 %v5644, %v5603
        %v5646 = vadd.f32 %v5645, %v5607
        %v5647 = vadd.f32 %v5646, %v5611
        %v5648 = vadd.f32 %v5647, %v5615
        %v5649 = vadd.f32 %v5648, %v5619
        %v5650 = vadd.f32 %v5649, %v5623
        %v5651 = vadd.f32 %v5650, %v5627
        %v5652 = vadd.f32 %v5651, %v5631
        %v5653 = vadd.f32 %v5652, %v5635
        %v5654 = vrot.slane %v5653, 4
        %v5655 = vadd.f32 %v5653, %v5654
        %v5656 = vrot.slane %v5655, 2
        %v5657 = vadd.f32 %v5655, %v5656
        %v5658 = vrot.slane %v5657, 1
        %v5659 = vadd.f32 %v5657, %v5658
        %v5660 = vadd.f32 %v5576, %v5580
        %v5661 = vadd.f32 %v5660, %v5584
        %v5662 = vadd.f32 %v5661, %v5588
        %v5663 = vadd.f32 %v5662, %v5592
        %v5664 = vadd.f32 %v5663, %v5596
        %v5665 = vadd.f32 %v5664, %v5600
        %v5666 = vadd.f32 %v5665, %v5604
        %v5667 = vadd.f32 %v5666, %v5608
        %v5668 = vadd.f32 %v5667, %v5612
        %v5669 = vadd.f32 %v5668, %v5616
        %v5670 = vadd.f32 %v5669, %v5620
        %v5671 = vadd.f32 %v5670, %v5624
        %v5672 = vadd.f32 %v5671, %v5628
        %v5673 = vadd.f32 %v5672, %v5632
        %v5674 = vadd.f32 %v5673, %v5636
        %v5675 = vrot.slane %v5674, 4
        %v5676 = vadd.f32 %v5674, %v5675
        %v5677 = vrot.slane %v5676, 2
        %v5678 = vadd.f32 %v5676, %v5677
        %v5679 = vrot.slane %v5678, 1
        %v5680 = vadd.f32 %v5678, %v5679
        %v5681 = vadd.f32 %v5577, %v5581
        %v5682 = vadd.f32 %v5681, %v5585
        %v5683 = vadd.f32 %v5682, %v5589
        %v5684 = vadd.f32 %v5683, %v5593
        %v5685 = vadd.f32 %v5684, %v5597
        %v5686 = vadd.f32 %v5685, %v5601
        %v5687 = vadd.f32 %v5686, %v5605
        %v5688 = vadd.f32 %v5687, %v5609
        %v5689 = vadd.f32 %v5688, %v5613
        %v5690 = vadd.f32 %v5689, %v5617
        %v5691 = vadd.f32 %v5690, %v5621
        %v5692 = vadd.f32 %v5691, %v5625
        %v5693 = vadd.f32 %v5692, %v5629
        %v5694 = vadd.f32 %v5693, %v5633
        %v5695 = vadd.f32 %v5694, %v5637
        %v5696 = vrot.slane %v5695, 4
        %v5697 = vadd.f32 %v5695, %v5696
        %v5698 = vrot.slane %v5697, 2
        %v5699 = vadd.f32 %v5697, %v5698
        %v5700 = vrot.slane %v5699, 1
        %v5701 = vadd.f32 %v5699, %v5700
        %v5702 = vadd.f32 %v5578, %v5582
        %v5703 = vadd.f32 %v5702, %v5586
        %v5704 = vadd.f32 %v5703, %v5590
        %v5705 = vadd.f32 %v5704, %v5594
        %v5706 = vadd.f32 %v5705, %v5598
        %v5707 = vadd.f32 %v5706, %v5602
        %v5708 = vadd.f32 %v5707, %v5606
        %v5709 = vadd.f32 %v5708, %v5610
        %v5710 = vadd.f32 %v5709, %v5614
        %v5711 = vadd.f32 %v5710, %v5618
        %v5712 = vadd.f32 %v5711, %v5622
        %v5713 = vadd.f32 %v5712, %v5626
        %v5714 = vadd.f32 %v5713, %v5630
        %v5715 = vadd.f32 %v5714, %v5634
        %v5716 = vadd.f32 %v5715, %v5638
        %v5717 = vrot.slane %v5716, 4
        %v5718 = vadd.f32 %v5716, %v5717
        %v5719 = vrot.slane %v5718, 2
        %v5720 = vadd.f32 %v5718, %v5719
        %v5721 = vrot.slane %v5720, 1
        %v5722 = vadd.f32 %v5720, %v5721
        %v5727 = vcombine.low %v5659, %v5680
        %v5728 = vcombine.low %v5701, %v5722
        %v5730 = vunpack.c.l.s4 1966171168
        %v5731 = vunpack.c.0.s8 %v5730
        %v5732 = vlaneseq
        %v5733 = vshrl.u32 %v5732, 7
        %v5734 = vsub.s32 %v5731, %v5733
        %v5735 = vrot.slane %v5727, %v5734
        %v5737 = vunpack.c.l.s4 1966171168
        %v5738 = vunpack.c.0.s8 %v5737
        %v5739 = vlaneseq
        %v5740 = vshrl.u32 %v5739, 7
        %v5741 = vsub.s32 %v5738, %v5740
        %v5742 = vrot.slane %v5728, %v5741
        %v5743 = vcombine.low %v5735, %v5742
        %v5745 = vunpack.c.l.s4 1966171168
        %v5746 = vunpack.c.0.s8 %v5745
        %v5747 = vlaneseq
        %v5748 = vshrl.u32 %v5747, 7
        %v5749 = vsub.s32 %v5746, %v5748
        %v5750 = vrot.slane %v5743, %v5749
        %v5752 = vadd.f32 %v5494, %v5750
        %v5753 = vlaneseq
        %vm5754 = vcmp.ge.s32.totalorder %v5753, 0
        %vm5755 = vcmp.lt.s32.totalorder %v5753, 512
        %vm5756 = vmand %vm5754, %vm5755
        %5757 = vst.msk [vmem:[#allocation4] sm:$0xf] %vm5756, %v5752
        %5758 = vst.msk [vmem:[#allocation2] sm:$0x1] %vm5482, %v5384
        %p5759 = scmp.eq.s32.totalorder %s39, 2
        // Predicated region
        $region109: #{tpu_custom_call.1} parent=63 // pred_check
          %p5760 = pneg %p5759
        $region110: #{tpu_custom_call.1} parent=63 // pred_check_branch
          %5762 = sbr.rel (%p5760) target = $region112
        $region111: #{tpu_custom_call.1} parent=63 // pred_region
          %v5763 = vld [vmem:[#allocation4] sm:$0xf]
          %v5764 = vld [vmem:[#allocation3] sm:$0x1]
          %5766 = vset.pattern.permute.xlu0 0
          %5767 = vperm.xlu0 %5766, %v5764
          %v5768 = vpop.permute.xlu0 %5767
          %v5770 = vlaneseq
          %v5771 = vshrl.u32 %v5770, 7
          %v5772 = vsub.s32 0, %v5771
          %v5773 = vrot.slane %v5768, %v5772
          %v5774 = vrcp.pop %v5773
          %v5775 = vmul.f32 %v5763, %v5774
          %5776 = vst.msk [vmem:[#allocation24] sm:$0xf] %vm5756, %v5775
          %v5777 = vld [vmem:[#allocation20] sm:$0xff]
          %v5778 = vld [vmem:[#allocation20 + $0x8] sm:$0xff]
          %v5779 = vld [vmem:[#allocation20 + $0x10] sm:$0xff]
          %v5780 = vld [vmem:[#allocation20 + $0x18] sm:$0xff]
          %v5781 = vld [vmem:[#allocation20 + $0x20] sm:$0xff]
          %v5782 = vld [vmem:[#allocation20 + $0x28] sm:$0xff]
          %v5783 = vld [vmem:[#allocation20 + $0x30] sm:$0xff]
          %v5784 = vld [vmem:[#allocation20 + $0x38] sm:$0xff]
          %v5785 = vld [vmem:[#allocation20 + $0x40] sm:$0xff]
          %v5786 = vld [vmem:[#allocation20 + $0x48] sm:$0xff]
          %v5787 = vld [vmem:[#allocation20 + $0x50] sm:$0xff]
          %v5788 = vld [vmem:[#allocation20 + $0x58] sm:$0xff]
          %v5789 = vld [vmem:[#allocation20 + $0x60] sm:$0xff]
          %v5790 = vld [vmem:[#allocation20 + $0x68] sm:$0xff]
          %v5791 = vld [vmem:[#allocation20 + $0x70] sm:$0xff]
          %v5792 = vld [vmem:[#allocation20 + $0x78] sm:$0xff]
          %v5793 = vld [vmem:[#allocation20 + $0x80] sm:$0xff]
          %v5794 = vld [vmem:[#allocation20 + $0x88] sm:$0xff]
          %v5795 = vld [vmem:[#allocation20 + $0x90] sm:$0xff]
          %v5796 = vld [vmem:[#allocation20 + $0x98] sm:$0xff]
          %v5797 = vld [vmem:[#allocation20 + $0xa0] sm:$0xff]
          %v5798 = vld [vmem:[#allocation20 + $0xa8] sm:$0xff]
          %v5799 = vld [vmem:[#allocation20 + $0xb0] sm:$0xff]
          %v5800 = vld [vmem:[#allocation20 + $0xb8] sm:$0xff]
          %v5801 = vld [vmem:[#allocation20 + $0xc0] sm:$0xff]
          %v5802 = vld [vmem:[#allocation20 + $0xc8] sm:$0xff]
          %v5803 = vld [vmem:[#allocation20 + $0xd0] sm:$0xff]
          %v5804 = vld [vmem:[#allocation20 + $0xd8] sm:$0xff]
          %v5805 = vld [vmem:[#allocation20 + $0xe0] sm:$0xff]
          %v5806 = vld [vmem:[#allocation20 + $0xe8] sm:$0xff]
          %v5807 = vld [vmem:[#allocation20 + $0xf0] sm:$0xff]
          %v5808 = vld [vmem:[#allocation20 + $0xf8] sm:$0xff]
          %v5809 = vld [vmem:[#allocation20 + $0x100] sm:$0xff]
          %v5810 = vld [vmem:[#allocation20 + $0x108] sm:$0xff]
          %v5811 = vld [vmem:[#allocation20 + $0x110] sm:$0xff]
          %v5812 = vld [vmem:[#allocation20 + $0x118] sm:$0xff]
          %v5813 = vld [vmem:[#allocation20 + $0x120] sm:$0xff]
          %v5814 = vld [vmem:[#allocation20 + $0x128] sm:$0xff]
          %v5815 = vld [vmem:[#allocation20 + $0x130] sm:$0xff]
          %v5816 = vld [vmem:[#allocation20 + $0x138] sm:$0xff]
          %v5817 = vld [vmem:[#allocation20 + $0x140] sm:$0xff]
          %v5818 = vld [vmem:[#allocation20 + $0x148] sm:$0xff]
          %v5819 = vld [vmem:[#allocation20 + $0x150] sm:$0xff]
          %v5820 = vld [vmem:[#allocation20 + $0x158] sm:$0xff]
          %v5821 = vld [vmem:[#allocation20 + $0x160] sm:$0xff]
          %v5822 = vld [vmem:[#allocation20 + $0x168] sm:$0xff]
          %v5823 = vld [vmem:[#allocation20 + $0x170] sm:$0xff]
          %v5824 = vld [vmem:[#allocation20 + $0x178] sm:$0xff]
          %v5825 = vld [vmem:[#allocation20 + $0x180] sm:$0xff]
          %v5826 = vld [vmem:[#allocation20 + $0x188] sm:$0xff]
          %v5827 = vld [vmem:[#allocation20 + $0x190] sm:$0xff]
          %v5828 = vld [vmem:[#allocation20 + $0x198] sm:$0xff]
          %v5829 = vld [vmem:[#allocation20 + $0x1a0] sm:$0xff]
          %v5830 = vld [vmem:[#allocation20 + $0x1a8] sm:$0xff]
          %v5831 = vld [vmem:[#allocation20 + $0x1b0] sm:$0xff]
          %v5832 = vld [vmem:[#allocation20 + $0x1b8] sm:$0xff]
          %v5833 = vld [vmem:[#allocation20 + $0x1c0] sm:$0xff]
          %v5834 = vld [vmem:[#allocation20 + $0x1c8] sm:$0xff]
          %v5835 = vld [vmem:[#allocation20 + $0x1d0] sm:$0xff]
          %v5836 = vld [vmem:[#allocation20 + $0x1d8] sm:$0xff]
          %v5837 = vld [vmem:[#allocation20 + $0x1e0] sm:$0xff]
          %v5838 = vld [vmem:[#allocation20 + $0x1e8] sm:$0xff]
          %v5839 = vld [vmem:[#allocation20 + $0x1f0] sm:$0xff]
          %v5840 = vld [vmem:[#allocation20 + $0x1f8] sm:$0xff]
          %v5841 = vld [vmem:[#allocation21] sm:$0x1]
          %v5843 = vlaneseq
          %v5844 = vshrl.u32 %v5843, 7
          %v5845 = vsub.s32 0, %v5844
          %v5846 = vrot.slane %v5775, %v5845
          %v5847 = vlaneseq
          %v5848 = vshrl.u32 %v5847, 7
          %v5849 = vsub.s32 1, %v5848
          %v5850 = vrot.slane %v5775, %v5849
          %v5851 = vlaneseq
          %v5852 = vshrl.u32 %v5851, 7
          %v5853 = vsub.s32 2, %v5852
          %v5854 = vrot.slane %v5775, %v5853
          %v5855 = vlaneseq
          %v5856 = vshrl.u32 %v5855, 7
          %v5857 = vsub.s32 3, %v5856
          %v5858 = vrot.slane %v5775, %v5857
          %5863 = vmatprep.subr.mxu0 0.0
          %5864 = vmatpush1.msra.mxu0 %v5777
          %5865 = vmatprep.subr.mxu0 0.0
          %5866 = vmatpush1.msra.mxu0 %v5778
          %5867 = vmatprep.subr.mxu0 0.0
          %5868 = vmatpush1.msra.mxu0 %v5779
          %5869 = vmatprep.subr.mxu0 0.0
          %5870 = vmatpush1.msra.mxu0 %v5780
          %5871 = vmatprep.subr.mxu0 0.0
          %5872 = vmatpush1.msra.mxu0 %v5781
          %5873 = vmatprep.subr.mxu0 0.0
          %5874 = vmatpush1.msra.mxu0 %v5782
          %5875 = vmatprep.subr.mxu0 0.0
          %5876 = vmatpush1.msra.mxu0 %v5783
          %5877 = vmatprep.subr.mxu0 0.0
          %5878 = vmatpush1.msra.mxu0 %v5784
          %5879 = vmatprep.subr.mxu0 0.0
          %5880 = vmatpush1.msra.mxu0 %v5785
          %5881 = vmatprep.subr.mxu0 0.0
          %5882 = vmatpush1.msra.mxu0 %v5786
          %5883 = vmatprep.subr.mxu0 0.0
          %5884 = vmatpush1.msra.mxu0 %v5787
          %5885 = vmatprep.subr.mxu0 0.0
          %5886 = vmatpush1.msra.mxu0 %v5788
          %5887 = vmatprep.subr.mxu0 0.0
          %5888 = vmatpush1.msra.mxu0 %v5789
          %5889 = vmatprep.subr.mxu0 0.0
          %5890 = vmatpush1.msra.mxu0 %v5790
          %5891 = vmatprep.subr.mxu0 0.0
          %5892 = vmatpush1.msra.mxu0 %v5791
          %5893 = vmatprep.subr.mxu0 0.0
          %5894 = vmatpush1.msra.mxu0 %v5792
          %5895 = vmatprep.subr.mxu0 0.0
          %5896 = vmatpush1.msra.mxu0 %v5793
          %5897 = vmatprep.subr.mxu0 0.0
          %5898 = vmatpush1.msra.mxu0 %v5794
          %5899 = vmatprep.subr.mxu0 0.0
          %5900 = vmatpush1.msra.mxu0 %v5795
          %5901 = vmatprep.subr.mxu0 0.0
          %5902 = vmatpush1.msra.mxu0 %v5796
          %5903 = vmatprep.subr.mxu0 0.0
          %5904 = vmatpush1.msra.mxu0 %v5797
          %5905 = vmatprep.subr.mxu0 0.0
          %5906 = vmatpush1.msra.mxu0 %v5798
          %5907 = vmatprep.subr.mxu0 0.0
          %5908 = vmatpush1.msra.mxu0 %v5799
          %5909 = vmatprep.subr.mxu0 0.0
          %5910 = vmatpush1.msra.mxu0 %v5800
          %5911 = vmatprep.subr.mxu0 0.0
          %5912 = vmatpush1.msra.mxu0 %v5801
          %5913 = vmatprep.subr.mxu0 0.0
          %5914 = vmatpush1.msra.mxu0 %v5802
          %5915 = vmatprep.subr.mxu0 0.0
          %5916 = vmatpush1.msra.mxu0 %v5803
          %5917 = vmatprep.subr.mxu0 0.0
          %5918 = vmatpush1.msra.mxu0 %v5804
          %5919 = vmatprep.subr.mxu0 0.0
          %5920 = vmatpush1.msra.mxu0 %v5805
          %5921 = vmatprep.subr.mxu0 0.0
          %5922 = vmatpush1.msra.mxu0 %v5806
          %5923 = vmatprep.subr.mxu0 0.0
          %5924 = vmatpush1.msra.mxu0 %v5807
          %5925 = vmatprep.subr.mxu0 0.0
          %5926 = vmatpush1.msra.mxu0 %v5808
          %5927 = vmatprep.mubr.f32.mxu0 %v5850
          %5928 = vmatmul.mubr.f32.gmra.mrb[0].mxu0 %v5846
          %v5929 = vpop.f32.mrb[0].mxu0
          %v5930 = vadd.f32 %v5841, %v5929
          %v5931 = vpop.f32.mrb[0].mxu0
          %5932 = vdwg.mxu0
          %5933 = vmatprep.subr.mxu0 0.0
          %5934 = vmatpush1.msra.mxu0 %v5809
          %5935 = vmatprep.subr.mxu0 0.0
          %5936 = vmatpush1.msra.mxu0 %v5810
          %5937 = vmatprep.subr.mxu0 0.0
          %5938 = vmatpush1.msra.mxu0 %v5811
          %5939 = vmatprep.subr.mxu0 0.0
          %5940 = vmatpush1.msra.mxu0 %v5812
          %5941 = vmatprep.subr.mxu0 0.0
          %5942 = vmatpush1.msra.mxu0 %v5813
          %5943 = vmatprep.subr.mxu0 0.0
          %5944 = vmatpush1.msra.mxu0 %v5814
          %5945 = vmatprep.subr.mxu0 0.0
          %5946 = vmatpush1.msra.mxu0 %v5815
          %5947 = vmatprep.subr.mxu0 0.0
          %5948 = vmatpush1.msra.mxu0 %v5816
          %5949 = vmatprep.subr.mxu0 0.0
          %5950 = vmatpush1.msra.mxu0 %v5817
          %5951 = vmatprep.subr.mxu0 0.0
          %5952 = vmatpush1.msra.mxu0 %v5818
          %5953 = vmatprep.subr.mxu0 0.0
          %5954 = vmatpush1.msra.mxu0 %v5819
          %5955 = vmatprep.subr.mxu0 0.0
          %5956 = vmatpush1.msra.mxu0 %v5820
          %5957 = vmatprep.subr.mxu0 0.0
          %5958 = vmatpush1.msra.mxu0 %v5821
          %5959 = vmatprep.subr.mxu0 0.0
          %5960 = vmatpush1.msra.mxu0 %v5822
          %5961 = vmatprep.subr.mxu0 0.0
          %5962 = vmatpush1.msra.mxu0 %v5823
          %5963 = vmatprep.subr.mxu0 0.0
          %5964 = vmatpush1.msra.mxu0 %v5824
          %5965 = vmatprep.subr.mxu0 0.0
          %5966 = vmatpush1.msra.mxu0 %v5825
          %5967 = vmatprep.subr.mxu0 0.0
          %5968 = vmatpush1.msra.mxu0 %v5826
          %5969 = vmatprep.subr.mxu0 0.0
          %5970 = vmatpush1.msra.mxu0 %v5827
          %5971 = vmatprep.subr.mxu0 0.0
          %5972 = vmatpush1.msra.mxu0 %v5828
          %5973 = vmatprep.subr.mxu0 0.0
          %5974 = vmatpush1.msra.mxu0 %v5829
          %5975 = vmatprep.subr.mxu0 0.0
          %5976 = vmatpush1.msra.mxu0 %v5830
          %5977 = vmatprep.subr.mxu0 0.0
          %5978 = vmatpush1.msra.mxu0 %v5831
          %5979 = vmatprep.subr.mxu0 0.0
          %5980 = vmatpush1.msra.mxu0 %v5832
          %5981 = vmatprep.subr.mxu0 0.0
          %5982 = vmatpush1.msra.mxu0 %v5833
          %5983 = vmatprep.subr.mxu0 0.0
          %5984 = vmatpush1.msra.mxu0 %v5834
          %5985 = vmatprep.subr.mxu0 0.0
          %5986 = vmatpush1.msra.mxu0 %v5835
          %5987 = vmatprep.subr.mxu0 0.0
          %5988 = vmatpush1.msra.mxu0 %v5836
          %5989 = vmatprep.subr.mxu0 0.0
          %5990 = vmatpush1.msra.mxu0 %v5837
          %5991 = vmatprep.subr.mxu0 0.0
          %5992 = vmatpush1.msra.mxu0 %v5838
          %5993 = vmatprep.subr.mxu0 0.0
          %5994 = vmatpush1.msra.mxu0 %v5839
          %5995 = vmatprep.subr.mxu0 0.0
          %5996 = vmatpush1.msra.mxu0 %v5840
          %5997 = vmatprep.mubr.f32.mxu0 %v5858
          %5998 = vmatmul.mubr.f32.gmra.mrb[0].mxu0 %v5854
          %v5999 = vpop.f32.mrb[0].mxu0
          %v6000 = vadd.f32 %v5930, %v5999
          %v6001 = vpop.f32.mrb[0].mxu0
          %6002 = vdwg.mxu0
          %vm6003 = vcmask 8192
          %6004 = vst.msk [vmem:[#allocation26] sm:$0x1] %vm6003, %v6000
        $region112: #{tpu_custom_call.1} parent=63 // pred_fallthru
          _
        %s6005 = sand.u32 %s283, 1
        %s6006 = scalar_lea.sflag [#allocation8], %s6005
        %s6007 = sand.u32 %s283, 1
        %s6008 = smul.addr %s6007, 128
        %s6009 = scalar_lea.vmem [#allocation23], %s6008
        // Predicated region
        $region113: #{tpu_custom_call.1} parent=63 // pred_check
          %p6010 = pneg %p293
        $region114: #{tpu_custom_call.1} parent=63 // pred_check_branch
          %6012 = sbr.rel (%p6010) target = $region116
        $region115: #{tpu_custom_call.1} parent=63 // pred_region
          %s6013 = smul.u32 16, %s39
          %s6014 = ssub.s32 38, %s6013
          %p6015 = scmp.lt.s32.totalorder %s6014, 16
          %s6016 = scalar_select %p6015, %s6014, 16
          %s6017 = smul.u32 128, %s6016
          %s6019 = ssub.s32 2048, %s6017
          %6020 = vsyncadd %s6006, %s6019
          %p6021 = scmp.ne.s32.totalorder 0, %s6017
          %s6022 = smul.addr %s6013, 128
          %s6023 = scalar_lea.hbm %s11, %s6022
          %s6024 = smul.u32 8, %s6016
          %s6025 = sshll.u32 %s6009, 4
          %s6026 = int_to_ptr.vmem [resolvable:$true] %s6025
          %s6027 = sshll.u32 %s6024, 4
          %6031 = dma.vmem_to_hbm [thread:$0]  (%p6021), %s6026, %s6027, %s6023, %s6006, 128, 128, 8
        $region116: #{tpu_custom_call.1} parent=63 // pred_fallthru
          _
        // Predicated region
        $region117: #{tpu_custom_call.1} parent=63 // pred_check
          %p6032 = pneg %p314
        $region118: #{tpu_custom_call.1} parent=63 // pred_check_branch
          %6034 = sbr.rel (%p6032) target = $region120
        $region119: #{tpu_custom_call.1} parent=63 // pred_region
          %s6036 = ssub.s32 64, 64
          %6037 = vsyncadd [#allocation25], %s6036
          %s6039 = sshll.u32 [#allocation24], 4
          %s6040 = int_to_ptr.vmem [resolvable:$true] %s6039
          %6042 = dma.vmem_to_hbm [thread:$0]  %s6040, 64, %s12, [#allocation25]
        $region120: #{tpu_custom_call.1} parent=63 // pred_fallthru
          _
        // Predicated region
        $region121: #{tpu_custom_call.1} parent=63 // pred_check
          %p6043 = pneg %p335
        $region122: #{tpu_custom_call.1} parent=63 // pred_check_branch
          %6045 = sbr.rel (%p6043) target = $region124
        $region123: #{tpu_custom_call.1} parent=63 // pred_region
          %s6047 = ssub.s32 16, 16
          %6048 = vsyncadd [#allocation25], %s6047
          %s6050 = sshll.u32 [#allocation26], 4
          %s6051 = int_to_ptr.vmem [resolvable:$true] %s6050
          %6053 = dma.vmem_to_hbm [thread:$0]  %s6051, 16, %s13, [#allocation25]
        $region124: #{tpu_custom_call.1} parent=63 // pred_fallthru
          _
        // Predicated region
        $region125: #{tpu_custom_call.1} parent=63 // pred_check
          %p6054 = pneg %p314
        $region126: #{tpu_custom_call.1} parent=63 // pred_check_branch
          %6056 = sbr.rel (%p6054) target = $region128
        $region127: #{tpu_custom_call.1} parent=63 // pred_region
          %6057 = dma.done [#allocation25], 64
        $region128: #{tpu_custom_call.1} parent=63 // pred_fallthru
          _
        // Predicated region
        $region129: #{tpu_custom_call.1} parent=63 // pred_check
          %p6058 = pneg %p335
        $region130: #{tpu_custom_call.1} parent=63 // pred_check_branch
          %6060 = sbr.rel (%p6058) target = $region132
        $region131: #{tpu_custom_call.1} parent=63 // pred_region
          %6061 = dma.done [#allocation25], 16
        $region132: #{tpu_custom_call.1} parent=63 // pred_fallthru
          _
      $region64: #{tpu_custom_call.1} parent=5 // pred_fallthru
        _
      %p6062 = scmp.le.s32.totalorder 2, %s34
      // Predicated region
      $region133: #{tpu_custom_call.1} parent=5 // pred_check
        %p6063 = pneg %p6062
      $region134: #{tpu_custom_call.1} parent=5 // pred_check_branch
        %6065 = sbr.rel (%p6063) target = $region136
      $region135: #{tpu_custom_call.1} parent=5 // pred_region
        %s6066 = ssub.s32 %s34, 2
        // Predicated region
        $region137: #{tpu_custom_call.1} parent=135 // pred_check
          %p6067 = pneg %p299
        $region138: #{tpu_custom_call.1} parent=135 // pred_check_branch
          %6069 = sbr.rel (%p6067) target = $region140
        $region139: #{tpu_custom_call.1} parent=135 // pred_region
          %s6070 = sand.u32 %s284, 1
          %s6071 = scalar_lea.sflag [#allocation8], %s6070
          %s6072 = sand.u32 %s284, 1
          %s6073 = smul.addr %s6072, 128
          %s6074 = scalar_lea.vmem [#allocation23], %s6073
          %6075 = dma.done %s6071, 2048
        $region140: #{tpu_custom_call.1} parent=135 // pred_fallthru
          _
      $region136: #{tpu_custom_call.1} parent=5 // pred_fallthru
        _
    $region6: #{tpu_custom_call.1} parent=1 // loop_footer
      %s38 = sadd.s32 1, %s34
    $region7: #{tpu_custom_call.1} parent=1 // loop_footer_branch
      %33 = sbr.rel target = $region3
    $region8: #{tpu_custom_call.1} parent=1 // loop_exit
      _
    %6076 = vsyncpa [#allocation7], 1
    %s6077 = scalar_lea.sflag [#allocation7], 1
    %6078 = vsyncpa %s6077, 1
    %6079 = vsyncpa [#allocation10], 1
    %6080 = vsyncpa [#allocation13], 1
    %6081 = vsyncpa [#allocation16], 1
    %6082 = vsyncpa [#allocation19], 1
    %6083 = vsyncpa [#allocation22], 1
    %6084 = vsyncpa [#allocation8], 1
    %s6085 = scalar_lea.sflag [#allocation8], 1
    %6086 = vsyncpa %s6085, 1
    %6087 = vsyncpa [#allocation25], 1

</llo_original>
